<compile_context>
chip_gen: v7x
topology: tpu7x:2x2x1
jax: 0.10.0
libtpu: 0.0.40
codegen_flags: <defaults>
</compile_context>

<pallas_src>
import jax
import jax.numpy as jnp
from jax import lax
from jax.experimental import pallas as pl
from jax.experimental.pallas import tpu as pltpu


# ----------------------------------------------------------------------------
# Pallas kernel: full bidirectional LSTM recurrence in VMEM.
#   x_ref     : (W*H, C)        bf16   flattened sequence input
#   wih_ref   : (C, 8*HU)       bf16   [fwd i|f|g|o | bwd i|f|g|o] input weights
#   b_ref     : (1, 8*HU)       f32    fused biases (same gate layout)
#   whh_f_ref : (HU, 4*HU)      bf16   forward recurrent weights
#   whh_b_ref : (HU, 4*HU)      bf16   backward recurrent weights
#   out_ref   : (W, H, 2*HU)    f32    [:, :, :HU]=fwd, [:, :, HU:]=bwd
#   xproj_ref : (W*H, 8*HU)     f32    scratch: hoisted input projection
# Gate order: i, f, g, o (torch.nn.LSTM).
# ----------------------------------------------------------------------------
def blstm_kernel(x_ref, wih_ref, b_ref, whh_f_ref, whh_b_ref,
                 out_ref, xproj_ref):
    seq_len, rows, _ = out_ref.shape
    hidden = whh_f_ref.shape[0]

    # ---- Hoisted input projection: one MXU matmul feeds all 8 gates of both
    # directions, bias folded in.  No serial dependence -> off the critical path.
    xproj_ref[...] = (
        jnp.dot(x_ref[...], wih_ref[...], preferred_element_type=jnp.float32)
        + b_ref[...])

    # Load recurrent weights once (small: (HU, 4*HU) each).
    whh_f = whh_f_ref[...]
    whh_b = whh_b_ref[...]

    def cell(pre, h, c, whh):
        # pre: (rows, 4*HU) f32 pre-activation from the hoisted projection.
        gates = pre + jnp.dot(h.astype(jnp.bfloat16), whh,
                              preferred_element_type=jnp.float32)
        i = jax.nn.sigmoid(gates[:, 0 * hidden:1 * hidden])
        f = jax.nn.sigmoid(gates[:, 1 * hidden:2 * hidden])
        g = jnp.tanh(gates[:, 2 * hidden:3 * hidden])
        o = jax.nn.sigmoid(gates[:, 3 * hidden:4 * hidden])
        c_new = f * c + i * g
        h_new = o * jnp.tanh(c_new)
        return h_new, c_new

    hf = jnp.zeros((rows, hidden), jnp.float32)
    cf = jnp.zeros((rows, hidden), jnp.float32)
    hb = jnp.zeros((rows, hidden), jnp.float32)
    cb = jnp.zeros((rows, hidden), jnp.float32)

    # Fully-unrolled loop (static trip count): forward (t) and backward
    # (seq_len-1-t) recurrences advance together so the two independent chains
    # can be interleaved by the scheduler.  All slice indices are static.
    for t in range(seq_len):
        tb = seq_len - 1 - t
        pre_f = xproj_ref[t * rows:(t + 1) * rows, 0:4 * hidden]
        pre_b = xproj_ref[tb * rows:(tb + 1) * rows, 4 * hidden:8 * hidden]
        hf, cf = cell(pre_f, hf, cf, whh_f)
        hb, cb = cell(pre_b, hb, cb, whh_b)
        out_ref[t, :, 0:hidden] = hf.astype(out_ref.dtype)
        out_ref[tb, :, hidden:2 * hidden] = hb.astype(out_ref.dtype)


# ----------------------------------------------------------------------------
# Wrapper: JAX glue (permute, weight fusion, final permute) around the kernel.
# Weights are given per-gate: wih (4, C, HU), whh (4, HU, HU), b (4, 1, HU).
# ----------------------------------------------------------------------------
@jax.jit
def blstm_forward(x, wih_f, whh_f, b_f, wih_b, whh_b, b_b):
    n, c, h, w = x.shape
    hidden = whh_f.shape[-1]

    # permute(0,3,2,1) then take batch element 0 -> (W, H, C), as in PyTorch.
    x_seq = jnp.transpose(x, (0, 3, 2, 1))[0]
    x_flat = x_seq.reshape(w * h, c).astype(jnp.bfloat16)

    def fuse_gates(wpergate):                 # (4, A, HU) -> (A, 4*HU)
        return jnp.concatenate([wpergate[k] for k in range(4)], axis=-1)

    # Input weights / biases of both directions stacked -> (C, 8*HU), (1, 8*HU).
    wih_all = jnp.concatenate([fuse_gates(wih_f), fuse_gates(wih_b)],
                              axis=-1).astype(jnp.bfloat16)
    b_all = jnp.concatenate([fuse_gates(b_f), fuse_gates(b_b)],
                            axis=-1).astype(jnp.float32)
    whh_f_p = fuse_gates(whh_f).astype(jnp.bfloat16)      # (HU, 4*HU)
    whh_b_p = fuse_gates(whh_b).astype(jnp.bfloat16)      # (HU, 4*HU)

    vmem = pl.BlockSpec(memory_space=pltpu.MemorySpace.VMEM)
    out = pl.pallas_call(
        blstm_kernel,
        out_shape=jax.ShapeDtypeStruct((w, h, 2 * hidden), jnp.float32),
        in_specs=[vmem] * 5,
        out_specs=vmem,
        scratch_shapes=[pltpu.VMEM((w * h, 8 * hidden), jnp.float32)],
    )(x_flat, wih_all, b_all, whh_f_p, whh_b_p)

    out = out[None]                          # (1, W, H, 2*HU)
    out = jnp.transpose(out, (0, 3, 2, 1))   # (1, 2*HU, H, W)
    return out


# ----------------------------------------------------------------------------
# Pure-JAX reference (lax.scan) with the same mixed precision (bf16 MXU
# operands, f32 accumulation / gate math) for a tight correctness check.
# ----------------------------------------------------------------------------
def blstm_reference(x, wih_f, whh_f, b_f, wih_b, whh_b, b_b):
    x_seq = jnp.transpose(x, (0, 3, 2, 1))[0].astype(jnp.bfloat16)  # (W, H, C)
    rows = x_seq.shape[1]
    hidden = whh_f.shape[-1]

    def make_step(wih, whh, b):
        wih = wih.astype(jnp.bfloat16)
        whh = whh.astype(jnp.bfloat16)
        b = b.astype(jnp.float32)

        def step(carry, x_t):
            h, c = carry
            h_b = h.astype(jnp.bfloat16)

            def gate(k):
                return (jnp.dot(x_t, wih[k], preferred_element_type=jnp.float32)
                        + jnp.dot(h_b, whh[k], preferred_element_type=jnp.float32)
                        + b[k])

            i = jax.nn.sigmoid(gate(0))
            f = jax.nn.sigmoid(gate(1))
            g = jnp.tanh(gate(2))
            o = jax.nn.sigmoid(gate(3))
            c = f * c + i * g
            h = o * jnp.tanh(c)
            return (h, c), h
        return step

    h0 = jnp.zeros((rows, hidden), jnp.float32)
    c0 = jnp.zeros((rows, hidden), jnp.float32)
    _, hs_f = lax.scan(make_step(wih_f, whh_f, b_f), (h0, c0), x_seq)
    _, hs_b = lax.scan(make_step(wih_b, whh_b, b_b), (h0, c0), x_seq[::-1])
    hs_b = hs_b[::-1]
    out = jnp.concatenate([hs_f, hs_b], axis=-1)[None]
    return jnp.transpose(out, (0, 3, 2, 1))


if __name__ == "__main__":
    # Small shapes consistent with the module: x is NCHW.  Batch elements
    # beyond x[0] are intentionally ignored (matches the PyTorch forward).
    N, C, H, W = 2, 16, 8, 16
    HIDDEN = 32

    key = jax.random.PRNGKey(0)
    kx, kp = jax.random.split(key)
    x = jax.random.normal(kx, (N, C, H, W), dtype=jnp.float32)

    # Deterministic LSTM parameter init (uniform(-1/sqrt(HU), 1/sqrt(HU)),
    # matching torch.nn.LSTM's default scale). Gate order: i, f, g, o.
    bound = 1.0 / (HIDDEN ** 0.5)
    keys = jax.random.split(kp, 6)
    wih_f = jax.random.uniform(keys[0], (4, C, HIDDEN), jnp.float32, -bound, bound)
    whh_f = jax.random.uniform(keys[1], (4, HIDDEN, HIDDEN), jnp.float32, -bound, bound)
    b_f   = jax.random.uniform(keys[2], (4, 1, HIDDEN), jnp.float32, -bound, bound)
    wih_b = jax.random.uniform(keys[3], (4, C, HIDDEN), jnp.float32, -bound, bound)
    whh_b = jax.random.uniform(keys[4], (4, HIDDEN, HIDDEN), jnp.float32, -bound, bound)
    b_b   = jax.random.uniform(keys[5], (4, 1, HIDDEN), jnp.float32, -bound, bound)

    out = blstm_forward(x, wih_f, whh_f, b_f, wih_b, whh_b, b_b)
    out = jax.block_until_ready(out)

    ref = blstm_reference(x, wih_f, whh_f, b_f, wih_b, whh_b, b_b)
    ref = jax.block_until_ready(ref)

    assert out.shape == (1, 2 * HIDDEN, H, W), out.shape
    max_err = float(jnp.max(jnp.abs(out - ref)))
    assert jnp.allclose(out, ref, rtol=1e-3, atol=1e-3), max_err

    print("KERNEL_OK")
</pallas_src>

<mosaic_0001>
module attributes {stable_mosaic.version = 11 : i64} {
  func.func @blstm_kernel(%arg0: memref<128x16xbf16, #tpu.memory_space<vmem>>, %arg1: memref<16x256xbf16, #tpu.memory_space<vmem>>, %arg2: memref<1x256xf32, #tpu.memory_space<vmem>>, %arg3: memref<32x128xbf16, #tpu.memory_space<vmem>>, %arg4: memref<32x128xbf16, #tpu.memory_space<vmem>>, %arg5: memref<16x8x64xf32, #tpu.memory_space<vmem>>, %arg6: memref<128x256xf32, #tpu.memory_space<vmem>>) attributes {dimension_semantics = [], scalar_prefetch = 0 : i64, scratch_operands = 1 : i64, tpu.core_type = #tpu.core_type<tc>} {
    %c0 = arith.constant 0 : index
    %c0_0 = arith.constant 0 : index
    %0 = vector.load %arg0[%c0, %c0_0] : memref<128x16xbf16, #tpu.memory_space<vmem>>, vector<128x16xbf16>
    %c0_1 = arith.constant 0 : index
    %c0_2 = arith.constant 0 : index
    %1 = vector.load %arg1[%c0_1, %c0_2] : memref<16x256xbf16, #tpu.memory_space<vmem>>, vector<16x256xbf16>
    %cst = arith.constant dense<0.000000e+00> : vector<128x256xf32>
    %2 = tpu.matmul %0, %1, %cst {dimension_numbers = #tpu.dot_dimension_numbers<[1], [0], [0], [1], [0, 0, 1, 1], [], []>} : vector<128x16xbf16>, vector<16x256xbf16>, vector<128x256xf32> -> vector<128x256xf32>
    %c0_3 = arith.constant 0 : index
    %c0_4 = arith.constant 0 : index
    %3 = vector.load %arg2[%c0_3, %c0_4] : memref<1x256xf32, #tpu.memory_space<vmem>>, vector<1x256xf32>
    %4 = vector.broadcast %3 : vector<1x256xf32> to vector<128x256xf32>
    %5 = arith.addf %2, %4 : vector<128x256xf32>
    %c0_5 = arith.constant 0 : index
    %c0_6 = arith.constant 0 : index
    %6 = vector.load %arg6[%c0_5, %c0_6] : memref<128x256xf32, #tpu.memory_space<vmem>>, vector<128x256xf32>
    tpu.vector_store %arg6[%c0_5, %c0_6], %5 {strides = array<i32>} : memref<128x256xf32, #tpu.memory_space<vmem>>, vector<128x256xf32>,
    %c0_7 = arith.constant 0 : index
    %c0_8 = arith.constant 0 : index
    %7 = vector.load %arg3[%c0_7, %c0_8] : memref<32x128xbf16, #tpu.memory_space<vmem>>, vector<32x128xbf16>
    %c0_9 = arith.constant 0 : index
    %c0_10 = arith.constant 0 : index
    %8 = vector.load %arg4[%c0_9, %c0_10] : memref<32x128xbf16, #tpu.memory_space<vmem>>, vector<32x128xbf16>
    %cst_11 = arith.constant 0.000000e+00 : f32
    %9 = vector.broadcast %cst_11 : f32 to vector<8x32xf32>
    %cst_12 = arith.constant 0.000000e+00 : f32
    %10 = vector.broadcast %cst_12 : f32 to vector<8x32xf32>
    %cst_13 = arith.constant 0.000000e+00 : f32
    %11 = vector.broadcast %cst_13 : f32 to vector<8x32xf32>
    %cst_14 = arith.constant 0.000000e+00 : f32
    %12 = vector.broadcast %cst_14 : f32 to vector<8x32xf32>
    %c0_15 = arith.constant 0 : index
    %c0_16 = arith.constant 0 : index
    %13 = vector.load %arg6[%c0_15, %c0_16] : memref<128x256xf32, #tpu.memory_space<vmem>>, vector<8x128xf32>
    %c120 = arith.constant 120 : index
    %c128 = arith.constant 128 : index
    %14 = vector.load %arg6[%c120, %c128] : memref<128x256xf32, #tpu.memory_space<vmem>>, vector<8x128xf32>
    %15 = arith.truncf %9 : vector<8x32xf32> to vector<8x32xbf16>
    %cst_17 = arith.constant dense<0.000000e+00> : vector<8x128xf32>
    %16 = tpu.matmul %15, %7, %cst_17 {dimension_numbers = #tpu.dot_dimension_numbers<[1], [0], [0], [1], [0, 0, 1, 1], [], []>} : vector<8x32xbf16>, vector<32x128xbf16>, vector<8x128xf32> -> vector<8x128xf32>
    %17 = arith.addf %13, %16 : vector<8x128xf32>
    %18 = vector.extract_strided_slice %17 {offsets = [0, 0], sizes = [8, 32], strides = [1, 1]} : vector<8x128xf32> to vector<8x32xf32>
    %19 = arith.negf %18 : vector<8x32xf32>
    %20 = math.exp %19 : vector<8x32xf32>
    %cst_18 = arith.constant 1.000000e+00 : f32
    %21 = vector.broadcast %cst_18 : f32 to vector<8x32xf32>
    %22 = arith.addf %21, %20 : vector<8x32xf32>
    %23 = arith.divf %21, %22 : vector<8x32xf32>
    %24 = vector.extract_strided_slice %17 {offsets = [0, 32], sizes = [8, 32], strides = [1, 1]} : vector<8x128xf32> to vector<8x32xf32>
    %25 = arith.negf %24 : vector<8x32xf32>
    %26 = math.exp %25 : vector<8x32xf32>
    %cst_19 = arith.constant 1.000000e+00 : f32
    %27 = vector.broadcast %cst_19 : f32 to vector<8x32xf32>
    %28 = arith.addf %27, %26 : vector<8x32xf32>
    %29 = arith.divf %27, %28 : vector<8x32xf32>
    %30 = vector.extract_strided_slice %17 {offsets = [0, 64], sizes = [8, 32], strides = [1, 1]} : vector<8x128xf32> to vector<8x32xf32>
    %31 = math.tanh %30 : vector<8x32xf32>
    %32 = vector.extract_strided_slice %17 {offsets = [0, 96], sizes = [8, 32], strides = [1, 1]} : vector<8x128xf32> to vector<8x32xf32>
    %33 = arith.negf %32 : vector<8x32xf32>
    %34 = math.exp %33 : vector<8x32xf32>
    %cst_20 = arith.constant 1.000000e+00 : f32
    %35 = vector.broadcast %cst_20 : f32 to vector<8x32xf32>
    %36 = arith.addf %35, %34 : vector<8x32xf32>
    %37 = arith.divf %35, %36 : vector<8x32xf32>
    %38 = arith.mulf %29, %10 : vector<8x32xf32>
    %39 = arith.mulf %23, %31 : vector<8x32xf32>
    %40 = arith.addf %38, %39 : vector<8x32xf32>
    %41 = math.tanh %40 : vector<8x32xf32>
    %42 = arith.mulf %37, %41 : vector<8x32xf32>
    %43 = arith.truncf %11 : vector<8x32xf32> to vector<8x32xbf16>
    %cst_21 = arith.constant dense<0.000000e+00> : vector<8x128xf32>
    %44 = tpu.matmul %43, %8, %cst_21 {dimension_numbers = #tpu.dot_dimension_numbers<[1], [0], [0], [1], [0, 0, 1, 1], [], []>} : vector<8x32xbf16>, vector<32x128xbf16>, vector<8x128xf32> -> vector<8x128xf32>
    %45 = arith.addf %14, %44 : vector<8x128xf32>
    %46 = vector.extract_strided_slice %45 {offsets = [0, 0], sizes = [8, 32], strides = [1, 1]} : vector<8x128xf32> to vector<8x32xf32>
    %47 = arith.negf %46 : vector<8x32xf32>
    %48 = math.exp %47 : vector<8x32xf32>
    %cst_22 = arith.constant 1.000000e+00 : f32
    %49 = vector.broadcast %cst_22 : f32 to vector<8x32xf32>
    %50 = arith.addf %49, %48 : vector<8x32xf32>
    %51 = arith.divf %49, %50 : vector<8x32xf32>
    %52 = vector.extract_strided_slice %45 {offsets = [0, 32], sizes = [8, 32], strides = [1, 1]} : vector<8x128xf32> to vector<8x32xf32>
    %53 = arith.negf %52 : vector<8x32xf32>
    %54 = math.exp %53 : vector<8x32xf32>
    %cst_23 = arith.constant 1.000000e+00 : f32
    %55 = vector.broadcast %cst_23 : f32 to vector<8x32xf32>
    %56 = arith.addf %55, %54 : vector<8x32xf32>
    %57 = arith.divf %55, %56 : vector<8x32xf32>
    %58 = vector.extract_strided_slice %45 {offsets = [0, 64], sizes = [8, 32], strides = [1, 1]} : vector<8x128xf32> to vector<8x32xf32>
    %59 = math.tanh %58 : vector<8x32xf32>
    %60 = vector.extract_strided_slice %45 {offsets = [0, 96], sizes = [8, 32], strides = [1, 1]} : vector<8x128xf32> to vector<8x32xf32>
    %61 = arith.negf %60 : vector<8x32xf32>
    %62 = math.exp %61 : vector<8x32xf32>
    %cst_24 = arith.constant 1.000000e+00 : f32
    %63 = vector.broadcast %cst_24 : f32 to vector<8x32xf32>
    %64 = arith.addf %63, %62 : vector<8x32xf32>
    %65 = arith.divf %63, %64 : vector<8x32xf32>
    %66 = arith.mulf %57, %12 : vector<8x32xf32>
    %67 = arith.mulf %51, %59 : vector<8x32xf32>
    %68 = arith.addf %66, %67 : vector<8x32xf32>
    %69 = math.tanh %68 : vector<8x32xf32>
    %70 = arith.mulf %65, %69 : vector<8x32xf32>
    %c0_25 = arith.constant 0 : index
    %c0_26 = arith.constant 0 : index
    %c0_27 = arith.constant 0 : index
    %71 = vector.load %arg5[%c0_25, %c0_26, %c0_27] : memref<16x8x64xf32, #tpu.memory_space<vmem>>, vector<1x8x32xf32>
    %72 = vector.shape_cast %71 : vector<1x8x32xf32> to vector<8x32xf32>
    %73 = vector.shape_cast %42 : vector<8x32xf32> to vector<1x8x32xf32>
    tpu.vector_store %arg5[%c0_25, %c0_26, %c0_27], %73 {strides = array<i32>} : memref<16x8x64xf32, #tpu.memory_space<vmem>>, vector<1x8x32xf32>,
    %c15 = arith.constant 15 : index
    %c0_28 = arith.constant 0 : index
    %c32 = arith.constant 32 : index
    %74 = vector.load %arg5[%c15, %c0_28, %c32] : memref<16x8x64xf32, #tpu.memory_space<vmem>>, vector<1x8x32xf32>
    %75 = vector.shape_cast %74 : vector<1x8x32xf32> to vector<8x32xf32>
    %76 = vector.shape_cast %70 : vector<8x32xf32> to vector<1x8x32xf32>
    tpu.vector_store %arg5[%c15, %c0_28, %c32], %76 {strides = array<i32>} : memref<16x8x64xf32, #tpu.memory_space<vmem>>, vector<1x8x32xf32>,
    %c8 = arith.constant 8 : index
    %c0_29 = arith.constant 0 : index
    %77 = vector.load %arg6[%c8, %c0_29] : memref<128x256xf32, #tpu.memory_space<vmem>>, vector<8x128xf32>
    %c112 = arith.constant 112 : index
    %c128_30 = arith.constant 128 : index
    %78 = vector.load %arg6[%c112, %c128_30] : memref<128x256xf32, #tpu.memory_space<vmem>>, vector<8x128xf32>
    %79 = arith.truncf %42 : vector<8x32xf32> to vector<8x32xbf16>
    %cst_31 = arith.constant dense<0.000000e+00> : vector<8x128xf32>
    %80 = tpu.matmul %79, %7, %cst_31 {dimension_numbers = #tpu.dot_dimension_numbers<[1], [0], [0], [1], [0, 0, 1, 1], [], []>} : vector<8x32xbf16>, vector<32x128xbf16>, vector<8x128xf32> -> vector<8x128xf32>
    %81 = arith.addf %77, %80 : vector<8x128xf32>
    %82 = vector.extract_strided_slice %81 {offsets = [0, 0], sizes = [8, 32], strides = [1, 1]} : vector<8x128xf32> to vector<8x32xf32>
    %83 = arith.negf %82 : vector<8x32xf32>
    %84 = math.exp %83 : vector<8x32xf32>
    %cst_32 = arith.constant 1.000000e+00 : f32
    %85 = vector.broadcast %cst_32 : f32 to vector<8x32xf32>
    %86 = arith.addf %85, %84 : vector<8x32xf32>
    %87 = arith.divf %85, %86 : vector<8x32xf32>
    %88 = vector.extract_strided_slice %81 {offsets = [0, 32], sizes = [8, 32], strides = [1, 1]} : vector<8x128xf32> to vector<8x32xf32>
    %89 = arith.negf %88 : vector<8x32xf32>
    %90 = math.exp %89 : vector<8x32xf32>
    %cst_33 = arith.constant 1.000000e+00 : f32
    %91 = vector.broadcast %cst_33 : f32 to vector<8x32xf32>
    %92 = arith.addf %91, %90 : vector<8x32xf32>
    %93 = arith.divf %91, %92 : vector<8x32xf32>
    %94 = vector.extract_strided_slice %81 {offsets = [0, 64], sizes = [8, 32], strides = [1, 1]} : vector<8x128xf32> to vector<8x32xf32>
    %95 = math.tanh %94 : vector<8x32xf32>
    %96 = vector.extract_strided_slice %81 {offsets = [0, 96], sizes = [8, 32], strides = [1, 1]} : vector<8x128xf32> to vector<8x32xf32>
    %97 = arith.negf %96 : vector<8x32xf32>
    %98 = math.exp %97 : vector<8x32xf32>
    %cst_34 = arith.constant 1.000000e+00 : f32
    %99 = vector.broadcast %cst_34 : f32 to vector<8x32xf32>
    %100 = arith.addf %99, %98 : vector<8x32xf32>
    %101 = arith.divf %99, %100 : vector<8x32xf32>
    %102 = arith.mulf %93, %40 : vector<8x32xf32>
    %103 = arith.mulf %87, %95 : vector<8x32xf32>
    %104 = arith.addf %102, %103 : vector<8x32xf32>
    %105 = math.tanh %104 : vector<8x32xf32>
    %106 = arith.mulf %101, %105 : vector<8x32xf32>
    %107 = arith.truncf %70 : vector<8x32xf32> to vector<8x32xbf16>
    %cst_35 = arith.constant dense<0.000000e+00> : vector<8x128xf32>
    %108 = tpu.matmul %107, %8, %cst_35 {dimension_numbers = #tpu.dot_dimension_numbers<[1], [0], [0], [1], [0, 0, 1, 1], [], []>} : vector<8x32xbf16>, vector<32x128xbf16>, vector<8x128xf32> -> vector<8x128xf32>
    %109 = arith.addf %78, %108 : vector<8x128xf32>
    %110 = vector.extract_strided_slice %109 {offsets = [0, 0], sizes = [8, 32], strides = [1, 1]} : vector<8x128xf32> to vector<8x32xf32>
    %111 = arith.negf %110 : vector<8x32xf32>
    %112 = math.exp %111 : vector<8x32xf32>
    %cst_36 = arith.constant 1.000000e+00 : f32
    %113 = vector.broadcast %cst_36 : f32 to vector<8x32xf32>
    %114 = arith.addf %113, %112 : vector<8x32xf32>
    %115 = arith.divf %113, %114 : vector<8x32xf32>
    %116 = vector.extract_strided_slice %109 {offsets = [0, 32], sizes = [8, 32], strides = [1, 1]} : vector<8x128xf32> to vector<8x32xf32>
    %117 = arith.negf %116 : vector<8x32xf32>
    %118 = math.exp %117 : vector<8x32xf32>
    %cst_37 = arith.constant 1.000000e+00 : f32
    %119 = vector.broadcast %cst_37 : f32 to vector<8x32xf32>
    %120 = arith.addf %119, %118 : vector<8x32xf32>
    %121 = arith.divf %119, %120 : vector<8x32xf32>
    %122 = vector.extract_strided_slice %109 {offsets = [0, 64], sizes = [8, 32], strides = [1, 1]} : vector<8x128xf32> to vector<8x32xf32>
    %123 = math.tanh %122 : vector<8x32xf32>
    %124 = vector.extract_strided_slice %109 {offsets = [0, 96], sizes = [8, 32], strides = [1, 1]} : vector<8x128xf32> to vector<8x32xf32>
    %125 = arith.negf %124 : vector<8x32xf32>
    %126 = math.exp %125 : vector<8x32xf32>
    %cst_38 = arith.constant 1.000000e+00 : f32
    %127 = vector.broadcast %cst_38 : f32 to vector<8x32xf32>
    %128 = arith.addf %127, %126 : vector<8x32xf32>
    %129 = arith.divf %127, %128 : vector<8x32xf32>
    %130 = arith.mulf %121, %68 : vector<8x32xf32>
    %131 = arith.mulf %115, %123 : vector<8x32xf32>
    %132 = arith.addf %130, %131 : vector<8x32xf32>
    %133 = math.tanh %132 : vector<8x32xf32>
    %134 = arith.mulf %129, %133 : vector<8x32xf32>
    %c1 = arith.constant 1 : index
    %c0_39 = arith.constant 0 : index
    %c0_40 = arith.constant 0 : index
    %135 = vector.load %arg5[%c1, %c0_39, %c0_40] : memref<16x8x64xf32, #tpu.memory_space<vmem>>, vector<1x8x32xf32>
    %136 = vector.shape_cast %135 : vector<1x8x32xf32> to vector<8x32xf32>
    %137 = vector.shape_cast %106 : vector<8x32xf32> to vector<1x8x32xf32>
    tpu.vector_store %arg5[%c1, %c0_39, %c0_40], %137 {strides = array<i32>} : memref<16x8x64xf32, #tpu.memory_space<vmem>>, vector<1x8x32xf32>,
    %c14 = arith.constant 14 : index
    %c0_41 = arith.constant 0 : index
    %c32_42 = arith.constant 32 : index
    %138 = vector.load %arg5[%c14, %c0_41, %c32_42] : memref<16x8x64xf32, #tpu.memory_space<vmem>>, vector<1x8x32xf32>
    %139 = vector.shape_cast %138 : vector<1x8x32xf32> to vector<8x32xf32>
    %140 = vector.shape_cast %134 : vector<8x32xf32> to vector<1x8x32xf32>
    tpu.vector_store %arg5[%c14, %c0_41, %c32_42], %140 {strides = array<i32>} : memref<16x8x64xf32, #tpu.memory_space<vmem>>, vector<1x8x32xf32>,
    %c16 = arith.constant 16 : index
    %c0_43 = arith.constant 0 : index
    %141 = vector.load %arg6[%c16, %c0_43] : memref<128x256xf32, #tpu.memory_space<vmem>>, vector<8x128xf32>
    %c104 = arith.constant 104 : index
    %c128_44 = arith.constant 128 : index
    %142 = vector.load %arg6[%c104, %c128_44] : memref<128x256xf32, #tpu.memory_space<vmem>>, vector<8x128xf32>
    %143 = arith.truncf %106 : vector<8x32xf32> to vector<8x32xbf16>
    %cst_45 = arith.constant dense<0.000000e+00> : vector<8x128xf32>
    %144 = tpu.matmul %143, %7, %cst_45 {dimension_numbers = #tpu.dot_dimension_numbers<[1], [0], [0], [1], [0, 0, 1, 1], [], []>} : vector<8x32xbf16>, vector<32x128xbf16>, vector<8x128xf32> -> vector<8x128xf32>
    %145 = arith.addf %141, %144 : vector<8x128xf32>
    %146 = vector.extract_strided_slice %145 {offsets = [0, 0], sizes = [8, 32], strides = [1, 1]} : vector<8x128xf32> to vector<8x32xf32>
    %147 = arith.negf %146 : vector<8x32xf32>
    %148 = math.exp %147 : vector<8x32xf32>
    %cst_46 = arith.constant 1.000000e+00 : f32
    %149 = vector.broadcast %cst_46 : f32 to vector<8x32xf32>
    %150 = arith.addf %149, %148 : vector<8x32xf32>
    %151 = arith.divf %149, %150 : vector<8x32xf32>
    %152 = vector.extract_strided_slice %145 {offsets = [0, 32], sizes = [8, 32], strides = [1, 1]} : vector<8x128xf32> to vector<8x32xf32>
    %153 = arith.negf %152 : vector<8x32xf32>
    %154 = math.exp %153 : vector<8x32xf32>
    %cst_47 = arith.constant 1.000000e+00 : f32
    %155 = vector.broadcast %cst_47 : f32 to vector<8x32xf32>
    %156 = arith.addf %155, %154 : vector<8x32xf32>
    %157 = arith.divf %155, %156 : vector<8x32xf32>
    %158 = vector.extract_strided_slice %145 {offsets = [0, 64], sizes = [8, 32], strides = [1, 1]} : vector<8x128xf32> to vector<8x32xf32>
    %159 = math.tanh %158 : vector<8x32xf32>
    %160 = vector.extract_strided_slice %145 {offsets = [0, 96], sizes = [8, 32], strides = [1, 1]} : vector<8x128xf32> to vector<8x32xf32>
    %161 = arith.negf %160 : vector<8x32xf32>
    %162 = math.exp %161 : vector<8x32xf32>
    %cst_48 = arith.constant 1.000000e+00 : f32
    %163 = vector.broadcast %cst_48 : f32 to vector<8x32xf32>
    %164 = arith.addf %163, %162 : vector<8x32xf32>
    %165 = arith.divf %163, %164 : vector<8x32xf32>
    %166 = arith.mulf %157, %104 : vector<8x32xf32>
    %167 = arith.mulf %151, %159 : vector<8x32xf32>
    %168 = arith.addf %166, %167 : vector<8x32xf32>
    %169 = math.tanh %168 : vector<8x32xf32>
    %170 = arith.mulf %165, %169 : vector<8x32xf32>
    %171 = arith.truncf %134 : vector<8x32xf32> to vector<8x32xbf16>
    %cst_49 = arith.constant dense<0.000000e+00> : vector<8x128xf32>
    %172 = tpu.matmul %171, %8, %cst_49 {dimension_numbers = #tpu.dot_dimension_numbers<[1], [0], [0], [1], [0, 0, 1, 1], [], []>} : vector<8x32xbf16>, vector<32x128xbf16>, vector<8x128xf32> -> vector<8x128xf32>
    %173 = arith.addf %142, %172 : vector<8x128xf32>
    %174 = vector.extract_strided_slice %173 {offsets = [0, 0], sizes = [8, 32], strides = [1, 1]} : vector<8x128xf32> to vector<8x32xf32>
    %175 = arith.negf %174 : vector<8x32xf32>
    %176 = math.exp %175 : vector<8x32xf32>
    %cst_50 = arith.constant 1.000000e+00 : f32
    %177 = vector.broadcast %cst_50 : f32 to vector<8x32xf32>
    %178 = arith.addf %177, %176 : vector<8x32xf32>
    %179 = arith.divf %177, %178 : vector<8x32xf32>
    %180 = vector.extract_strided_slice %173 {offsets = [0, 32], sizes = [8, 32], strides = [1, 1]} : vector<8x128xf32> to vector<8x32xf32>
    %181 = arith.negf %180 : vector<8x32xf32>
    %182 = math.exp %181 : vector<8x32xf32>
    %cst_51 = arith.constant 1.000000e+00 : f32
    %183 = vector.broadcast %cst_51 : f32 to vector<8x32xf32>
    %184 = arith.addf %183, %182 : vector<8x32xf32>
    %185 = arith.divf %183, %184 : vector<8x32xf32>
    %186 = vector.extract_strided_slice %173 {offsets = [0, 64], sizes = [8, 32], strides = [1, 1]} : vector<8x128xf32> to vector<8x32xf32>
    %187 = math.tanh %186 : vector<8x32xf32>
    %188 = vector.extract_strided_slice %173 {offsets = [0, 96], sizes = [8, 32], strides = [1, 1]} : vector<8x128xf32> to vector<8x32xf32>
    %189 = arith.negf %188 : vector<8x32xf32>
    %190 = math.exp %189 : vector<8x32xf32>
    %cst_52 = arith.constant 1.000000e+00 : f32
    %191 = vector.broadcast %cst_52 : f32 to vector<8x32xf32>
    %192 = arith.addf %191, %190 : vector<8x32xf32>
    %193 = arith.divf %191, %192 : vector<8x32xf32>
    %194 = arith.mulf %185, %132 : vector<8x32xf32>
    %195 = arith.mulf %179, %187 : vector<8x32xf32>
    %196 = arith.addf %194, %195 : vector<8x32xf32>
    %197 = math.tanh %196 : vector<8x32xf32>
    %198 = arith.mulf %193, %197 : vector<8x32xf32>
    %c2 = arith.constant 2 : index
    %c0_53 = arith.constant 0 : index
    %c0_54 = arith.constant 0 : index
    %199 = vector.load %arg5[%c2, %c0_53, %c0_54] : memref<16x8x64xf32, #tpu.memory_space<vmem>>, vector<1x8x32xf32>
    %200 = vector.shape_cast %199 : vector<1x8x32xf32> to vector<8x32xf32>
    %201 = vector.shape_cast %170 : vector<8x32xf32> to vector<1x8x32xf32>
    tpu.vector_store %arg5[%c2, %c0_53, %c0_54], %201 {strides = array<i32>} : memref<16x8x64xf32, #tpu.memory_space<vmem>>, vector<1x8x32xf32>,
    %c13 = arith.constant 13 : index
    %c0_55 = arith.constant 0 : index
    %c32_56 = arith.constant 32 : index
    %202 = vector.load %arg5[%c13, %c0_55, %c32_56] : memref<16x8x64xf32, #tpu.memory_space<vmem>>, vector<1x8x32xf32>
    %203 = vector.shape_cast %202 : vector<1x8x32xf32> to vector<8x32xf32>
    %204 = vector.shape_cast %198 : vector<8x32xf32> to vector<1x8x32xf32>
    tpu.vector_store %arg5[%c13, %c0_55, %c32_56], %204 {strides = array<i32>} : memref<16x8x64xf32, #tpu.memory_space<vmem>>, vector<1x8x32xf32>,
    %c24 = arith.constant 24 : index
    %c0_57 = arith.constant 0 : index
    %205 = vector.load %arg6[%c24, %c0_57] : memref<128x256xf32, #tpu.memory_space<vmem>>, vector<8x128xf32>
    %c96 = arith.constant 96 : index
    %c128_58 = arith.constant 128 : index
    %206 = vector.load %arg6[%c96, %c128_58] : memref<128x256xf32, #tpu.memory_space<vmem>>, vector<8x128xf32>
    %207 = arith.truncf %170 : vector<8x32xf32> to vector<8x32xbf16>
    %cst_59 = arith.constant dense<0.000000e+00> : vector<8x128xf32>
    %208 = tpu.matmul %207, %7, %cst_59 {dimension_numbers = #tpu.dot_dimension_numbers<[1], [0], [0], [1], [0, 0, 1, 1], [], []>} : vector<8x32xbf16>, vector<32x128xbf16>, vector<8x128xf32> -> vector<8x128xf32>
    %209 = arith.addf %205, %208 : vector<8x128xf32>
    %210 = vector.extract_strided_slice %209 {offsets = [0, 0], sizes = [8, 32], strides = [1, 1]} : vector<8x128xf32> to vector<8x32xf32>
    %211 = arith.negf %210 : vector<8x32xf32>
    %212 = math.exp %211 : vector<8x32xf32>
    %cst_60 = arith.constant 1.000000e+00 : f32
    %213 = vector.broadcast %cst_60 : f32 to vector<8x32xf32>
    %214 = arith.addf %213, %212 : vector<8x32xf32>
    %215 = arith.divf %213, %214 : vector<8x32xf32>
    %216 = vector.extract_strided_slice %209 {offsets = [0, 32], sizes = [8, 32], strides = [1, 1]} : vector<8x128xf32> to vector<8x32xf32>
    %217 = arith.negf %216 : vector<8x32xf32>
    %218 = math.exp %217 : vector<8x32xf32>
    %cst_61 = arith.constant 1.000000e+00 : f32
    %219 = vector.broadcast %cst_61 : f32 to vector<8x32xf32>
    %220 = arith.addf %219, %218 : vector<8x32xf32>
    %221 = arith.divf %219, %220 : vector<8x32xf32>
    %222 = vector.extract_strided_slice %209 {offsets = [0, 64], sizes = [8, 32], strides = [1, 1]} : vector<8x128xf32> to vector<8x32xf32>
    %223 = math.tanh %222 : vector<8x32xf32>
    %224 = vector.extract_strided_slice %209 {offsets = [0, 96], sizes = [8, 32], strides = [1, 1]} : vector<8x128xf32> to vector<8x32xf32>
    %225 = arith.negf %224 : vector<8x32xf32>
    %226 = math.exp %225 : vector<8x32xf32>
    %cst_62 = arith.constant 1.000000e+00 : f32
    %227 = vector.broadcast %cst_62 : f32 to vector<8x32xf32>
    %228 = arith.addf %227, %226 : vector<8x32xf32>
    %229 = arith.divf %227, %228 : vector<8x32xf32>
    %230 = arith.mulf %221, %168 : vector<8x32xf32>
    %231 = arith.mulf %215, %223 : vector<8x32xf32>
    %232 = arith.addf %230, %231 : vector<8x32xf32>
    %233 = math.tanh %232 : vector<8x32xf32>
    %234 = arith.mulf %229, %233 : vector<8x32xf32>
    %235 = arith.truncf %198 : vector<8x32xf32> to vector<8x32xbf16>
    %cst_63 = arith.constant dense<0.000000e+00> : vector<8x128xf32>
    %236 = tpu.matmul %235, %8, %cst_63 {dimension_numbers = #tpu.dot_dimension_numbers<[1], [0], [0], [1], [0, 0, 1, 1], [], []>} : vector<8x32xbf16>, vector<32x128xbf16>, vector<8x128xf32> -> vector<8x128xf32>
    %237 = arith.addf %206, %236 : vector<8x128xf32>
    %238 = vector.extract_strided_slice %237 {offsets = [0, 0], sizes = [8, 32], strides = [1, 1]} : vector<8x128xf32> to vector<8x32xf32>
    %239 = arith.negf %238 : vector<8x32xf32>
    %240 = math.exp %239 : vector<8x32xf32>
    %cst_64 = arith.constant 1.000000e+00 : f32
    %241 = vector.broadcast %cst_64 : f32 to vector<8x32xf32>
    %242 = arith.addf %241, %240 : vector<8x32xf32>
    %243 = arith.divf %241, %242 : vector<8x32xf32>
    %244 = vector.extract_strided_slice %237 {offsets = [0, 32], sizes = [8, 32], strides = [1, 1]} : vector<8x128xf32> to vector<8x32xf32>
    %245 = arith.negf %244 : vector<8x32xf32>
    %246 = math.exp %245 : vector<8x32xf32>
    %cst_65 = arith.constant 1.000000e+00 : f32
    %247 = vector.broadcast %cst_65 : f32 to vector<8x32xf32>
    %248 = arith.addf %247, %246 : vector<8x32xf32>
    %249 = arith.divf %247, %248 : vector<8x32xf32>
    %250 = vector.extract_strided_slice %237 {offsets = [0, 64], sizes = [8, 32], strides = [1, 1]} : vector<8x128xf32> to vector<8x32xf32>
    %251 = math.tanh %250 : vector<8x32xf32>
    %252 = vector.extract_strided_slice %237 {offsets = [0, 96], sizes = [8, 32], strides = [1, 1]} : vector<8x128xf32> to vector<8x32xf32>
    %253 = arith.negf %252 : vector<8x32xf32>
    %254 = math.exp %253 : vector<8x32xf32>
    %cst_66 = arith.constant 1.000000e+00 : f32
    %255 = vector.broadcast %cst_66 : f32 to vector<8x32xf32>
    %256 = arith.addf %255, %254 : vector<8x32xf32>
    %257 = arith.divf %255, %256 : vector<8x32xf32>
    %258 = arith.mulf %249, %196 : vector<8x32xf32>
    %259 = arith.mulf %243, %251 : vector<8x32xf32>
    %260 = arith.addf %258, %259 : vector<8x32xf32>
    %261 = math.tanh %260 : vector<8x32xf32>
    %262 = arith.mulf %257, %261 : vector<8x32xf32>
    %c3 = arith.constant 3 : index
    %c0_67 = arith.constant 0 : index
    %c0_68 = arith.constant 0 : index
    %263 = vector.load %arg5[%c3, %c0_67, %c0_68] : memref<16x8x64xf32, #tpu.memory_space<vmem>>, vector<1x8x32xf32>
    %264 = vector.shape_cast %263 : vector<1x8x32xf32> to vector<8x32xf32>
    %265 = vector.shape_cast %234 : vector<8x32xf32> to vector<1x8x32xf32>
    tpu.vector_store %arg5[%c3, %c0_67, %c0_68], %265 {strides = array<i32>} : memref<16x8x64xf32, #tpu.memory_space<vmem>>, vector<1x8x32xf32>,
    %c12 = arith.constant 12 : index
    %c0_69 = arith.constant 0 : index
    %c32_70 = arith.constant 32 : index
    %266 = vector.load %arg5[%c12, %c0_69, %c32_70] : memref<16x8x64xf32, #tpu.memory_space<vmem>>, vector<1x8x32xf32>
    %267 = vector.shape_cast %266 : vector<1x8x32xf32> to vector<8x32xf32>
    %268 = vector.shape_cast %262 : vector<8x32xf32> to vector<1x8x32xf32>
    tpu.vector_store %arg5[%c12, %c0_69, %c32_70], %268 {strides = array<i32>} : memref<16x8x64xf32, #tpu.memory_space<vmem>>, vector<1x8x32xf32>,
    %c32_71 = arith.constant 32 : index
    %c0_72 = arith.constant 0 : index
    %269 = vector.load %arg6[%c32_71, %c0_72] : memref<128x256xf32, #tpu.memory_space<vmem>>, vector<8x128xf32>
    %c88 = arith.constant 88 : index
    %c128_73 = arith.constant 128 : index
    %270 = vector.load %arg6[%c88, %c128_73] : memref<128x256xf32, #tpu.memory_space<vmem>>, vector<8x128xf32>
    %271 = arith.truncf %234 : vector<8x32xf32> to vector<8x32xbf16>
    %cst_74 = arith.constant dense<0.000000e+00> : vector<8x128xf32>
    %272 = tpu.matmul %271, %7, %cst_74 {dimension_numbers = #tpu.dot_dimension_numbers<[1], [0], [0], [1], [0, 0, 1, 1], [], []>} : vector<8x32xbf16>, vector<32x128xbf16>, vector<8x128xf32> -> vector<8x128xf32>
    %273 = arith.addf %269, %272 : vector<8x128xf32>
    %274 = vector.extract_strided_slice %273 {offsets = [0, 0], sizes = [8, 32], strides = [1, 1]} : vector<8x128xf32> to vector<8x32xf32>
    %275 = arith.negf %274 : vector<8x32xf32>
    %276 = math.exp %275 : vector<8x32xf32>
    %cst_75 = arith.constant 1.000000e+00 : f32
    %277 = vector.broadcast %cst_75 : f32 to vector<8x32xf32>
    %278 = arith.addf %277, %276 : vector<8x32xf32>
    %279 = arith.divf %277, %278 : vector<8x32xf32>
    %280 = vector.extract_strided_slice %273 {offsets = [0, 32], sizes = [8, 32], strides = [1, 1]} : vector<8x128xf32> to vector<8x32xf32>
    %281 = arith.negf %280 : vector<8x32xf32>
    %282 = math.exp %281 : vector<8x32xf32>
    %cst_76 = arith.constant 1.000000e+00 : f32
    %283 = vector.broadcast %cst_76 : f32 to vector<8x32xf32>
    %284 = arith.addf %283, %282 : vector<8x32xf32>
    %285 = arith.divf %283, %284 : vector<8x32xf32>
    %286 = vector.extract_strided_slice %273 {offsets = [0, 64], sizes = [8, 32], strides = [1, 1]} : vector<8x128xf32> to vector<8x32xf32>
    %287 = math.tanh %286 : vector<8x32xf32>
    %288 = vector.extract_strided_slice %273 {offsets = [0, 96], sizes = [8, 32], strides = [1, 1]} : vector<8x128xf32> to vector<8x32xf32>
    %289 = arith.negf %288 : vector<8x32xf32>
    %290 = math.exp %289 : vector<8x32xf32>
    %cst_77 = arith.constant 1.000000e+00 : f32
    %291 = vector.broadcast %cst_77 : f32 to vector<8x32xf32>
    %292 = arith.addf %291, %290 : vector<8x32xf32>
    %293 = arith.divf %291, %292 : vector<8x32xf32>
    %294 = arith.mulf %285, %232 : vector<8x32xf32>
    %295 = arith.mulf %279, %287 : vector<8x32xf32>
    %296 = arith.addf %294, %295 : vector<8x32xf32>
    %297 = math.tanh %296 : vector<8x32xf32>
    %298 = arith.mulf %293, %297 : vector<8x32xf32>
    %299 = arith.truncf %262 : vector<8x32xf32> to vector<8x32xbf16>
    %cst_78 = arith.constant dense<0.000000e+00> : vector<8x128xf32>
    %300 = tpu.matmul %299, %8, %cst_78 {dimension_numbers = #tpu.dot_dimension_numbers<[1], [0], [0], [1], [0, 0, 1, 1], [], []>} : vector<8x32xbf16>, vector<32x128xbf16>, vector<8x128xf32> -> vector<8x128xf32>
    %301 = arith.addf %270, %300 : vector<8x128xf32>
    %302 = vector.extract_strided_slice %301 {offsets = [0, 0], sizes = [8, 32], strides = [1, 1]} : vector<8x128xf32> to vector<8x32xf32>
    %303 = arith.negf %302 : vector<8x32xf32>
    %304 = math.exp %303 : vector<8x32xf32>
    %cst_79 = arith.constant 1.000000e+00 : f32
    %305 = vector.broadcast %cst_79 : f32 to vector<8x32xf32>
    %306 = arith.addf %305, %304 : vector<8x32xf32>
    %307 = arith.divf %305, %306 : vector<8x32xf32>
    %308 = vector.extract_strided_slice %301 {offsets = [0, 32], sizes = [8, 32], strides = [1, 1]} : vector<8x128xf32> to vector<8x32xf32>
    %309 = arith.negf %308 : vector<8x32xf32>
    %310 = math.exp %309 : vector<8x32xf32>
    %cst_80 = arith.constant 1.000000e+00 : f32
    %311 = vector.broadcast %cst_80 : f32 to vector<8x32xf32>
    %312 = arith.addf %311, %310 : vector<8x32xf32>
    %313 = arith.divf %311, %312 : vector<8x32xf32>
    %314 = vector.extract_strided_slice %301 {offsets = [0, 64], sizes = [8, 32], strides = [1, 1]} : vector<8x128xf32> to vector<8x32xf32>
    %315 = math.tanh %314 : vector<8x32xf32>
    %316 = vector.extract_strided_slice %301 {offsets = [0, 96], sizes = [8, 32], strides = [1, 1]} : vector<8x128xf32> to vector<8x32xf32>
    %317 = arith.negf %316 : vector<8x32xf32>
    %318 = math.exp %317 : vector<8x32xf32>
    %cst_81 = arith.constant 1.000000e+00 : f32
    %319 = vector.broadcast %cst_81 : f32 to vector<8x32xf32>
    %320 = arith.addf %319, %318 : vector<8x32xf32>
    %321 = arith.divf %319, %320 : vector<8x32xf32>
    %322 = arith.mulf %313, %260 : vector<8x32xf32>
    %323 = arith.mulf %307, %315 : vector<8x32xf32>
    %324 = arith.addf %322, %323 : vector<8x32xf32>
    %325 = math.tanh %324 : vector<8x32xf32>
    %326 = arith.mulf %321, %325 : vector<8x32xf32>
    %c4 = arith.constant 4 : index
    %c0_82 = arith.constant 0 : index
    %c0_83 = arith.constant 0 : index
    %327 = vector.load %arg5[%c4, %c0_82, %c0_83] : memref<16x8x64xf32, #tpu.memory_space<vmem>>, vector<1x8x32xf32>
    %328 = vector.shape_cast %327 : vector<1x8x32xf32> to vector<8x32xf32>
    %329 = vector.shape_cast %298 : vector<8x32xf32> to vector<1x8x32xf32>
    tpu.vector_store %arg5[%c4, %c0_82, %c0_83], %329 {strides = array<i32>} : memref<16x8x64xf32, #tpu.memory_space<vmem>>, vector<1x8x32xf32>,
    %c11 = arith.constant 11 : index
    %c0_84 = arith.constant 0 : index
    %c32_85 = arith.constant 32 : index
    %330 = vector.load %arg5[%c11, %c0_84, %c32_85] : memref<16x8x64xf32, #tpu.memory_space<vmem>>, vector<1x8x32xf32>
    %331 = vector.shape_cast %330 : vector<1x8x32xf32> to vector<8x32xf32>
    %332 = vector.shape_cast %326 : vector<8x32xf32> to vector<1x8x32xf32>
    tpu.vector_store %arg5[%c11, %c0_84, %c32_85], %332 {strides = array<i32>} : memref<16x8x64xf32, #tpu.memory_space<vmem>>, vector<1x8x32xf32>,
    %c40 = arith.constant 40 : index
    %c0_86 = arith.constant 0 : index
    %333 = vector.load %arg6[%c40, %c0_86] : memref<128x256xf32, #tpu.memory_space<vmem>>, vector<8x128xf32>
    %c80 = arith.constant 80 : index
    %c128_87 = arith.constant 128 : index
    %334 = vector.load %arg6[%c80, %c128_87] : memref<128x256xf32, #tpu.memory_space<vmem>>, vector<8x128xf32>
    %335 = arith.truncf %298 : vector<8x32xf32> to vector<8x32xbf16>
    %cst_88 = arith.constant dense<0.000000e+00> : vector<8x128xf32>
    %336 = tpu.matmul %335, %7, %cst_88 {dimension_numbers = #tpu.dot_dimension_numbers<[1], [0], [0], [1], [0, 0, 1, 1], [], []>} : vector<8x32xbf16>, vector<32x128xbf16>, vector<8x128xf32> -> vector<8x128xf32>
    %337 = arith.addf %333, %336 : vector<8x128xf32>
    %338 = vector.extract_strided_slice %337 {offsets = [0, 0], sizes = [8, 32], strides = [1, 1]} : vector<8x128xf32> to vector<8x32xf32>
    %339 = arith.negf %338 : vector<8x32xf32>
    %340 = math.exp %339 : vector<8x32xf32>
    %cst_89 = arith.constant 1.000000e+00 : f32
    %341 = vector.broadcast %cst_89 : f32 to vector<8x32xf32>
    %342 = arith.addf %341, %340 : vector<8x32xf32>
    %343 = arith.divf %341, %342 : vector<8x32xf32>
    %344 = vector.extract_strided_slice %337 {offsets = [0, 32], sizes = [8, 32], strides = [1, 1]} : vector<8x128xf32> to vector<8x32xf32>
    %345 = arith.negf %344 : vector<8x32xf32>
    %346 = math.exp %345 : vector<8x32xf32>
    %cst_90 = arith.constant 1.000000e+00 : f32
    %347 = vector.broadcast %cst_90 : f32 to vector<8x32xf32>
    %348 = arith.addf %347, %346 : vector<8x32xf32>
    %349 = arith.divf %347, %348 : vector<8x32xf32>
    %350 = vector.extract_strided_slice %337 {offsets = [0, 64], sizes = [8, 32], strides = [1, 1]} : vector<8x128xf32> to vector<8x32xf32>
    %351 = math.tanh %350 : vector<8x32xf32>
    %352 = vector.extract_strided_slice %337 {offsets = [0, 96], sizes = [8, 32], strides = [1, 1]} : vector<8x128xf32> to vector<8x32xf32>
    %353 = arith.negf %352 : vector<8x32xf32>
    %354 = math.exp %353 : vector<8x32xf32>
    %cst_91 = arith.constant 1.000000e+00 : f32
    %355 = vector.broadcast %cst_91 : f32 to vector<8x32xf32>
    %356 = arith.addf %355, %354 : vector<8x32xf32>
    %357 = arith.divf %355, %356 : vector<8x32xf32>
    %358 = arith.mulf %349, %296 : vector<8x32xf32>
    %359 = arith.mulf %343, %351 : vector<8x32xf32>
    %360 = arith.addf %358, %359 : vector<8x32xf32>
    %361 = math.tanh %360 : vector<8x32xf32>
    %362 = arith.mulf %357, %361 : vector<8x32xf32>
    %363 = arith.truncf %326 : vector<8x32xf32> to vector<8x32xbf16>
    %cst_92 = arith.constant dense<0.000000e+00> : vector<8x128xf32>
    %364 = tpu.matmul %363, %8, %cst_92 {dimension_numbers = #tpu.dot_dimension_numbers<[1], [0], [0], [1], [0, 0, 1, 1], [], []>} : vector<8x32xbf16>, vector<32x128xbf16>, vector<8x128xf32> -> vector<8x128xf32>
    %365 = arith.addf %334, %364 : vector<8x128xf32>
    %366 = vector.extract_strided_slice %365 {offsets = [0, 0], sizes = [8, 32], strides = [1, 1]} : vector<8x128xf32> to vector<8x32xf32>
    %367 = arith.negf %366 : vector<8x32xf32>
    %368 = math.exp %367 : vector<8x32xf32>
    %cst_93 = arith.constant 1.000000e+00 : f32
    %369 = vector.broadcast %cst_93 : f32 to vector<8x32xf32>
    %370 = arith.addf %369, %368 : vector<8x32xf32>
    %371 = arith.divf %369, %370 : vector<8x32xf32>
    %372 = vector.extract_strided_slice %365 {offsets = [0, 32], sizes = [8, 32], strides = [1, 1]} : vector<8x128xf32> to vector<8x32xf32>
    %373 = arith.negf %372 : vector<8x32xf32>
    %374 = math.exp %373 : vector<8x32xf32>
    %cst_94 = arith.constant 1.000000e+00 : f32
    %375 = vector.broadcast %cst_94 : f32 to vector<8x32xf32>
    %376 = arith.addf %375, %374 : vector<8x32xf32>
    %377 = arith.divf %375, %376 : vector<8x32xf32>
    %378 = vector.extract_strided_slice %365 {offsets = [0, 64], sizes = [8, 32], strides = [1, 1]} : vector<8x128xf32> to vector<8x32xf32>
    %379 = math.tanh %378 : vector<8x32xf32>
    %380 = vector.extract_strided_slice %365 {offsets = [0, 96], sizes = [8, 32], strides = [1, 1]} : vector<8x128xf32> to vector<8x32xf32>
    %381 = arith.negf %380 : vector<8x32xf32>
    %382 = math.exp %381 : vector<8x32xf32>
    %cst_95 = arith.constant 1.000000e+00 : f32
    %383 = vector.broadcast %cst_95 : f32 to vector<8x32xf32>
    %384 = arith.addf %383, %382 : vector<8x32xf32>
    %385 = arith.divf %383, %384 : vector<8x32xf32>
    %386 = arith.mulf %377, %324 : vector<8x32xf32>
    %387 = arith.mulf %371, %379 : vector<8x32xf32>
    %388 = arith.addf %386, %387 : vector<8x32xf32>
    %389 = math.tanh %388 : vector<8x32xf32>
    %390 = arith.mulf %385, %389 : vector<8x32xf32>
    %c5 = arith.constant 5 : index
    %c0_96 = arith.constant 0 : index
    %c0_97 = arith.constant 0 : index
    %391 = vector.load %arg5[%c5, %c0_96, %c0_97] : memref<16x8x64xf32, #tpu.memory_space<vmem>>, vector<1x8x32xf32>
    %392 = vector.shape_cast %391 : vector<1x8x32xf32> to vector<8x32xf32>
    %393 = vector.shape_cast %362 : vector<8x32xf32> to vector<1x8x32xf32>
    tpu.vector_store %arg5[%c5, %c0_96, %c0_97], %393 {strides = array<i32>} : memref<16x8x64xf32, #tpu.memory_space<vmem>>, vector<1x8x32xf32>,
    %c10 = arith.constant 10 : index
    %c0_98 = arith.constant 0 : index
    %c32_99 = arith.constant 32 : index
    %394 = vector.load %arg5[%c10, %c0_98, %c32_99] : memref<16x8x64xf32, #tpu.memory_space<vmem>>, vector<1x8x32xf32>
    %395 = vector.shape_cast %394 : vector<1x8x32xf32> to vector<8x32xf32>
    %396 = vector.shape_cast %390 : vector<8x32xf32> to vector<1x8x32xf32>
    tpu.vector_store %arg5[%c10, %c0_98, %c32_99], %396 {strides = array<i32>} : memref<16x8x64xf32, #tpu.memory_space<vmem>>, vector<1x8x32xf32>,
    %c48 = arith.constant 48 : index
    %c0_100 = arith.constant 0 : index
    %397 = vector.load %arg6[%c48, %c0_100] : memref<128x256xf32, #tpu.memory_space<vmem>>, vector<8x128xf32>
    %c72 = arith.constant 72 : index
    %c128_101 = arith.constant 128 : index
    %398 = vector.load %arg6[%c72, %c128_101] : memref<128x256xf32, #tpu.memory_space<vmem>>, vector<8x128xf32>
    %399 = arith.truncf %362 : vector<8x32xf32> to vector<8x32xbf16>
    %cst_102 = arith.constant dense<0.000000e+00> : vector<8x128xf32>
    %400 = tpu.matmul %399, %7, %cst_102 {dimension_numbers = #tpu.dot_dimension_numbers<[1], [0], [0], [1], [0, 0, 1, 1], [], []>} : vector<8x32xbf16>, vector<32x128xbf16>, vector<8x128xf32> -> vector<8x128xf32>
    %401 = arith.addf %397, %400 : vector<8x128xf32>
    %402 = vector.extract_strided_slice %401 {offsets = [0, 0], sizes = [8, 32], strides = [1, 1]} : vector<8x128xf32> to vector<8x32xf32>
    %403 = arith.negf %402 : vector<8x32xf32>
    %404 = math.exp %403 : vector<8x32xf32>
    %cst_103 = arith.constant 1.000000e+00 : f32
    %405 = vector.broadcast %cst_103 : f32 to vector<8x32xf32>
    %406 = arith.addf %405, %404 : vector<8x32xf32>
    %407 = arith.divf %405, %406 : vector<8x32xf32>
    %408 = vector.extract_strided_slice %401 {offsets = [0, 32], sizes = [8, 32], strides = [1, 1]} : vector<8x128xf32> to vector<8x32xf32>
    %409 = arith.negf %408 : vector<8x32xf32>
    %410 = math.exp %409 : vector<8x32xf32>
    %cst_104 = arith.constant 1.000000e+00 : f32
    %411 = vector.broadcast %cst_104 : f32 to vector<8x32xf32>
    %412 = arith.addf %411, %410 : vector<8x32xf32>
    %413 = arith.divf %411, %412 : vector<8x32xf32>
    %414 = vector.extract_strided_slice %401 {offsets = [0, 64], sizes = [8, 32], strides = [1, 1]} : vector<8x128xf32> to vector<8x32xf32>
    %415 = math.tanh %414 : vector<8x32xf32>
    %416 = vector.extract_strided_slice %401 {offsets = [0, 96], sizes = [8, 32], strides = [1, 1]} : vector<8x128xf32> to vector<8x32xf32>
    %417 = arith.negf %416 : vector<8x32xf32>
    %418 = math.exp %417 : vector<8x32xf32>
    %cst_105 = arith.constant 1.000000e+00 : f32
    %419 = vector.broadcast %cst_105 : f32 to vector<8x32xf32>
    %420 = arith.addf %419, %418 : vector<8x32xf32>
    %421 = arith.divf %419, %420 : vector<8x32xf32>
    %422 = arith.mulf %413, %360 : vector<8x32xf32>
    %423 = arith.mulf %407, %415 : vector<8x32xf32>
    %424 = arith.addf %422, %423 : vector<8x32xf32>
    %425 = math.tanh %424 : vector<8x32xf32>
    %426 = arith.mulf %421, %425 : vector<8x32xf32>
    %427 = arith.truncf %390 : vector<8x32xf32> to vector<8x32xbf16>
    %cst_106 = arith.constant dense<0.000000e+00> : vector<8x128xf32>
    %428 = tpu.matmul %427, %8, %cst_106 {dimension_numbers = #tpu.dot_dimension_numbers<[1], [0], [0], [1], [0, 0, 1, 1], [], []>} : vector<8x32xbf16>, vector<32x128xbf16>, vector<8x128xf32> -> vector<8x128xf32>
    %429 = arith.addf %398, %428 : vector<8x128xf32>
    %430 = vector.extract_strided_slice %429 {offsets = [0, 0], sizes = [8, 32], strides = [1, 1]} : vector<8x128xf32> to vector<8x32xf32>
    %431 = arith.negf %430 : vector<8x32xf32>
    %432 = math.exp %431 : vector<8x32xf32>
    %cst_107 = arith.constant 1.000000e+00 : f32
    %433 = vector.broadcast %cst_107 : f32 to vector<8x32xf32>
    %434 = arith.addf %433, %432 : vector<8x32xf32>
    %435 = arith.divf %433, %434 : vector<8x32xf32>
    %436 = vector.extract_strided_slice %429 {offsets = [0, 32], sizes = [8, 32], strides = [1, 1]} : vector<8x128xf32> to vector<8x32xf32>
    %437 = arith.negf %436 : vector<8x32xf32>
    %438 = math.exp %437 : vector<8x32xf32>
    %cst_108 = arith.constant 1.000000e+00 : f32
    %439 = vector.broadcast %cst_108 : f32 to vector<8x32xf32>
    %440 = arith.addf %439, %438 : vector<8x32xf32>
    %441 = arith.divf %439, %440 : vector<8x32xf32>
    %442 = vector.extract_strided_slice %429 {offsets = [0, 64], sizes = [8, 32], strides = [1, 1]} : vector<8x128xf32> to vector<8x32xf32>
    %443 = math.tanh %442 : vector<8x32xf32>
    %444 = vector.extract_strided_slice %429 {offsets = [0, 96], sizes = [8, 32], strides = [1, 1]} : vector<8x128xf32> to vector<8x32xf32>
    %445 = arith.negf %444 : vector<8x32xf32>
    %446 = math.exp %445 : vector<8x32xf32>
    %cst_109 = arith.constant 1.000000e+00 : f32
    %447 = vector.broadcast %cst_109 : f32 to vector<8x32xf32>
    %448 = arith.addf %447, %446 : vector<8x32xf32>
    %449 = arith.divf %447, %448 : vector<8x32xf32>
    %450 = arith.mulf %441, %388 : vector<8x32xf32>
    %451 = arith.mulf %435, %443 : vector<8x32xf32>
    %452 = arith.addf %450, %451 : vector<8x32xf32>
    %453 = math.tanh %452 : vector<8x32xf32>
    %454 = arith.mulf %449, %453 : vector<8x32xf32>
    %c6 = arith.constant 6 : index
    %c0_110 = arith.constant 0 : index
    %c0_111 = arith.constant 0 : index
    %455 = vector.load %arg5[%c6, %c0_110, %c0_111] : memref<16x8x64xf32, #tpu.memory_space<vmem>>, vector<1x8x32xf32>
    %456 = vector.shape_cast %455 : vector<1x8x32xf32> to vector<8x32xf32>
    %457 = vector.shape_cast %426 : vector<8x32xf32> to vector<1x8x32xf32>
    tpu.vector_store %arg5[%c6, %c0_110, %c0_111], %457 {strides = array<i32>} : memref<16x8x64xf32, #tpu.memory_space<vmem>>, vector<1x8x32xf32>,
    %c9 = arith.constant 9 : index
    %c0_112 = arith.constant 0 : index
    %c32_113 = arith.constant 32 : index
    %458 = vector.load %arg5[%c9, %c0_112, %c32_113] : memref<16x8x64xf32, #tpu.memory_space<vmem>>, vector<1x8x32xf32>
    %459 = vector.shape_cast %458 : vector<1x8x32xf32> to vector<8x32xf32>
    %460 = vector.shape_cast %454 : vector<8x32xf32> to vector<1x8x32xf32>
    tpu.vector_store %arg5[%c9, %c0_112, %c32_113], %460 {strides = array<i32>} : memref<16x8x64xf32, #tpu.memory_space<vmem>>, vector<1x8x32xf32>,
    %c56 = arith.constant 56 : index
    %c0_114 = arith.constant 0 : index
    %461 = vector.load %arg6[%c56, %c0_114] : memref<128x256xf32, #tpu.memory_space<vmem>>, vector<8x128xf32>
    %c64 = arith.constant 64 : index
    %c128_115 = arith.constant 128 : index
    %462 = vector.load %arg6[%c64, %c128_115] : memref<128x256xf32, #tpu.memory_space<vmem>>, vector<8x128xf32>
    %463 = arith.truncf %426 : vector<8x32xf32> to vector<8x32xbf16>
    %cst_116 = arith.constant dense<0.000000e+00> : vector<8x128xf32>
    %464 = tpu.matmul %463, %7, %cst_116 {dimension_numbers = #tpu.dot_dimension_numbers<[1], [0], [0], [1], [0, 0, 1, 1], [], []>} : vector<8x32xbf16>, vector<32x128xbf16>, vector<8x128xf32> -> vector<8x128xf32>
    %465 = arith.addf %461, %464 : vector<8x128xf32>
    %466 = vector.extract_strided_slice %465 {offsets = [0, 0], sizes = [8, 32], strides = [1, 1]} : vector<8x128xf32> to vector<8x32xf32>
    %467 = arith.negf %466 : vector<8x32xf32>
    %468 = math.exp %467 : vector<8x32xf32>
    %cst_117 = arith.constant 1.000000e+00 : f32
    %469 = vector.broadcast %cst_117 : f32 to vector<8x32xf32>
    %470 = arith.addf %469, %468 : vector<8x32xf32>
    %471 = arith.divf %469, %470 : vector<8x32xf32>
    %472 = vector.extract_strided_slice %465 {offsets = [0, 32], sizes = [8, 32], strides = [1, 1]} : vector<8x128xf32> to vector<8x32xf32>
    %473 = arith.negf %472 : vector<8x32xf32>
    %474 = math.exp %473 : vector<8x32xf32>
    %cst_118 = arith.constant 1.000000e+00 : f32
    %475 = vector.broadcast %cst_118 : f32 to vector<8x32xf32>
    %476 = arith.addf %475, %474 : vector<8x32xf32>
    %477 = arith.divf %475, %476 : vector<8x32xf32>
    %478 = vector.extract_strided_slice %465 {offsets = [0, 64], sizes = [8, 32], strides = [1, 1]} : vector<8x128xf32> to vector<8x32xf32>
    %479 = math.tanh %478 : vector<8x32xf32>
    %480 = vector.extract_strided_slice %465 {offsets = [0, 96], sizes = [8, 32], strides = [1, 1]} : vector<8x128xf32> to vector<8x32xf32>
    %481 = arith.negf %480 : vector<8x32xf32>
    %482 = math.exp %481 : vector<8x32xf32>
    %cst_119 = arith.constant 1.000000e+00 : f32
    %483 = vector.broadcast %cst_119 : f32 to vector<8x32xf32>
    %484 = arith.addf %483, %482 : vector<8x32xf32>
    %485 = arith.divf %483, %484 : vector<8x32xf32>
    %486 = arith.mulf %477, %424 : vector<8x32xf32>
    %487 = arith.mulf %471, %479 : vector<8x32xf32>
    %488 = arith.addf %486, %487 : vector<8x32xf32>
    %489 = math.tanh %488 : vector<8x32xf32>
    %490 = arith.mulf %485, %489 : vector<8x32xf32>
    %491 = arith.truncf %454 : vector<8x32xf32> to vector<8x32xbf16>
    %cst_120 = arith.constant dense<0.000000e+00> : vector<8x128xf32>
    %492 = tpu.matmul %491, %8, %cst_120 {dimension_numbers = #tpu.dot_dimension_numbers<[1], [0], [0], [1], [0, 0, 1, 1], [], []>} : vector<8x32xbf16>, vector<32x128xbf16>, vector<8x128xf32> -> vector<8x128xf32>
    %493 = arith.addf %462, %492 : vector<8x128xf32>
    %494 = vector.extract_strided_slice %493 {offsets = [0, 0], sizes = [8, 32], strides = [1, 1]} : vector<8x128xf32> to vector<8x32xf32>
    %495 = arith.negf %494 : vector<8x32xf32>
    %496 = math.exp %495 : vector<8x32xf32>
    %cst_121 = arith.constant 1.000000e+00 : f32
    %497 = vector.broadcast %cst_121 : f32 to vector<8x32xf32>
    %498 = arith.addf %497, %496 : vector<8x32xf32>
    %499 = arith.divf %497, %498 : vector<8x32xf32>
    %500 = vector.extract_strided_slice %493 {offsets = [0, 32], sizes = [8, 32], strides = [1, 1]} : vector<8x128xf32> to vector<8x32xf32>
    %501 = arith.negf %500 : vector<8x32xf32>
    %502 = math.exp %501 : vector<8x32xf32>
    %cst_122 = arith.constant 1.000000e+00 : f32
    %503 = vector.broadcast %cst_122 : f32 to vector<8x32xf32>
    %504 = arith.addf %503, %502 : vector<8x32xf32>
    %505 = arith.divf %503, %504 : vector<8x32xf32>
    %506 = vector.extract_strided_slice %493 {offsets = [0, 64], sizes = [8, 32], strides = [1, 1]} : vector<8x128xf32> to vector<8x32xf32>
    %507 = math.tanh %506 : vector<8x32xf32>
    %508 = vector.extract_strided_slice %493 {offsets = [0, 96], sizes = [8, 32], strides = [1, 1]} : vector<8x128xf32> to vector<8x32xf32>
    %509 = arith.negf %508 : vector<8x32xf32>
    %510 = math.exp %509 : vector<8x32xf32>
    %cst_123 = arith.constant 1.000000e+00 : f32
    %511 = vector.broadcast %cst_123 : f32 to vector<8x32xf32>
    %512 = arith.addf %511, %510 : vector<8x32xf32>
    %513 = arith.divf %511, %512 : vector<8x32xf32>
    %514 = arith.mulf %505, %452 : vector<8x32xf32>
    %515 = arith.mulf %499, %507 : vector<8x32xf32>
    %516 = arith.addf %514, %515 : vector<8x32xf32>
    %517 = math.tanh %516 : vector<8x32xf32>
    %518 = arith.mulf %513, %517 : vector<8x32xf32>
    %c7 = arith.constant 7 : index
    %c0_124 = arith.constant 0 : index
    %c0_125 = arith.constant 0 : index
    %519 = vector.load %arg5[%c7, %c0_124, %c0_125] : memref<16x8x64xf32, #tpu.memory_space<vmem>>, vector<1x8x32xf32>
    %520 = vector.shape_cast %519 : vector<1x8x32xf32> to vector<8x32xf32>
    %521 = vector.shape_cast %490 : vector<8x32xf32> to vector<1x8x32xf32>
    tpu.vector_store %arg5[%c7, %c0_124, %c0_125], %521 {strides = array<i32>} : memref<16x8x64xf32, #tpu.memory_space<vmem>>, vector<1x8x32xf32>,
    %c8_126 = arith.constant 8 : index
    %c0_127 = arith.constant 0 : index
    %c32_128 = arith.constant 32 : index
    %522 = vector.load %arg5[%c8_126, %c0_127, %c32_128] : memref<16x8x64xf32, #tpu.memory_space<vmem>>, vector<1x8x32xf32>
    %523 = vector.shape_cast %522 : vector<1x8x32xf32> to vector<8x32xf32>
    %524 = vector.shape_cast %518 : vector<8x32xf32> to vector<1x8x32xf32>
    tpu.vector_store %arg5[%c8_126, %c0_127, %c32_128], %524 {strides = array<i32>} : memref<16x8x64xf32, #tpu.memory_space<vmem>>, vector<1x8x32xf32>,
    %c64_129 = arith.constant 64 : index
    %c0_130 = arith.constant 0 : index
    %525 = vector.load %arg6[%c64_129, %c0_130] : memref<128x256xf32, #tpu.memory_space<vmem>>, vector<8x128xf32>
    %c56_131 = arith.constant 56 : index
    %c128_132 = arith.constant 128 : index
    %526 = vector.load %arg6[%c56_131, %c128_132] : memref<128x256xf32, #tpu.memory_space<vmem>>, vector<8x128xf32>
    %527 = arith.truncf %490 : vector<8x32xf32> to vector<8x32xbf16>
    %cst_133 = arith.constant dense<0.000000e+00> : vector<8x128xf32>
    %528 = tpu.matmul %527, %7, %cst_133 {dimension_numbers = #tpu.dot_dimension_numbers<[1], [0], [0], [1], [0, 0, 1, 1], [], []>} : vector<8x32xbf16>, vector<32x128xbf16>, vector<8x128xf32> -> vector<8x128xf32>
    %529 = arith.addf %525, %528 : vector<8x128xf32>
    %530 = vector.extract_strided_slice %529 {offsets = [0, 0], sizes = [8, 32], strides = [1, 1]} : vector<8x128xf32> to vector<8x32xf32>
    %531 = arith.negf %530 : vector<8x32xf32>
    %532 = math.exp %531 : vector<8x32xf32>
    %cst_134 = arith.constant 1.000000e+00 : f32
    %533 = vector.broadcast %cst_134 : f32 to vector<8x32xf32>
    %534 = arith.addf %533, %532 : vector<8x32xf32>
    %535 = arith.divf %533, %534 : vector<8x32xf32>
    %536 = vector.extract_strided_slice %529 {offsets = [0, 32], sizes = [8, 32], strides = [1, 1]} : vector<8x128xf32> to vector<8x32xf32>
    %537 = arith.negf %536 : vector<8x32xf32>
    %538 = math.exp %537 : vector<8x32xf32>
    %cst_135 = arith.constant 1.000000e+00 : f32
    %539 = vector.broadcast %cst_135 : f32 to vector<8x32xf32>
    %540 = arith.addf %539, %538 : vector<8x32xf32>
    %541 = arith.divf %539, %540 : vector<8x32xf32>
    %542 = vector.extract_strided_slice %529 {offsets = [0, 64], sizes = [8, 32], strides = [1, 1]} : vector<8x128xf32> to vector<8x32xf32>
    %543 = math.tanh %542 : vector<8x32xf32>
    %544 = vector.extract_strided_slice %529 {offsets = [0, 96], sizes = [8, 32], strides = [1, 1]} : vector<8x128xf32> to vector<8x32xf32>
    %545 = arith.negf %544 : vector<8x32xf32>
    %546 = math.exp %545 : vector<8x32xf32>
    %cst_136 = arith.constant 1.000000e+00 : f32
    %547 = vector.broadcast %cst_136 : f32 to vector<8x32xf32>
    %548 = arith.addf %547, %546 : vector<8x32xf32>
    %549 = arith.divf %547, %548 : vector<8x32xf32>
    %550 = arith.mulf %541, %488 : vector<8x32xf32>
    %551 = arith.mulf %535, %543 : vector<8x32xf32>
    %552 = arith.addf %550, %551 : vector<8x32xf32>
    %553 = math.tanh %552 : vector<8x32xf32>
    %554 = arith.mulf %549, %553 : vector<8x32xf32>
    %555 = arith.truncf %518 : vector<8x32xf32> to vector<8x32xbf16>
    %cst_137 = arith.constant dense<0.000000e+00> : vector<8x128xf32>
    %556 = tpu.matmul %555, %8, %cst_137 {dimension_numbers = #tpu.dot_dimension_numbers<[1], [0], [0], [1], [0, 0, 1, 1], [], []>} : vector<8x32xbf16>, vector<32x128xbf16>, vector<8x128xf32> -> vector<8x128xf32>
    %557 = arith.addf %526, %556 : vector<8x128xf32>
    %558 = vector.extract_strided_slice %557 {offsets = [0, 0], sizes = [8, 32], strides = [1, 1]} : vector<8x128xf32> to vector<8x32xf32>
    %559 = arith.negf %558 : vector<8x32xf32>
    %560 = math.exp %559 : vector<8x32xf32>
    %cst_138 = arith.constant 1.000000e+00 : f32
    %561 = vector.broadcast %cst_138 : f32 to vector<8x32xf32>
    %562 = arith.addf %561, %560 : vector<8x32xf32>
    %563 = arith.divf %561, %562 : vector<8x32xf32>
    %564 = vector.extract_strided_slice %557 {offsets = [0, 32], sizes = [8, 32], strides = [1, 1]} : vector<8x128xf32> to vector<8x32xf32>
    %565 = arith.negf %564 : vector<8x32xf32>
    %566 = math.exp %565 : vector<8x32xf32>
    %cst_139 = arith.constant 1.000000e+00 : f32
    %567 = vector.broadcast %cst_139 : f32 to vector<8x32xf32>
    %568 = arith.addf %567, %566 : vector<8x32xf32>
    %569 = arith.divf %567, %568 : vector<8x32xf32>
    %570 = vector.extract_strided_slice %557 {offsets = [0, 64], sizes = [8, 32], strides = [1, 1]} : vector<8x128xf32> to vector<8x32xf32>
    %571 = math.tanh %570 : vector<8x32xf32>
    %572 = vector.extract_strided_slice %557 {offsets = [0, 96], sizes = [8, 32], strides = [1, 1]} : vector<8x128xf32> to vector<8x32xf32>
    %573 = arith.negf %572 : vector<8x32xf32>
    %574 = math.exp %573 : vector<8x32xf32>
    %cst_140 = arith.constant 1.000000e+00 : f32
    %575 = vector.broadcast %cst_140 : f32 to vector<8x32xf32>
    %576 = arith.addf %575, %574 : vector<8x32xf32>
    %577 = arith.divf %575, %576 : vector<8x32xf32>
    %578 = arith.mulf %569, %516 : vector<8x32xf32>
    %579 = arith.mulf %563, %571 : vector<8x32xf32>
    %580 = arith.addf %578, %579 : vector<8x32xf32>
    %581 = math.tanh %580 : vector<8x32xf32>
    %582 = arith.mulf %577, %581 : vector<8x32xf32>
    %c8_141 = arith.constant 8 : index
    %c0_142 = arith.constant 0 : index
    %c0_143 = arith.constant 0 : index
    %583 = vector.load %arg5[%c8_141, %c0_142, %c0_143] : memref<16x8x64xf32, #tpu.memory_space<vmem>>, vector<1x8x32xf32>
    %584 = vector.shape_cast %583 : vector<1x8x32xf32> to vector<8x32xf32>
    %585 = vector.shape_cast %554 : vector<8x32xf32> to vector<1x8x32xf32>
    tpu.vector_store %arg5[%c8_141, %c0_142, %c0_143], %585 {strides = array<i32>} : memref<16x8x64xf32, #tpu.memory_space<vmem>>, vector<1x8x32xf32>,
    %c7_144 = arith.constant 7 : index
    %c0_145 = arith.constant 0 : index
    %c32_146 = arith.constant 32 : index
    %586 = vector.load %arg5[%c7_144, %c0_145, %c32_146] : memref<16x8x64xf32, #tpu.memory_space<vmem>>, vector<1x8x32xf32>
    %587 = vector.shape_cast %586 : vector<1x8x32xf32> to vector<8x32xf32>
    %588 = vector.shape_cast %582 : vector<8x32xf32> to vector<1x8x32xf32>
    tpu.vector_store %arg5[%c7_144, %c0_145, %c32_146], %588 {strides = array<i32>} : memref<16x8x64xf32, #tpu.memory_space<vmem>>, vector<1x8x32xf32>,
    %c72_147 = arith.constant 72 : index
    %c0_148 = arith.constant 0 : index
    %589 = vector.load %arg6[%c72_147, %c0_148] : memref<128x256xf32, #tpu.memory_space<vmem>>, vector<8x128xf32>
    %c48_149 = arith.constant 48 : index
    %c128_150 = arith.constant 128 : index
    %590 = vector.load %arg6[%c48_149, %c128_150] : memref<128x256xf32, #tpu.memory_space<vmem>>, vector<8x128xf32>
    %591 = arith.truncf %554 : vector<8x32xf32> to vector<8x32xbf16>
    %cst_151 = arith.constant dense<0.000000e+00> : vector<8x128xf32>
    %592 = tpu.matmul %591, %7, %cst_151 {dimension_numbers = #tpu.dot_dimension_numbers<[1], [0], [0], [1], [0, 0, 1, 1], [], []>} : vector<8x32xbf16>, vector<32x128xbf16>, vector<8x128xf32> -> vector<8x128xf32>
    %593 = arith.addf %589, %592 : vector<8x128xf32>
    %594 = vector.extract_strided_slice %593 {offsets = [0, 0], sizes = [8, 32], strides = [1, 1]} : vector<8x128xf32> to vector<8x32xf32>
    %595 = arith.negf %594 : vector<8x32xf32>
    %596 = math.exp %595 : vector<8x32xf32>
    %cst_152 = arith.constant 1.000000e+00 : f32
    %597 = vector.broadcast %cst_152 : f32 to vector<8x32xf32>
    %598 = arith.addf %597, %596 : vector<8x32xf32>
    %599 = arith.divf %597, %598 : vector<8x32xf32>
    %600 = vector.extract_strided_slice %593 {offsets = [0, 32], sizes = [8, 32], strides = [1, 1]} : vector<8x128xf32> to vector<8x32xf32>
    %601 = arith.negf %600 : vector<8x32xf32>
    %602 = math.exp %601 : vector<8x32xf32>
    %cst_153 = arith.constant 1.000000e+00 : f32
    %603 = vector.broadcast %cst_153 : f32 to vector<8x32xf32>
    %604 = arith.addf %603, %602 : vector<8x32xf32>
    %605 = arith.divf %603, %604 : vector<8x32xf32>
    %606 = vector.extract_strided_slice %593 {offsets = [0, 64], sizes = [8, 32], strides = [1, 1]} : vector<8x128xf32> to vector<8x32xf32>
    %607 = math.tanh %606 : vector<8x32xf32>
    %608 = vector.extract_strided_slice %593 {offsets = [0, 96], sizes = [8, 32], strides = [1, 1]} : vector<8x128xf32> to vector<8x32xf32>
    %609 = arith.negf %608 : vector<8x32xf32>
    %610 = math.exp %609 : vector<8x32xf32>
    %cst_154 = arith.constant 1.000000e+00 : f32
    %611 = vector.broadcast %cst_154 : f32 to vector<8x32xf32>
    %612 = arith.addf %611, %610 : vector<8x32xf32>
    %613 = arith.divf %611, %612 : vector<8x32xf32>
    %614 = arith.mulf %605, %552 : vector<8x32xf32>
    %615 = arith.mulf %599, %607 : vector<8x32xf32>
    %616 = arith.addf %614, %615 : vector<8x32xf32>
    %617 = math.tanh %616 : vector<8x32xf32>
    %618 = arith.mulf %613, %617 : vector<8x32xf32>
    %619 = arith.truncf %582 : vector<8x32xf32> to vector<8x32xbf16>
    %cst_155 = arith.constant dense<0.000000e+00> : vector<8x128xf32>
    %620 = tpu.matmul %619, %8, %cst_155 {dimension_numbers = #tpu.dot_dimension_numbers<[1], [0], [0], [1], [0, 0, 1, 1], [], []>} : vector<8x32xbf16>, vector<32x128xbf16>, vector<8x128xf32> -> vector<8x128xf32>
    %621 = arith.addf %590, %620 : vector<8x128xf32>
    %622 = vector.extract_strided_slice %621 {offsets = [0, 0], sizes = [8, 32], strides = [1, 1]} : vector<8x128xf32> to vector<8x32xf32>
    %623 = arith.negf %622 : vector<8x32xf32>
    %624 = math.exp %623 : vector<8x32xf32>
    %cst_156 = arith.constant 1.000000e+00 : f32
    %625 = vector.broadcast %cst_156 : f32 to vector<8x32xf32>
    %626 = arith.addf %625, %624 : vector<8x32xf32>
    %627 = arith.divf %625, %626 : vector<8x32xf32>
    %628 = vector.extract_strided_slice %621 {offsets = [0, 32], sizes = [8, 32], strides = [1, 1]} : vector<8x128xf32> to vector<8x32xf32>
    %629 = arith.negf %628 : vector<8x32xf32>
    %630 = math.exp %629 : vector<8x32xf32>
    %cst_157 = arith.constant 1.000000e+00 : f32
    %631 = vector.broadcast %cst_157 : f32 to vector<8x32xf32>
    %632 = arith.addf %631, %630 : vector<8x32xf32>
    %633 = arith.divf %631, %632 : vector<8x32xf32>
    %634 = vector.extract_strided_slice %621 {offsets = [0, 64], sizes = [8, 32], strides = [1, 1]} : vector<8x128xf32> to vector<8x32xf32>
    %635 = math.tanh %634 : vector<8x32xf32>
    %636 = vector.extract_strided_slice %621 {offsets = [0, 96], sizes = [8, 32], strides = [1, 1]} : vector<8x128xf32> to vector<8x32xf32>
    %637 = arith.negf %636 : vector<8x32xf32>
    %638 = math.exp %637 : vector<8x32xf32>
    %cst_158 = arith.constant 1.000000e+00 : f32
    %639 = vector.broadcast %cst_158 : f32 to vector<8x32xf32>
    %640 = arith.addf %639, %638 : vector<8x32xf32>
    %641 = arith.divf %639, %640 : vector<8x32xf32>
    %642 = arith.mulf %633, %580 : vector<8x32xf32>
    %643 = arith.mulf %627, %635 : vector<8x32xf32>
    %644 = arith.addf %642, %643 : vector<8x32xf32>
    %645 = math.tanh %644 : vector<8x32xf32>
    %646 = arith.mulf %641, %645 : vector<8x32xf32>
    %c9_159 = arith.constant 9 : index
    %c0_160 = arith.constant 0 : index
    %c0_161 = arith.constant 0 : index
    %647 = vector.load %arg5[%c9_159, %c0_160, %c0_161] : memref<16x8x64xf32, #tpu.memory_space<vmem>>, vector<1x8x32xf32>
    %648 = vector.shape_cast %647 : vector<1x8x32xf32> to vector<8x32xf32>
    %649 = vector.shape_cast %618 : vector<8x32xf32> to vector<1x8x32xf32>
    tpu.vector_store %arg5[%c9_159, %c0_160, %c0_161], %649 {strides = array<i32>} : memref<16x8x64xf32, #tpu.memory_space<vmem>>, vector<1x8x32xf32>,
    %c6_162 = arith.constant 6 : index
    %c0_163 = arith.constant 0 : index
    %c32_164 = arith.constant 32 : index
    %650 = vector.load %arg5[%c6_162, %c0_163, %c32_164] : memref<16x8x64xf32, #tpu.memory_space<vmem>>, vector<1x8x32xf32>
    %651 = vector.shape_cast %650 : vector<1x8x32xf32> to vector<8x32xf32>
    %652 = vector.shape_cast %646 : vector<8x32xf32> to vector<1x8x32xf32>
    tpu.vector_store %arg5[%c6_162, %c0_163, %c32_164], %652 {strides = array<i32>} : memref<16x8x64xf32, #tpu.memory_space<vmem>>, vector<1x8x32xf32>,
    %c80_165 = arith.constant 80 : index
    %c0_166 = arith.constant 0 : index
    %653 = vector.load %arg6[%c80_165, %c0_166] : memref<128x256xf32, #tpu.memory_space<vmem>>, vector<8x128xf32>
    %c40_167 = arith.constant 40 : index
    %c128_168 = arith.constant 128 : index
    %654 = vector.load %arg6[%c40_167, %c128_168] : memref<128x256xf32, #tpu.memory_space<vmem>>, vector<8x128xf32>
    %655 = arith.truncf %618 : vector<8x32xf32> to vector<8x32xbf16>
    %cst_169 = arith.constant dense<0.000000e+00> : vector<8x128xf32>
    %656 = tpu.matmul %655, %7, %cst_169 {dimension_numbers = #tpu.dot_dimension_numbers<[1], [0], [0], [1], [0, 0, 1, 1], [], []>} : vector<8x32xbf16>, vector<32x128xbf16>, vector<8x128xf32> -> vector<8x128xf32>
    %657 = arith.addf %653, %656 : vector<8x128xf32>
    %658 = vector.extract_strided_slice %657 {offsets = [0, 0], sizes = [8, 32], strides = [1, 1]} : vector<8x128xf32> to vector<8x32xf32>
    %659 = arith.negf %658 : vector<8x32xf32>
    %660 = math.exp %659 : vector<8x32xf32>
    %cst_170 = arith.constant 1.000000e+00 : f32
    %661 = vector.broadcast %cst_170 : f32 to vector<8x32xf32>
    %662 = arith.addf %661, %660 : vector<8x32xf32>
    %663 = arith.divf %661, %662 : vector<8x32xf32>
    %664 = vector.extract_strided_slice %657 {offsets = [0, 32], sizes = [8, 32], strides = [1, 1]} : vector<8x128xf32> to vector<8x32xf32>
    %665 = arith.negf %664 : vector<8x32xf32>
    %666 = math.exp %665 : vector<8x32xf32>
    %cst_171 = arith.constant 1.000000e+00 : f32
    %667 = vector.broadcast %cst_171 : f32 to vector<8x32xf32>
    %668 = arith.addf %667, %666 : vector<8x32xf32>
    %669 = arith.divf %667, %668 : vector<8x32xf32>
    %670 = vector.extract_strided_slice %657 {offsets = [0, 64], sizes = [8, 32], strides = [1, 1]} : vector<8x128xf32> to vector<8x32xf32>
    %671 = math.tanh %670 : vector<8x32xf32>
    %672 = vector.extract_strided_slice %657 {offsets = [0, 96], sizes = [8, 32], strides = [1, 1]} : vector<8x128xf32> to vector<8x32xf32>
    %673 = arith.negf %672 : vector<8x32xf32>
    %674 = math.exp %673 : vector<8x32xf32>
    %cst_172 = arith.constant 1.000000e+00 : f32
    %675 = vector.broadcast %cst_172 : f32 to vector<8x32xf32>
    %676 = arith.addf %675, %674 : vector<8x32xf32>
    %677 = arith.divf %675, %676 : vector<8x32xf32>
    %678 = arith.mulf %669, %616 : vector<8x32xf32>
    %679 = arith.mulf %663, %671 : vector<8x32xf32>
    %680 = arith.addf %678, %679 : vector<8x32xf32>
    %681 = math.tanh %680 : vector<8x32xf32>
    %682 = arith.mulf %677, %681 : vector<8x32xf32>
    %683 = arith.truncf %646 : vector<8x32xf32> to vector<8x32xbf16>
    %cst_173 = arith.constant dense<0.000000e+00> : vector<8x128xf32>
    %684 = tpu.matmul %683, %8, %cst_173 {dimension_numbers = #tpu.dot_dimension_numbers<[1], [0], [0], [1], [0, 0, 1, 1], [], []>} : vector<8x32xbf16>, vector<32x128xbf16>, vector<8x128xf32> -> vector<8x128xf32>
    %685 = arith.addf %654, %684 : vector<8x128xf32>
    %686 = vector.extract_strided_slice %685 {offsets = [0, 0], sizes = [8, 32], strides = [1, 1]} : vector<8x128xf32> to vector<8x32xf32>
    %687 = arith.negf %686 : vector<8x32xf32>
    %688 = math.exp %687 : vector<8x32xf32>
    %cst_174 = arith.constant 1.000000e+00 : f32
    %689 = vector.broadcast %cst_174 : f32 to vector<8x32xf32>
    %690 = arith.addf %689, %688 : vector<8x32xf32>
    %691 = arith.divf %689, %690 : vector<8x32xf32>
    %692 = vector.extract_strided_slice %685 {offsets = [0, 32], sizes = [8, 32], strides = [1, 1]} : vector<8x128xf32> to vector<8x32xf32>
    %693 = arith.negf %692 : vector<8x32xf32>
    %694 = math.exp %693 : vector<8x32xf32>
    %cst_175 = arith.constant 1.000000e+00 : f32
    %695 = vector.broadcast %cst_175 : f32 to vector<8x32xf32>
    %696 = arith.addf %695, %694 : vector<8x32xf32>
    %697 = arith.divf %695, %696 : vector<8x32xf32>
    %698 = vector.extract_strided_slice %685 {offsets = [0, 64], sizes = [8, 32], strides = [1, 1]} : vector<8x128xf32> to vector<8x32xf32>
    %699 = math.tanh %698 : vector<8x32xf32>
    %700 = vector.extract_strided_slice %685 {offsets = [0, 96], sizes = [8, 32], strides = [1, 1]} : vector<8x128xf32> to vector<8x32xf32>
    %701 = arith.negf %700 : vector<8x32xf32>
    %702 = math.exp %701 : vector<8x32xf32>
    %cst_176 = arith.constant 1.000000e+00 : f32
    %703 = vector.broadcast %cst_176 : f32 to vector<8x32xf32>
    %704 = arith.addf %703, %702 : vector<8x32xf32>
    %705 = arith.divf %703, %704 : vector<8x32xf32>
    %706 = arith.mulf %697, %644 : vector<8x32xf32>
    %707 = arith.mulf %691, %699 : vector<8x32xf32>
    %708 = arith.addf %706, %707 : vector<8x32xf32>
    %709 = math.tanh %708 : vector<8x32xf32>
    %710 = arith.mulf %705, %709 : vector<8x32xf32>
    %c10_177 = arith.constant 10 : index
    %c0_178 = arith.constant 0 : index
    %c0_179 = arith.constant 0 : index
    %711 = vector.load %arg5[%c10_177, %c0_178, %c0_179] : memref<16x8x64xf32, #tpu.memory_space<vmem>>, vector<1x8x32xf32>
    %712 = vector.shape_cast %711 : vector<1x8x32xf32> to vector<8x32xf32>
    %713 = vector.shape_cast %682 : vector<8x32xf32> to vector<1x8x32xf32>
    tpu.vector_store %arg5[%c10_177, %c0_178, %c0_179], %713 {strides = array<i32>} : memref<16x8x64xf32, #tpu.memory_space<vmem>>, vector<1x8x32xf32>,
    %c5_180 = arith.constant 5 : index
    %c0_181 = arith.constant 0 : index
    %c32_182 = arith.constant 32 : index
    %714 = vector.load %arg5[%c5_180, %c0_181, %c32_182] : memref<16x8x64xf32, #tpu.memory_space<vmem>>, vector<1x8x32xf32>
    %715 = vector.shape_cast %714 : vector<1x8x32xf32> to vector<8x32xf32>
    %716 = vector.shape_cast %710 : vector<8x32xf32> to vector<1x8x32xf32>
    tpu.vector_store %arg5[%c5_180, %c0_181, %c32_182], %716 {strides = array<i32>} : memref<16x8x64xf32, #tpu.memory_space<vmem>>, vector<1x8x32xf32>,
    %c88_183 = arith.constant 88 : index
    %c0_184 = arith.constant 0 : index
    %717 = vector.load %arg6[%c88_183, %c0_184] : memref<128x256xf32, #tpu.memory_space<vmem>>, vector<8x128xf32>
    %c32_185 = arith.constant 32 : index
    %c128_186 = arith.constant 128 : index
    %718 = vector.load %arg6[%c32_185, %c128_186] : memref<128x256xf32, #tpu.memory_space<vmem>>, vector<8x128xf32>
    %719 = arith.truncf %682 : vector<8x32xf32> to vector<8x32xbf16>
    %cst_187 = arith.constant dense<0.000000e+00> : vector<8x128xf32>
    %720 = tpu.matmul %719, %7, %cst_187 {dimension_numbers = #tpu.dot_dimension_numbers<[1], [0], [0], [1], [0, 0, 1, 1], [], []>} : vector<8x32xbf16>, vector<32x128xbf16>, vector<8x128xf32> -> vector<8x128xf32>
    %721 = arith.addf %717, %720 : vector<8x128xf32>
    %722 = vector.extract_strided_slice %721 {offsets = [0, 0], sizes = [8, 32], strides = [1, 1]} : vector<8x128xf32> to vector<8x32xf32>
    %723 = arith.negf %722 : vector<8x32xf32>
    %724 = math.exp %723 : vector<8x32xf32>
    %cst_188 = arith.constant 1.000000e+00 : f32
    %725 = vector.broadcast %cst_188 : f32 to vector<8x32xf32>
    %726 = arith.addf %725, %724 : vector<8x32xf32>
    %727 = arith.divf %725, %726 : vector<8x32xf32>
    %728 = vector.extract_strided_slice %721 {offsets = [0, 32], sizes = [8, 32], strides = [1, 1]} : vector<8x128xf32> to vector<8x32xf32>
    %729 = arith.negf %728 : vector<8x32xf32>
    %730 = math.exp %729 : vector<8x32xf32>
    %cst_189 = arith.constant 1.000000e+00 : f32
    %731 = vector.broadcast %cst_189 : f32 to vector<8x32xf32>
    %732 = arith.addf %731, %730 : vector<8x32xf32>
    %733 = arith.divf %731, %732 : vector<8x32xf32>
    %734 = vector.extract_strided_slice %721 {offsets = [0, 64], sizes = [8, 32], strides = [1, 1]} : vector<8x128xf32> to vector<8x32xf32>
    %735 = math.tanh %734 : vector<8x32xf32>
    %736 = vector.extract_strided_slice %721 {offsets = [0, 96], sizes = [8, 32], strides = [1, 1]} : vector<8x128xf32> to vector<8x32xf32>
    %737 = arith.negf %736 : vector<8x32xf32>
    %738 = math.exp %737 : vector<8x32xf32>
    %cst_190 = arith.constant 1.000000e+00 : f32
    %739 = vector.broadcast %cst_190 : f32 to vector<8x32xf32>
    %740 = arith.addf %739, %738 : vector<8x32xf32>
    %741 = arith.divf %739, %740 : vector<8x32xf32>
    %742 = arith.mulf %733, %680 : vector<8x32xf32>
    %743 = arith.mulf %727, %735 : vector<8x32xf32>
    %744 = arith.addf %742, %743 : vector<8x32xf32>
    %745 = math.tanh %744 : vector<8x32xf32>
    %746 = arith.mulf %741, %745 : vector<8x32xf32>
    %747 = arith.truncf %710 : vector<8x32xf32> to vector<8x32xbf16>
    %cst_191 = arith.constant dense<0.000000e+00> : vector<8x128xf32>
    %748 = tpu.matmul %747, %8, %cst_191 {dimension_numbers = #tpu.dot_dimension_numbers<[1], [0], [0], [1], [0, 0, 1, 1], [], []>} : vector<8x32xbf16>, vector<32x128xbf16>, vector<8x128xf32> -> vector<8x128xf32>
    %749 = arith.addf %718, %748 : vector<8x128xf32>
    %750 = vector.extract_strided_slice %749 {offsets = [0, 0], sizes = [8, 32], strides = [1, 1]} : vector<8x128xf32> to vector<8x32xf32>
    %751 = arith.negf %750 : vector<8x32xf32>
    %752 = math.exp %751 : vector<8x32xf32>
    %cst_192 = arith.constant 1.000000e+00 : f32
    %753 = vector.broadcast %cst_192 : f32 to vector<8x32xf32>
    %754 = arith.addf %753, %752 : vector<8x32xf32>
    %755 = arith.divf %753, %754 : vector<8x32xf32>
    %756 = vector.extract_strided_slice %749 {offsets = [0, 32], sizes = [8, 32], strides = [1, 1]} : vector<8x128xf32> to vector<8x32xf32>
    %757 = arith.negf %756 : vector<8x32xf32>
    %758 = math.exp %757 : vector<8x32xf32>
    %cst_193 = arith.constant 1.000000e+00 : f32
    %759 = vector.broadcast %cst_193 : f32 to vector<8x32xf32>
    %760 = arith.addf %759, %758 : vector<8x32xf32>
    %761 = arith.divf %759, %760 : vector<8x32xf32>
    %762 = vector.extract_strided_slice %749 {offsets = [0, 64], sizes = [8, 32], strides = [1, 1]} : vector<8x128xf32> to vector<8x32xf32>
    %763 = math.tanh %762 : vector<8x32xf32>
    %764 = vector.extract_strided_slice %749 {offsets = [0, 96], sizes = [8, 32], strides = [1, 1]} : vector<8x128xf32> to vector<8x32xf32>
    %765 = arith.negf %764 : vector<8x32xf32>
    %766 = math.exp %765 : vector<8x32xf32>
    %cst_194 = arith.constant 1.000000e+00 : f32
    %767 = vector.broadcast %cst_194 : f32 to vector<8x32xf32>
    %768 = arith.addf %767, %766 : vector<8x32xf32>
    %769 = arith.divf %767, %768 : vector<8x32xf32>
    %770 = arith.mulf %761, %708 : vector<8x32xf32>
    %771 = arith.mulf %755, %763 : vector<8x32xf32>
    %772 = arith.addf %770, %771 : vector<8x32xf32>
    %773 = math.tanh %772 : vector<8x32xf32>
    %774 = arith.mulf %769, %773 : vector<8x32xf32>
    %c11_195 = arith.constant 11 : index
    %c0_196 = arith.constant 0 : index
    %c0_197 = arith.constant 0 : index
    %775 = vector.load %arg5[%c11_195, %c0_196, %c0_197] : memref<16x8x64xf32, #tpu.memory_space<vmem>>, vector<1x8x32xf32>
    %776 = vector.shape_cast %775 : vector<1x8x32xf32> to vector<8x32xf32>
    %777 = vector.shape_cast %746 : vector<8x32xf32> to vector<1x8x32xf32>
    tpu.vector_store %arg5[%c11_195, %c0_196, %c0_197], %777 {strides = array<i32>} : memref<16x8x64xf32, #tpu.memory_space<vmem>>, vector<1x8x32xf32>,
    %c4_198 = arith.constant 4 : index
    %c0_199 = arith.constant 0 : index
    %c32_200 = arith.constant 32 : index
    %778 = vector.load %arg5[%c4_198, %c0_199, %c32_200] : memref<16x8x64xf32, #tpu.memory_space<vmem>>, vector<1x8x32xf32>
    %779 = vector.shape_cast %778 : vector<1x8x32xf32> to vector<8x32xf32>
    %780 = vector.shape_cast %774 : vector<8x32xf32> to vector<1x8x32xf32>
    tpu.vector_store %arg5[%c4_198, %c0_199, %c32_200], %780 {strides = array<i32>} : memref<16x8x64xf32, #tpu.memory_space<vmem>>, vector<1x8x32xf32>,
    %c96_201 = arith.constant 96 : index
    %c0_202 = arith.constant 0 : index
    %781 = vector.load %arg6[%c96_201, %c0_202] : memref<128x256xf32, #tpu.memory_space<vmem>>, vector<8x128xf32>
    %c24_203 = arith.constant 24 : index
    %c128_204 = arith.constant 128 : index
    %782 = vector.load %arg6[%c24_203, %c128_204] : memref<128x256xf32, #tpu.memory_space<vmem>>, vector<8x128xf32>
    %783 = arith.truncf %746 : vector<8x32xf32> to vector<8x32xbf16>
    %cst_205 = arith.constant dense<0.000000e+00> : vector<8x128xf32>
    %784 = tpu.matmul %783, %7, %cst_205 {dimension_numbers = #tpu.dot_dimension_numbers<[1], [0], [0], [1], [0, 0, 1, 1], [], []>} : vector<8x32xbf16>, vector<32x128xbf16>, vector<8x128xf32> -> vector<8x128xf32>
    %785 = arith.addf %781, %784 : vector<8x128xf32>
    %786 = vector.extract_strided_slice %785 {offsets = [0, 0], sizes = [8, 32], strides = [1, 1]} : vector<8x128xf32> to vector<8x32xf32>
    %787 = arith.negf %786 : vector<8x32xf32>
    %788 = math.exp %787 : vector<8x32xf32>
    %cst_206 = arith.constant 1.000000e+00 : f32
    %789 = vector.broadcast %cst_206 : f32 to vector<8x32xf32>
    %790 = arith.addf %789, %788 : vector<8x32xf32>
    %791 = arith.divf %789, %790 : vector<8x32xf32>
    %792 = vector.extract_strided_slice %785 {offsets = [0, 32], sizes = [8, 32], strides = [1, 1]} : vector<8x128xf32> to vector<8x32xf32>
    %793 = arith.negf %792 : vector<8x32xf32>
    %794 = math.exp %793 : vector<8x32xf32>
    %cst_207 = arith.constant 1.000000e+00 : f32
    %795 = vector.broadcast %cst_207 : f32 to vector<8x32xf32>
    %796 = arith.addf %795, %794 : vector<8x32xf32>
    %797 = arith.divf %795, %796 : vector<8x32xf32>
    %798 = vector.extract_strided_slice %785 {offsets = [0, 64], sizes = [8, 32], strides = [1, 1]} : vector<8x128xf32> to vector<8x32xf32>
    %799 = math.tanh %798 : vector<8x32xf32>
    %800 = vector.extract_strided_slice %785 {offsets = [0, 96], sizes = [8, 32], strides = [1, 1]} : vector<8x128xf32> to vector<8x32xf32>
    %801 = arith.negf %800 : vector<8x32xf32>
    %802 = math.exp %801 : vector<8x32xf32>
    %cst_208 = arith.constant 1.000000e+00 : f32
    %803 = vector.broadcast %cst_208 : f32 to vector<8x32xf32>
    %804 = arith.addf %803, %802 : vector<8x32xf32>
    %805 = arith.divf %803, %804 : vector<8x32xf32>
    %806 = arith.mulf %797, %744 : vector<8x32xf32>
    %807 = arith.mulf %791, %799 : vector<8x32xf32>
    %808 = arith.addf %806, %807 : vector<8x32xf32>
    %809 = math.tanh %808 : vector<8x32xf32>
    %810 = arith.mulf %805, %809 : vector<8x32xf32>
    %811 = arith.truncf %774 : vector<8x32xf32> to vector<8x32xbf16>
    %cst_209 = arith.constant dense<0.000000e+00> : vector<8x128xf32>
    %812 = tpu.matmul %811, %8, %cst_209 {dimension_numbers = #tpu.dot_dimension_numbers<[1], [0], [0], [1], [0, 0, 1, 1], [], []>} : vector<8x32xbf16>, vector<32x128xbf16>, vector<8x128xf32> -> vector<8x128xf32>
    %813 = arith.addf %782, %812 : vector<8x128xf32>
    %814 = vector.extract_strided_slice %813 {offsets = [0, 0], sizes = [8, 32], strides = [1, 1]} : vector<8x128xf32> to vector<8x32xf32>
    %815 = arith.negf %814 : vector<8x32xf32>
    %816 = math.exp %815 : vector<8x32xf32>
    %cst_210 = arith.constant 1.000000e+00 : f32
    %817 = vector.broadcast %cst_210 : f32 to vector<8x32xf32>
    %818 = arith.addf %817, %816 : vector<8x32xf32>
    %819 = arith.divf %817, %818 : vector<8x32xf32>
    %820 = vector.extract_strided_slice %813 {offsets = [0, 32], sizes = [8, 32], strides = [1, 1]} : vector<8x128xf32> to vector<8x32xf32>
    %821 = arith.negf %820 : vector<8x32xf32>
    %822 = math.exp %821 : vector<8x32xf32>
    %cst_211 = arith.constant 1.000000e+00 : f32
    %823 = vector.broadcast %cst_211 : f32 to vector<8x32xf32>
    %824 = arith.addf %823, %822 : vector<8x32xf32>
    %825 = arith.divf %823, %824 : vector<8x32xf32>
    %826 = vector.extract_strided_slice %813 {offsets = [0, 64], sizes = [8, 32], strides = [1, 1]} : vector<8x128xf32> to vector<8x32xf32>
    %827 = math.tanh %826 : vector<8x32xf32>
    %828 = vector.extract_strided_slice %813 {offsets = [0, 96], sizes = [8, 32], strides = [1, 1]} : vector<8x128xf32> to vector<8x32xf32>
    %829 = arith.negf %828 : vector<8x32xf32>
    %830 = math.exp %829 : vector<8x32xf32>
    %cst_212 = arith.constant 1.000000e+00 : f32
    %831 = vector.broadcast %cst_212 : f32 to vector<8x32xf32>
    %832 = arith.addf %831, %830 : vector<8x32xf32>
    %833 = arith.divf %831, %832 : vector<8x32xf32>
    %834 = arith.mulf %825, %772 : vector<8x32xf32>
    %835 = arith.mulf %819, %827 : vector<8x32xf32>
    %836 = arith.addf %834, %835 : vector<8x32xf32>
    %837 = math.tanh %836 : vector<8x32xf32>
    %838 = arith.mulf %833, %837 : vector<8x32xf32>
    %c12_213 = arith.constant 12 : index
    %c0_214 = arith.constant 0 : index
    %c0_215 = arith.constant 0 : index
    %839 = vector.load %arg5[%c12_213, %c0_214, %c0_215] : memref<16x8x64xf32, #tpu.memory_space<vmem>>, vector<1x8x32xf32>
    %840 = vector.shape_cast %839 : vector<1x8x32xf32> to vector<8x32xf32>
    %841 = vector.shape_cast %810 : vector<8x32xf32> to vector<1x8x32xf32>
    tpu.vector_store %arg5[%c12_213, %c0_214, %c0_215], %841 {strides = array<i32>} : memref<16x8x64xf32, #tpu.memory_space<vmem>>, vector<1x8x32xf32>,
    %c3_216 = arith.constant 3 : index
    %c0_217 = arith.constant 0 : index
    %c32_218 = arith.constant 32 : index
    %842 = vector.load %arg5[%c3_216, %c0_217, %c32_218] : memref<16x8x64xf32, #tpu.memory_space<vmem>>, vector<1x8x32xf32>
    %843 = vector.shape_cast %842 : vector<1x8x32xf32> to vector<8x32xf32>
    %844 = vector.shape_cast %838 : vector<8x32xf32> to vector<1x8x32xf32>
    tpu.vector_store %arg5[%c3_216, %c0_217, %c32_218], %844 {strides = array<i32>} : memref<16x8x64xf32, #tpu.memory_space<vmem>>, vector<1x8x32xf32>,
    %c104_219 = arith.constant 104 : index
    %c0_220 = arith.constant 0 : index
    %845 = vector.load %arg6[%c104_219, %c0_220] : memref<128x256xf32, #tpu.memory_space<vmem>>, vector<8x128xf32>
    %c16_221 = arith.constant 16 : index
    %c128_222 = arith.constant 128 : index
    %846 = vector.load %arg6[%c16_221, %c128_222] : memref<128x256xf32, #tpu.memory_space<vmem>>, vector<8x128xf32>
    %847 = arith.truncf %810 : vector<8x32xf32> to vector<8x32xbf16>
    %cst_223 = arith.constant dense<0.000000e+00> : vector<8x128xf32>
    %848 = tpu.matmul %847, %7, %cst_223 {dimension_numbers = #tpu.dot_dimension_numbers<[1], [0], [0], [1], [0, 0, 1, 1], [], []>} : vector<8x32xbf16>, vector<32x128xbf16>, vector<8x128xf32> -> vector<8x128xf32>
    %849 = arith.addf %845, %848 : vector<8x128xf32>
    %850 = vector.extract_strided_slice %849 {offsets = [0, 0], sizes = [8, 32], strides = [1, 1]} : vector<8x128xf32> to vector<8x32xf32>
    %851 = arith.negf %850 : vector<8x32xf32>
    %852 = math.exp %851 : vector<8x32xf32>
    %cst_224 = arith.constant 1.000000e+00 : f32
    %853 = vector.broadcast %cst_224 : f32 to vector<8x32xf32>
    %854 = arith.addf %853, %852 : vector<8x32xf32>
    %855 = arith.divf %853, %854 : vector<8x32xf32>
    %856 = vector.extract_strided_slice %849 {offsets = [0, 32], sizes = [8, 32], strides = [1, 1]} : vector<8x128xf32> to vector<8x32xf32>
    %857 = arith.negf %856 : vector<8x32xf32>
    %858 = math.exp %857 : vector<8x32xf32>
    %cst_225 = arith.constant 1.000000e+00 : f32
    %859 = vector.broadcast %cst_225 : f32 to vector<8x32xf32>
    %860 = arith.addf %859, %858 : vector<8x32xf32>
    %861 = arith.divf %859, %860 : vector<8x32xf32>
    %862 = vector.extract_strided_slice %849 {offsets = [0, 64], sizes = [8, 32], strides = [1, 1]} : vector<8x128xf32> to vector<8x32xf32>
    %863 = math.tanh %862 : vector<8x32xf32>
    %864 = vector.extract_strided_slice %849 {offsets = [0, 96], sizes = [8, 32], strides = [1, 1]} : vector<8x128xf32> to vector<8x32xf32>
    %865 = arith.negf %864 : vector<8x32xf32>
    %866 = math.exp %865 : vector<8x32xf32>
    %cst_226 = arith.constant 1.000000e+00 : f32
    %867 = vector.broadcast %cst_226 : f32 to vector<8x32xf32>
    %868 = arith.addf %867, %866 : vector<8x32xf32>
    %869 = arith.divf %867, %868 : vector<8x32xf32>
    %870 = arith.mulf %861, %808 : vector<8x32xf32>
    %871 = arith.mulf %855, %863 : vector<8x32xf32>
    %872 = arith.addf %870, %871 : vector<8x32xf32>
    %873 = math.tanh %872 : vector<8x32xf32>
    %874 = arith.mulf %869, %873 : vector<8x32xf32>
    %875 = arith.truncf %838 : vector<8x32xf32> to vector<8x32xbf16>
    %cst_227 = arith.constant dense<0.000000e+00> : vector<8x128xf32>
    %876 = tpu.matmul %875, %8, %cst_227 {dimension_numbers = #tpu.dot_dimension_numbers<[1], [0], [0], [1], [0, 0, 1, 1], [], []>} : vector<8x32xbf16>, vector<32x128xbf16>, vector<8x128xf32> -> vector<8x128xf32>
    %877 = arith.addf %846, %876 : vector<8x128xf32>
    %878 = vector.extract_strided_slice %877 {offsets = [0, 0], sizes = [8, 32], strides = [1, 1]} : vector<8x128xf32> to vector<8x32xf32>
    %879 = arith.negf %878 : vector<8x32xf32>
    %880 = math.exp %879 : vector<8x32xf32>
    %cst_228 = arith.constant 1.000000e+00 : f32
    %881 = vector.broadcast %cst_228 : f32 to vector<8x32xf32>
    %882 = arith.addf %881, %880 : vector<8x32xf32>
    %883 = arith.divf %881, %882 : vector<8x32xf32>
    %884 = vector.extract_strided_slice %877 {offsets = [0, 32], sizes = [8, 32], strides = [1, 1]} : vector<8x128xf32> to vector<8x32xf32>
    %885 = arith.negf %884 : vector<8x32xf32>
    %886 = math.exp %885 : vector<8x32xf32>
    %cst_229 = arith.constant 1.000000e+00 : f32
    %887 = vector.broadcast %cst_229 : f32 to vector<8x32xf32>
    %888 = arith.addf %887, %886 : vector<8x32xf32>
    %889 = arith.divf %887, %888 : vector<8x32xf32>
    %890 = vector.extract_strided_slice %877 {offsets = [0, 64], sizes = [8, 32], strides = [1, 1]} : vector<8x128xf32> to vector<8x32xf32>
    %891 = math.tanh %890 : vector<8x32xf32>
    %892 = vector.extract_strided_slice %877 {offsets = [0, 96], sizes = [8, 32], strides = [1, 1]} : vector<8x128xf32> to vector<8x32xf32>
    %893 = arith.negf %892 : vector<8x32xf32>
    %894 = math.exp %893 : vector<8x32xf32>
    %cst_230 = arith.constant 1.000000e+00 : f32
    %895 = vector.broadcast %cst_230 : f32 to vector<8x32xf32>
    %896 = arith.addf %895, %894 : vector<8x32xf32>
    %897 = arith.divf %895, %896 : vector<8x32xf32>
    %898 = arith.mulf %889, %836 : vector<8x32xf32>
    %899 = arith.mulf %883, %891 : vector<8x32xf32>
    %900 = arith.addf %898, %899 : vector<8x32xf32>
    %901 = math.tanh %900 : vector<8x32xf32>
    %902 = arith.mulf %897, %901 : vector<8x32xf32>
    %c13_231 = arith.constant 13 : index
    %c0_232 = arith.constant 0 : index
    %c0_233 = arith.constant 0 : index
    %903 = vector.load %arg5[%c13_231, %c0_232, %c0_233] : memref<16x8x64xf32, #tpu.memory_space<vmem>>, vector<1x8x32xf32>
    %904 = vector.shape_cast %903 : vector<1x8x32xf32> to vector<8x32xf32>
    %905 = vector.shape_cast %874 : vector<8x32xf32> to vector<1x8x32xf32>
    tpu.vector_store %arg5[%c13_231, %c0_232, %c0_233], %905 {strides = array<i32>} : memref<16x8x64xf32, #tpu.memory_space<vmem>>, vector<1x8x32xf32>,
    %c2_234 = arith.constant 2 : index
    %c0_235 = arith.constant 0 : index
    %c32_236 = arith.constant 32 : index
    %906 = vector.load %arg5[%c2_234, %c0_235, %c32_236] : memref<16x8x64xf32, #tpu.memory_space<vmem>>, vector<1x8x32xf32>
    %907 = vector.shape_cast %906 : vector<1x8x32xf32> to vector<8x32xf32>
    %908 = vector.shape_cast %902 : vector<8x32xf32> to vector<1x8x32xf32>
    tpu.vector_store %arg5[%c2_234, %c0_235, %c32_236], %908 {strides = array<i32>} : memref<16x8x64xf32, #tpu.memory_space<vmem>>, vector<1x8x32xf32>,
    %c112_237 = arith.constant 112 : index
    %c0_238 = arith.constant 0 : index
    %909 = vector.load %arg6[%c112_237, %c0_238] : memref<128x256xf32, #tpu.memory_space<vmem>>, vector<8x128xf32>
    %c8_239 = arith.constant 8 : index
    %c128_240 = arith.constant 128 : index
    %910 = vector.load %arg6[%c8_239, %c128_240] : memref<128x256xf32, #tpu.memory_space<vmem>>, vector<8x128xf32>
    %911 = arith.truncf %874 : vector<8x32xf32> to vector<8x32xbf16>
    %cst_241 = arith.constant dense<0.000000e+00> : vector<8x128xf32>
    %912 = tpu.matmul %911, %7, %cst_241 {dimension_numbers = #tpu.dot_dimension_numbers<[1], [0], [0], [1], [0, 0, 1, 1], [], []>} : vector<8x32xbf16>, vector<32x128xbf16>, vector<8x128xf32> -> vector<8x128xf32>
    %913 = arith.addf %909, %912 : vector<8x128xf32>
    %914 = vector.extract_strided_slice %913 {offsets = [0, 0], sizes = [8, 32], strides = [1, 1]} : vector<8x128xf32> to vector<8x32xf32>
    %915 = arith.negf %914 : vector<8x32xf32>
    %916 = math.exp %915 : vector<8x32xf32>
    %cst_242 = arith.constant 1.000000e+00 : f32
    %917 = vector.broadcast %cst_242 : f32 to vector<8x32xf32>
    %918 = arith.addf %917, %916 : vector<8x32xf32>
    %919 = arith.divf %917, %918 : vector<8x32xf32>
    %920 = vector.extract_strided_slice %913 {offsets = [0, 32], sizes = [8, 32], strides = [1, 1]} : vector<8x128xf32> to vector<8x32xf32>
    %921 = arith.negf %920 : vector<8x32xf32>
    %922 = math.exp %921 : vector<8x32xf32>
    %cst_243 = arith.constant 1.000000e+00 : f32
    %923 = vector.broadcast %cst_243 : f32 to vector<8x32xf32>
    %924 = arith.addf %923, %922 : vector<8x32xf32>
    %925 = arith.divf %923, %924 : vector<8x32xf32>
    %926 = vector.extract_strided_slice %913 {offsets = [0, 64], sizes = [8, 32], strides = [1, 1]} : vector<8x128xf32> to vector<8x32xf32>
    %927 = math.tanh %926 : vector<8x32xf32>
    %928 = vector.extract_strided_slice %913 {offsets = [0, 96], sizes = [8, 32], strides = [1, 1]} : vector<8x128xf32> to vector<8x32xf32>
    %929 = arith.negf %928 : vector<8x32xf32>
    %930 = math.exp %929 : vector<8x32xf32>
    %cst_244 = arith.constant 1.000000e+00 : f32
    %931 = vector.broadcast %cst_244 : f32 to vector<8x32xf32>
    %932 = arith.addf %931, %930 : vector<8x32xf32>
    %933 = arith.divf %931, %932 : vector<8x32xf32>
    %934 = arith.mulf %925, %872 : vector<8x32xf32>
    %935 = arith.mulf %919, %927 : vector<8x32xf32>
    %936 = arith.addf %934, %935 : vector<8x32xf32>
    %937 = math.tanh %936 : vector<8x32xf32>
    %938 = arith.mulf %933, %937 : vector<8x32xf32>
    %939 = arith.truncf %902 : vector<8x32xf32> to vector<8x32xbf16>
    %cst_245 = arith.constant dense<0.000000e+00> : vector<8x128xf32>
    %940 = tpu.matmul %939, %8, %cst_245 {dimension_numbers = #tpu.dot_dimension_numbers<[1], [0], [0], [1], [0, 0, 1, 1], [], []>} : vector<8x32xbf16>, vector<32x128xbf16>, vector<8x128xf32> -> vector<8x128xf32>
    %941 = arith.addf %910, %940 : vector<8x128xf32>
    %942 = vector.extract_strided_slice %941 {offsets = [0, 0], sizes = [8, 32], strides = [1, 1]} : vector<8x128xf32> to vector<8x32xf32>
    %943 = arith.negf %942 : vector<8x32xf32>
    %944 = math.exp %943 : vector<8x32xf32>
    %cst_246 = arith.constant 1.000000e+00 : f32
    %945 = vector.broadcast %cst_246 : f32 to vector<8x32xf32>
    %946 = arith.addf %945, %944 : vector<8x32xf32>
    %947 = arith.divf %945, %946 : vector<8x32xf32>
    %948 = vector.extract_strided_slice %941 {offsets = [0, 32], sizes = [8, 32], strides = [1, 1]} : vector<8x128xf32> to vector<8x32xf32>
    %949 = arith.negf %948 : vector<8x32xf32>
    %950 = math.exp %949 : vector<8x32xf32>
    %cst_247 = arith.constant 1.000000e+00 : f32
    %951 = vector.broadcast %cst_247 : f32 to vector<8x32xf32>
    %952 = arith.addf %951, %950 : vector<8x32xf32>
    %953 = arith.divf %951, %952 : vector<8x32xf32>
    %954 = vector.extract_strided_slice %941 {offsets = [0, 64], sizes = [8, 32], strides = [1, 1]} : vector<8x128xf32> to vector<8x32xf32>
    %955 = math.tanh %954 : vector<8x32xf32>
    %956 = vector.extract_strided_slice %941 {offsets = [0, 96], sizes = [8, 32], strides = [1, 1]} : vector<8x128xf32> to vector<8x32xf32>
    %957 = arith.negf %956 : vector<8x32xf32>
    %958 = math.exp %957 : vector<8x32xf32>
    %cst_248 = arith.constant 1.000000e+00 : f32
    %959 = vector.broadcast %cst_248 : f32 to vector<8x32xf32>
    %960 = arith.addf %959, %958 : vector<8x32xf32>
    %961 = arith.divf %959, %960 : vector<8x32xf32>
    %962 = arith.mulf %953, %900 : vector<8x32xf32>
    %963 = arith.mulf %947, %955 : vector<8x32xf32>
    %964 = arith.addf %962, %963 : vector<8x32xf32>
    %965 = math.tanh %964 : vector<8x32xf32>
    %966 = arith.mulf %961, %965 : vector<8x32xf32>
    %c14_249 = arith.constant 14 : index
    %c0_250 = arith.constant 0 : index
    %c0_251 = arith.constant 0 : index
    %967 = vector.load %arg5[%c14_249, %c0_250, %c0_251] : memref<16x8x64xf32, #tpu.memory_space<vmem>>, vector<1x8x32xf32>
    %968 = vector.shape_cast %967 : vector<1x8x32xf32> to vector<8x32xf32>
    %969 = vector.shape_cast %938 : vector<8x32xf32> to vector<1x8x32xf32>
    tpu.vector_store %arg5[%c14_249, %c0_250, %c0_251], %969 {strides = array<i32>} : memref<16x8x64xf32, #tpu.memory_space<vmem>>, vector<1x8x32xf32>,
    %c1_252 = arith.constant 1 : index
    %c0_253 = arith.constant 0 : index
    %c32_254 = arith.constant 32 : index
    %970 = vector.load %arg5[%c1_252, %c0_253, %c32_254] : memref<16x8x64xf32, #tpu.memory_space<vmem>>, vector<1x8x32xf32>
    %971 = vector.shape_cast %970 : vector<1x8x32xf32> to vector<8x32xf32>
    %972 = vector.shape_cast %966 : vector<8x32xf32> to vector<1x8x32xf32>
    tpu.vector_store %arg5[%c1_252, %c0_253, %c32_254], %972 {strides = array<i32>} : memref<16x8x64xf32, #tpu.memory_space<vmem>>, vector<1x8x32xf32>,
    %c120_255 = arith.constant 120 : index
    %c0_256 = arith.constant 0 : index
    %973 = vector.load %arg6[%c120_255, %c0_256] : memref<128x256xf32, #tpu.memory_space<vmem>>, vector<8x128xf32>
    %c0_257 = arith.constant 0 : index
    %c128_258 = arith.constant 128 : index
    %974 = vector.load %arg6[%c0_257, %c128_258] : memref<128x256xf32, #tpu.memory_space<vmem>>, vector<8x128xf32>
    %975 = arith.truncf %938 : vector<8x32xf32> to vector<8x32xbf16>
    %cst_259 = arith.constant dense<0.000000e+00> : vector<8x128xf32>
    %976 = tpu.matmul %975, %7, %cst_259 {dimension_numbers = #tpu.dot_dimension_numbers<[1], [0], [0], [1], [0, 0, 1, 1], [], []>} : vector<8x32xbf16>, vector<32x128xbf16>, vector<8x128xf32> -> vector<8x128xf32>
    %977 = arith.addf %973, %976 : vector<8x128xf32>
    %978 = vector.extract_strided_slice %977 {offsets = [0, 0], sizes = [8, 32], strides = [1, 1]} : vector<8x128xf32> to vector<8x32xf32>
    %979 = arith.negf %978 : vector<8x32xf32>
    %980 = math.exp %979 : vector<8x32xf32>
    %cst_260 = arith.constant 1.000000e+00 : f32
    %981 = vector.broadcast %cst_260 : f32 to vector<8x32xf32>
    %982 = arith.addf %981, %980 : vector<8x32xf32>
    %983 = arith.divf %981, %982 : vector<8x32xf32>
    %984 = vector.extract_strided_slice %977 {offsets = [0, 32], sizes = [8, 32], strides = [1, 1]} : vector<8x128xf32> to vector<8x32xf32>
    %985 = arith.negf %984 : vector<8x32xf32>
    %986 = math.exp %985 : vector<8x32xf32>
    %cst_261 = arith.constant 1.000000e+00 : f32
    %987 = vector.broadcast %cst_261 : f32 to vector<8x32xf32>
    %988 = arith.addf %987, %986 : vector<8x32xf32>
    %989 = arith.divf %987, %988 : vector<8x32xf32>
    %990 = vector.extract_strided_slice %977 {offsets = [0, 64], sizes = [8, 32], strides = [1, 1]} : vector<8x128xf32> to vector<8x32xf32>
    %991 = math.tanh %990 : vector<8x32xf32>
    %992 = vector.extract_strided_slice %977 {offsets = [0, 96], sizes = [8, 32], strides = [1, 1]} : vector<8x128xf32> to vector<8x32xf32>
    %993 = arith.negf %992 : vector<8x32xf32>
    %994 = math.exp %993 : vector<8x32xf32>
    %cst_262 = arith.constant 1.000000e+00 : f32
    %995 = vector.broadcast %cst_262 : f32 to vector<8x32xf32>
    %996 = arith.addf %995, %994 : vector<8x32xf32>
    %997 = arith.divf %995, %996 : vector<8x32xf32>
    %998 = arith.mulf %989, %936 : vector<8x32xf32>
    %999 = arith.mulf %983, %991 : vector<8x32xf32>
    %1000 = arith.addf %998, %999 : vector<8x32xf32>
    %1001 = math.tanh %1000 : vector<8x32xf32>
    %1002 = arith.mulf %997, %1001 : vector<8x32xf32>
    %1003 = arith.truncf %966 : vector<8x32xf32> to vector<8x32xbf16>
    %cst_263 = arith.constant dense<0.000000e+00> : vector<8x128xf32>
    %1004 = tpu.matmul %1003, %8, %cst_263 {dimension_numbers = #tpu.dot_dimension_numbers<[1], [0], [0], [1], [0, 0, 1, 1], [], []>} : vector<8x32xbf16>, vector<32x128xbf16>, vector<8x128xf32> -> vector<8x128xf32>
    %1005 = arith.addf %974, %1004 : vector<8x128xf32>
    %1006 = vector.extract_strided_slice %1005 {offsets = [0, 0], sizes = [8, 32], strides = [1, 1]} : vector<8x128xf32> to vector<8x32xf32>
    %1007 = arith.negf %1006 : vector<8x32xf32>
    %1008 = math.exp %1007 : vector<8x32xf32>
    %cst_264 = arith.constant 1.000000e+00 : f32
    %1009 = vector.broadcast %cst_264 : f32 to vector<8x32xf32>
    %1010 = arith.addf %1009, %1008 : vector<8x32xf32>
    %1011 = arith.divf %1009, %1010 : vector<8x32xf32>
    %1012 = vector.extract_strided_slice %1005 {offsets = [0, 32], sizes = [8, 32], strides = [1, 1]} : vector<8x128xf32> to vector<8x32xf32>
    %1013 = arith.negf %1012 : vector<8x32xf32>
    %1014 = math.exp %1013 : vector<8x32xf32>
    %cst_265 = arith.constant 1.000000e+00 : f32
    %1015 = vector.broadcast %cst_265 : f32 to vector<8x32xf32>
    %1016 = arith.addf %1015, %1014 : vector<8x32xf32>
    %1017 = arith.divf %1015, %1016 : vector<8x32xf32>
    %1018 = vector.extract_strided_slice %1005 {offsets = [0, 64], sizes = [8, 32], strides = [1, 1]} : vector<8x128xf32> to vector<8x32xf32>
    %1019 = math.tanh %1018 : vector<8x32xf32>
    %1020 = vector.extract_strided_slice %1005 {offsets = [0, 96], sizes = [8, 32], strides = [1, 1]} : vector<8x128xf32> to vector<8x32xf32>
    %1021 = arith.negf %1020 : vector<8x32xf32>
    %1022 = math.exp %1021 : vector<8x32xf32>
    %cst_266 = arith.constant 1.000000e+00 : f32
    %1023 = vector.broadcast %cst_266 : f32 to vector<8x32xf32>
    %1024 = arith.addf %1023, %1022 : vector<8x32xf32>
    %1025 = arith.divf %1023, %1024 : vector<8x32xf32>
    %1026 = arith.mulf %1017, %964 : vector<8x32xf32>
    %1027 = arith.mulf %1011, %1019 : vector<8x32xf32>
    %1028 = arith.addf %1026, %1027 : vector<8x32xf32>
    %1029 = math.tanh %1028 : vector<8x32xf32>
    %1030 = arith.mulf %1025, %1029 : vector<8x32xf32>
    %c15_267 = arith.constant 15 : index
    %c0_268 = arith.constant 0 : index
    %c0_269 = arith.constant 0 : index
    %1031 = vector.load %arg5[%c15_267, %c0_268, %c0_269] : memref<16x8x64xf32, #tpu.memory_space<vmem>>, vector<1x8x32xf32>
    %1032 = vector.shape_cast %1031 : vector<1x8x32xf32> to vector<8x32xf32>
    %1033 = vector.shape_cast %1002 : vector<8x32xf32> to vector<1x8x32xf32>
    tpu.vector_store %arg5[%c15_267, %c0_268, %c0_269], %1033 {strides = array<i32>} : memref<16x8x64xf32, #tpu.memory_space<vmem>>, vector<1x8x32xf32>,
    %c0_270 = arith.constant 0 : index
    %c0_271 = arith.constant 0 : index
    %c32_272 = arith.constant 32 : index
    %1034 = vector.load %arg5[%c0_270, %c0_271, %c32_272] : memref<16x8x64xf32, #tpu.memory_space<vmem>>, vector<1x8x32xf32>
    %1035 = vector.shape_cast %1034 : vector<1x8x32xf32> to vector<8x32xf32>
    %1036 = vector.shape_cast %1030 : vector<8x32xf32> to vector<1x8x32xf32>
    tpu.vector_store %arg5[%c0_270, %c0_271, %c32_272], %1036 {strides = array<i32>} : memref<16x8x64xf32, #tpu.memory_space<vmem>>, vector<1x8x32xf32>,
    return
  }
}

</mosaic_0001>

<llo_original>
// kernel: blstm_forward.1
$region0: #{blstm_forward.1}
  #allocation0 [shape = 'u32[]', space=smem, size = 0x4, offset = 0x4, fixed_abs, tag = 'smem constant byte address 0x4 - core index']
  #allocation1 [shape = 'u32[144,128]{1,0:T(1,128)}', space=vmem, size = 0x12000, scoped, tag = 'internal scratch']
  #allocation2 [shape = 'f32[128,256]{1,0:T(8,128)}', space=vmem, size = 0x20000, scoped, tag = 'scratch operand']
  %s0 = inlined_call_operand.vmem [shape: bf16[128,16], index: 0, kind: input, shape index: {}]
  %s1 = inlined_call_operand.vmem [shape: bf16[16,256], index: 1, kind: input, shape index: {}]
  %s2 = inlined_call_operand.vmem [shape: f32[1,256], index: 2, kind: input, shape index: {}]
  %s3 = inlined_call_operand.vmem [shape: bf16[32,128], index: 3, kind: input, shape index: {}]
  %s4 = inlined_call_operand.vmem [shape: bf16[32,128], index: 4, kind: input, shape index: {}]
  %s5 = inlined_call_operand.vmem [shape: f32[16,8,64], index: 5, kind: output, shape index: {}]
  %s6 = sld [smem:[#allocation0]]
  $region30: #{blstm_forward.1} parent=0
    _
  %s8 = ssub.s32 1, %s6
  %s9 = scalar_select 0, %s8, %s6
  // Predicated region
  $region2: #{blstm_forward.1} parent=0 // pred_check
    _
  $region3: #{blstm_forward.1} parent=0 // pred_check_branch
    %11 = sbr.rel (0) target = $region5
  $region4: #{blstm_forward.1} parent=0 // pred_region
    _
  $region5: #{blstm_forward.1} parent=0 // pred_fallthru
    _
  // Predicated region
  $region6: #{blstm_forward.1} parent=0 // pred_check
    _
  $region7: #{blstm_forward.1} parent=0 // pred_check_branch
    %13 = sbr.rel (0) target = $region9
  $region8: #{blstm_forward.1} parent=0 // pred_region
    _
  $region9: #{blstm_forward.1} parent=0 // pred_fallthru
    _
  // Predicated region
  $region10: #{blstm_forward.1} parent=0 // pred_check
    _
  $region11: #{blstm_forward.1} parent=0 // pred_check_branch
    %15 = sbr.rel (0) target = $region13
  $region12: #{blstm_forward.1} parent=0 // pred_region
    _
  $region13: #{blstm_forward.1} parent=0 // pred_fallthru
    _
  // Predicated region
  $region14: #{blstm_forward.1} parent=0 // pred_check
    _
  $region15: #{blstm_forward.1} parent=0 // pred_check_branch
    %17 = sbr.rel (0) target = $region17
  $region16: #{blstm_forward.1} parent=0 // pred_region
    _
  $region17: #{blstm_forward.1} parent=0 // pred_fallthru
    _
  // Predicated region
  $region18: #{blstm_forward.1} parent=0 // pred_check
    _
  $region19: #{blstm_forward.1} parent=0 // pred_check_branch
    %19 = sbr.rel (0) target = $region21
  $region20: #{blstm_forward.1} parent=0 // pred_region
    _
  $region21: #{blstm_forward.1} parent=0 // pred_fallthru
    _
  %v21 = vld [vmem:[%s0] sm:$0xf]
  %v22 = vld [vmem:[%s0 + $0x4] sm:$0xf]
  %v23 = vld [vmem:[%s0 + $0x8] sm:$0xf]
  %v24 = vld [vmem:[%s0 + $0xc] sm:$0xf]
  %v25 = vld [vmem:[%s0 + $0x10] sm:$0xf]
  %v26 = vld [vmem:[%s0 + $0x14] sm:$0xf]
  %v27 = vld [vmem:[%s0 + $0x18] sm:$0xf]
  %v28 = vld [vmem:[%s0 + $0x1c] sm:$0xf]
  %v29 = vld [vmem:[%s0 + $0x20] sm:$0xf]
  %v30 = vld [vmem:[%s0 + $0x24] sm:$0xf]
  %v31 = vld [vmem:[%s0 + $0x28] sm:$0xf]
  %v32 = vld [vmem:[%s0 + $0x2c] sm:$0xf]
  %v33 = vld [vmem:[%s0 + $0x30] sm:$0xf]
  %v34 = vld [vmem:[%s0 + $0x34] sm:$0xf]
  %v35 = vld [vmem:[%s0 + $0x38] sm:$0xf]
  %v36 = vld [vmem:[%s0 + $0x3c] sm:$0xf]
  %v37 = vld [vmem:[%s1] sm:$0xff]
  %v38 = vld [vmem:[%s1 + $0x8] sm:$0xff]
  %v39 = vld [vmem:[%s2] sm:$0x3]
  %v41 = vlaneseq
  %v42 = vshrl.u32 %v41, 7
  %v43 = vsub.s32 0, %v42
  %v44 = vrot.slane %v39, %v43
  %v45 = vlaneseq
  %v46 = vshrl.u32 %v45, 7
  %v47 = vsub.s32 1, %v46
  %v48 = vrot.slane %v39, %v47
  %v67 = vunpack.c.l.b16 %v21
  %v68 = vunpack.c.l.b16 %v22
  %v69 = vunpack.c.l.b16 %v23
  %v70 = vunpack.c.l.b16 %v24
  %v71 = vunpack.c.l.b16 %v25
  %v72 = vunpack.c.l.b16 %v26
  %v73 = vunpack.c.l.b16 %v27
  %v74 = vunpack.c.l.b16 %v28
  %v75 = vunpack.c.l.b16 %v29
  %v76 = vunpack.c.l.b16 %v30
  %v77 = vunpack.c.l.b16 %v31
  %v78 = vunpack.c.l.b16 %v32
  %v79 = vunpack.c.l.b16 %v33
  %v80 = vunpack.c.l.b16 %v34
  %v81 = vunpack.c.l.b16 %v35
  %v82 = vunpack.c.l.b16 %v36
  %v83 = vpack.c.b16 %v68, %v67
  %v84 = vpack.c.b16 %v70, %v69
  %v85 = vpack.c.b16 %v72, %v71
  %v86 = vpack.c.b16 %v74, %v73
  %v87 = vpack.c.b16 %v76, %v75
  %v88 = vpack.c.b16 %v78, %v77
  %v89 = vpack.c.b16 %v80, %v79
  %v90 = vpack.c.b16 %v82, %v81
  %v93 = vunpack.c.l.b16 %v37
  %v94 = vunpack.c.h.b16 %v37
  %v95 = vunpack.c.l.b16 %v38
  %v96 = vunpack.c.h.b16 %v38
  %v97 = vpack.c.b16 %v95, %v93
  %v98 = vpack.c.b16 %v96, %v94
  %vm101 = vcmask 130048
  %v103 = vsel %vm101, %v83, 0
  %v106 = vsel %vm101, %v84, 0
  %v109 = vsel %vm101, %v85, 0
  %v112 = vsel %vm101, %v86, 0
  %v115 = vsel %vm101, %v87, 0
  %v118 = vsel %vm101, %v88, 0
  %v121 = vsel %vm101, %v89, 0
  %v124 = vsel %vm101, %v90, 0
  %126 = vmatprep.subr.bf16.mxu0 %v98
  %127 = vmatpush1.bf16.msra.mxu0 %v97
  %128 = vmatprep.subr.bf16.mxu0 0
  %129 = vmatpush1.bf16.msra.mxu0 0
  %130 = vmatprep.subr.bf16.mxu0 0
  %131 = vmatpush1.bf16.msra.mxu0 0
  %132 = vmatprep.subr.bf16.mxu0 0
  %133 = vmatpush1.bf16.msra.mxu0 0
  %134 = vmatprep.subr.bf16.mxu0 0
  %135 = vmatpush1.bf16.msra.mxu0 0
  %136 = vmatprep.subr.bf16.mxu0 0
  %137 = vmatpush1.bf16.msra.mxu0 0
  %138 = vmatprep.subr.bf16.mxu0 0
  %139 = vmatpush1.bf16.msra.mxu0 0
  %140 = vmatprep.subr.bf16.mxu0 0
  %141 = vmatpush1.bf16.msra.mxu0 0
  %142 = vmatprep.subr.bf16.mxu0 0
  %143 = vmatpush1.bf16.msra.mxu0 0
  %144 = vmatprep.subr.bf16.mxu0 0
  %145 = vmatpush1.bf16.msra.mxu0 0
  %146 = vmatprep.subr.bf16.mxu0 0
  %147 = vmatpush1.bf16.msra.mxu0 0
  %148 = vmatprep.subr.bf16.mxu0 0
  %149 = vmatpush1.bf16.msra.mxu0 0
  %150 = vmatprep.subr.bf16.mxu0 0
  %151 = vmatpush1.bf16.msra.mxu0 0
  %152 = vmatprep.subr.bf16.mxu0 0
  %153 = vmatpush1.bf16.msra.mxu0 0
  %154 = vmatprep.subr.bf16.mxu0 0
  %155 = vmatpush1.bf16.msra.mxu0 0
  %156 = vmatprep.subr.bf16.mxu0 0
  %157 = vmatpush1.bf16.msra.mxu0 0
  %158 = vmatprep.mubr.bf16.mxu0 0
  %159 = vmatmul.mubr.bf16.gmra.mrb[0].mxu0 %v103
  %v160 = vpop.f32.mrb[0].mxu0
  %v161 = vadd.f32 %v44, %v160
  %v162 = vpop.f32.mrb[0].mxu0
  %v163 = vadd.f32 %v48, %v162
  %v164 = vpop.f32.mrb[0].mxu0
  %v165 = vadd.f32 %v44, %v164
  %v166 = vpop.f32.mrb[0].mxu0
  %v167 = vadd.f32 %v48, %v166
  %168 = vmatprep.mubr.bf16.mxu0 0
  %169 = vmatmul.mubr.bf16.gmra.mrb[0].mxu0 %v106
  %v170 = vpop.f32.mrb[0].mxu0
  %v171 = vadd.f32 %v44, %v170
  %v172 = vpop.f32.mrb[0].mxu0
  %v173 = vadd.f32 %v48, %v172
  %v174 = vpop.f32.mrb[0].mxu0
  %v175 = vadd.f32 %v44, %v174
  %v176 = vpop.f32.mrb[0].mxu0
  %v177 = vadd.f32 %v48, %v176
  %178 = vmatprep.mubr.bf16.mxu0 0
  %179 = vmatmul.mubr.bf16.gmra.mrb[0].mxu0 %v109
  %v180 = vpop.f32.mrb[0].mxu0
  %v181 = vadd.f32 %v44, %v180
  %v182 = vpop.f32.mrb[0].mxu0
  %v183 = vadd.f32 %v48, %v182
  %v184 = vpop.f32.mrb[0].mxu0
  %v185 = vadd.f32 %v44, %v184
  %v186 = vpop.f32.mrb[0].mxu0
  %v187 = vadd.f32 %v48, %v186
  %188 = vmatprep.mubr.bf16.mxu0 0
  %189 = vmatmul.mubr.bf16.gmra.mrb[0].mxu0 %v112
  %v190 = vpop.f32.mrb[0].mxu0
  %v191 = vadd.f32 %v44, %v190
  %v192 = vpop.f32.mrb[0].mxu0
  %v193 = vadd.f32 %v48, %v192
  %v194 = vpop.f32.mrb[0].mxu0
  %v195 = vadd.f32 %v44, %v194
  %v196 = vpop.f32.mrb[0].mxu0
  %v197 = vadd.f32 %v48, %v196
  %198 = vmatprep.mubr.bf16.mxu0 0
  %199 = vmatmul.mubr.bf16.gmra.mrb[0].mxu0 %v115
  %v200 = vpop.f32.mrb[0].mxu0
  %v201 = vadd.f32 %v44, %v200
  %v202 = vpop.f32.mrb[0].mxu0
  %v203 = vadd.f32 %v48, %v202
  %v204 = vpop.f32.mrb[0].mxu0
  %v205 = vadd.f32 %v44, %v204
  %v206 = vpop.f32.mrb[0].mxu0
  %v207 = vadd.f32 %v48, %v206
  %208 = vmatprep.mubr.bf16.mxu0 0
  %209 = vmatmul.mubr.bf16.gmra.mrb[0].mxu0 %v118
  %v210 = vpop.f32.mrb[0].mxu0
  %v211 = vadd.f32 %v44, %v210
  %v212 = vpop.f32.mrb[0].mxu0
  %v213 = vadd.f32 %v48, %v212
  %v214 = vpop.f32.mrb[0].mxu0
  %v215 = vadd.f32 %v44, %v214
  %v216 = vpop.f32.mrb[0].mxu0
  %v217 = vadd.f32 %v48, %v216
  %218 = vmatprep.mubr.bf16.mxu0 0
  %219 = vmatmul.mubr.bf16.gmra.mrb[0].mxu0 %v121
  %v220 = vpop.f32.mrb[0].mxu0
  %v221 = vadd.f32 %v44, %v220
  %v222 = vpop.f32.mrb[0].mxu0
  %v223 = vadd.f32 %v48, %v222
  %v224 = vpop.f32.mrb[0].mxu0
  %v225 = vadd.f32 %v44, %v224
  %v226 = vpop.f32.mrb[0].mxu0
  %v227 = vadd.f32 %v48, %v226
  %228 = vmatprep.mubr.bf16.mxu0 0
  %229 = vmatmul.mubr.bf16.gmra.mrb[0].mxu0 %v124
  %v230 = vpop.f32.mrb[0].mxu0
  %v231 = vadd.f32 %v44, %v230
  %v232 = vpop.f32.mrb[0].mxu0
  %v233 = vadd.f32 %v48, %v232
  %v234 = vpop.f32.mrb[0].mxu0
  %v235 = vadd.f32 %v44, %v234
  %v236 = vpop.f32.mrb[0].mxu0
  %v237 = vadd.f32 %v48, %v236
  %238 = vdwg.mxu0
  %239 = vst [vmem:[#allocation2] sm:$0xff] %v161
  %240 = vst [vmem:[#allocation2 + $0x8] sm:$0xff] %v163
  %241 = vst [vmem:[#allocation2 + $0x10] sm:$0xff] %v165
  %242 = vst [vmem:[#allocation2 + $0x18] sm:$0xff] %v167
  %243 = vst [vmem:[#allocation2 + $0x20] sm:$0xff] %v171
  %244 = vst [vmem:[#allocation2 + $0x28] sm:$0xff] %v173
  %245 = vst [vmem:[#allocation2 + $0x30] sm:$0xff] %v175
  %246 = vst [vmem:[#allocation2 + $0x38] sm:$0xff] %v177
  %247 = vst [vmem:[#allocation2 + $0x40] sm:$0xff] %v181
  %248 = vst [vmem:[#allocation2 + $0x48] sm:$0xff] %v183
  %249 = vst [vmem:[#allocation2 + $0x50] sm:$0xff] %v185
  %250 = vst [vmem:[#allocation2 + $0x58] sm:$0xff] %v187
  %251 = vst [vmem:[#allocation2 + $0x60] sm:$0xff] %v191
  %252 = vst [vmem:[#allocation2 + $0x68] sm:$0xff] %v193
  %253 = vst [vmem:[#allocation2 + $0x70] sm:$0xff] %v195
  %254 = vst [vmem:[#allocation2 + $0x78] sm:$0xff] %v197
  %255 = vst [vmem:[#allocation2 + $0x80] sm:$0xff] %v201
  %256 = vst [vmem:[#allocation2 + $0x88] sm:$0xff] %v203
  %257 = vst [vmem:[#allocation2 + $0x90] sm:$0xff] %v205
  %258 = vst [vmem:[#allocation2 + $0x98] sm:$0xff] %v207
  %259 = vst [vmem:[#allocation2 + $0xa0] sm:$0xff] %v211
  %260 = vst [vmem:[#allocation2 + $0xa8] sm:$0xff] %v213
  %261 = vst [vmem:[#allocation2 + $0xb0] sm:$0xff] %v215
  %262 = vst [vmem:[#allocation2 + $0xb8] sm:$0xff] %v217
  %263 = vst [vmem:[#allocation2 + $0xc0] sm:$0xff] %v221
  %264 = vst [vmem:[#allocation2 + $0xc8] sm:$0xff] %v223
  %265 = vst [vmem:[#allocation2 + $0xd0] sm:$0xff] %v225
  %266 = vst [vmem:[#allocation2 + $0xd8] sm:$0xff] %v227
  %267 = vst [vmem:[#allocation2 + $0xe0] sm:$0xff] %v231
  %268 = vst [vmem:[#allocation2 + $0xe8] sm:$0xff] %v233
  %269 = vst [vmem:[#allocation2 + $0xf0] sm:$0xff] %v235
  %270 = vst [vmem:[#allocation2 + $0xf8] sm:$0xff] %v237
  %v271 = vld [vmem:[%s3] sm:$0xf]
  %v272 = vld [vmem:[%s3 + $0x4] sm:$0xf]
  %v273 = vld [vmem:[%s3 + $0x8] sm:$0xf]
  %v274 = vld [vmem:[%s3 + $0xc] sm:$0xf]
  %v275 = vld [vmem:[%s4] sm:$0xf]
  %v276 = vld [vmem:[%s4 + $0x4] sm:$0xf]
  %v277 = vld [vmem:[%s4 + $0x8] sm:$0xf]
  %v278 = vld [vmem:[%s4 + $0xc] sm:$0xf]
  %v279 = vld [vmem:[#allocation2] sm:$0xff]
  %v280 = vld [vmem:[#allocation2 + $0xf8] sm:$0xff]
  %v285 = vunpack.c.l.b16 %v271
  %v286 = vunpack.c.l.b16 %v272
  %v287 = vunpack.c.l.b16 %v273
  %v288 = vunpack.c.l.b16 %v274
  %v289 = vpack.c.b16 %v286, %v285
  %v290 = vpack.c.b16 %v288, %v287
  %vm293 = vcmask 261120
  %v295 = vsel %vm293, 0, 0
  %297 = vmatprep.subr.bf16.mxu0 0
  %298 = vmatpush1.bf16.msra.mxu0 %v289
  %299 = vmatprep.subr.bf16.mxu0 0
  %300 = vmatpush1.bf16.msra.mxu0 %v290
  %301 = vmatprep.subr.bf16.mxu0 0
  %302 = vmatpush1.bf16.msra.mxu0 0
  %303 = vmatprep.subr.bf16.mxu0 0
  %304 = vmatpush1.bf16.msra.mxu0 0
  %305 = vmatprep.subr.bf16.mxu0 0
  %306 = vmatpush1.bf16.msra.mxu0 0
  %307 = vmatprep.subr.bf16.mxu0 0
  %308 = vmatpush1.bf16.msra.mxu0 0
  %309 = vmatprep.subr.bf16.mxu0 0
  %310 = vmatpush1.bf16.msra.mxu0 0
  %311 = vmatprep.subr.bf16.mxu0 0
  %312 = vmatpush1.bf16.msra.mxu0 0
  %313 = vmatprep.subr.bf16.mxu0 0
  %314 = vmatpush1.bf16.msra.mxu0 0
  %315 = vmatprep.subr.bf16.mxu0 0
  %316 = vmatpush1.bf16.msra.mxu0 0
  %317 = vmatprep.subr.bf16.mxu0 0
  %318 = vmatpush1.bf16.msra.mxu0 0
  %319 = vmatprep.subr.bf16.mxu0 0
  %320 = vmatpush1.bf16.msra.mxu0 0
  %321 = vmatprep.subr.bf16.mxu0 0
  %322 = vmatpush1.bf16.msra.mxu0 0
  %323 = vmatprep.subr.bf16.mxu0 0
  %324 = vmatpush1.bf16.msra.mxu0 0
  %325 = vmatprep.subr.bf16.mxu0 0
  %326 = vmatpush1.bf16.msra.mxu0 0
  %327 = vmatprep.subr.bf16.mxu0 0
  %328 = vmatpush1.bf16.msra.mxu0 0
  %329 = vmatprep.mubr.bf16.mxu0 0
  %330 = vmatmul.mubr.bf16.gmra.mrb[0].mxu0 %v295
  %v331 = vpop.f32.mrb[0].mxu0
  %v332 = vadd.f32 0.0, %v331
  %v333 = vpop.f32.mrb[0].mxu0
  %v334 = vpop.f32.mrb[0].mxu0
  %v335 = vpop.f32.mrb[0].mxu0
  %336 = vdwg.mxu0
  %v337 = vadd.f32 %v279, %v332
  %v338 = vxor.u32 %v337, 2147483648
  %v339 = vmul.f32 %v338, 1.442695
  %v340 = vpow.pop %v339
  %v341 = vadd.f32 %v340, 1.0
  %v342 = vrcp.pop %v341
  %v343 = vmul.f32 1.0, %v342
  %v344 = vtanh.pop %v337
  %v345 = vmul.f32 %v343, 0.0
  %347 = vrot.lane.b32.xlu0 %v344, 64
  %v348 = vpop.permute.xlu0 %347
  %v350 = vmul.f32 %v343, %v348
  %352 = vrot.lane.b32.xlu0 %v350, 32
  %v353 = vpop.permute.xlu0 %352
  %v355 = vadd.f32 %v345, %v353
  %v356 = vtanh.pop %v355
  %358 = vrot.lane.b32.xlu0 %v356, 64
  %v359 = vpop.permute.xlu0 %358
  %v361 = vmul.f32 %v343, %v359
  %v366 = vunpack.c.l.b16 %v275
  %v367 = vunpack.c.l.b16 %v276
  %v368 = vunpack.c.l.b16 %v277
  %v369 = vunpack.c.l.b16 %v278
  %v370 = vpack.c.b16 %v367, %v366
  %v371 = vpack.c.b16 %v369, %v368
  %374 = vmatprep.subr.bf16.mxu0 0
  %375 = vmatpush1.bf16.msra.mxu0 %v370
  %376 = vmatprep.subr.bf16.mxu0 0
  %377 = vmatpush1.bf16.msra.mxu0 %v371
  %378 = vmatprep.subr.bf16.mxu0 0
  %379 = vmatpush1.bf16.msra.mxu0 0
  %380 = vmatprep.subr.bf16.mxu0 0
  %381 = vmatpush1.bf16.msra.mxu0 0
  %382 = vmatprep.subr.bf16.mxu0 0
  %383 = vmatpush1.bf16.msra.mxu0 0
  %384 = vmatprep.subr.bf16.mxu0 0
  %385 = vmatpush1.bf16.msra.mxu0 0
  %386 = vmatprep.subr.bf16.mxu0 0
  %387 = vmatpush1.bf16.msra.mxu0 0
  %388 = vmatprep.subr.bf16.mxu0 0
  %389 = vmatpush1.bf16.msra.mxu0 0
  %390 = vmatprep.subr.bf16.mxu0 0
  %391 = vmatpush1.bf16.msra.mxu0 0
  %392 = vmatprep.subr.bf16.mxu0 0
  %393 = vmatpush1.bf16.msra.mxu0 0
  %394 = vmatprep.subr.bf16.mxu0 0
  %395 = vmatpush1.bf16.msra.mxu0 0
  %396 = vmatprep.subr.bf16.mxu0 0
  %397 = vmatpush1.bf16.msra.mxu0 0
  %398 = vmatprep.subr.bf16.mxu0 0
  %399 = vmatpush1.bf16.msra.mxu0 0
  %400 = vmatprep.subr.bf16.mxu0 0
  %401 = vmatpush1.bf16.msra.mxu0 0
  %402 = vmatprep.subr.bf16.mxu0 0
  %403 = vmatpush1.bf16.msra.mxu0 0
  %404 = vmatprep.subr.bf16.mxu0 0
  %405 = vmatpush1.bf16.msra.mxu0 0
  %406 = vmatprep.mubr.bf16.mxu0 0
  %407 = vmatmul.mubr.bf16.gmra.mrb[0].mxu0 %v295
  %v408 = vpop.f32.mrb[0].mxu0
  %v409 = vadd.f32 0.0, %v408
  %v410 = vpop.f32.mrb[0].mxu0
  %v411 = vpop.f32.mrb[0].mxu0
  %v412 = vpop.f32.mrb[0].mxu0
  %413 = vdwg.mxu0
  %v414 = vadd.f32 %v280, %v409
  %v415 = vxor.u32 %v414, 2147483648
  %v416 = vmul.f32 %v415, 1.442695
  %v417 = vpow.pop %v416
  %v418 = vadd.f32 %v417, 1.0
  %v419 = vrcp.pop %v418
  %v420 = vmul.f32 1.0, %v419
  %v421 = vtanh.pop %v414
  %v422 = vmul.f32 %v420, 0.0
  %424 = vrot.lane.b32.xlu0 %v421, 64
  %v425 = vpop.permute.xlu0 %424
  %v427 = vmul.f32 %v420, %v425
  %429 = vrot.lane.b32.xlu0 %v427, 32
  %v430 = vpop.permute.xlu0 %429
  %v432 = vadd.f32 %v422, %v430
  %v433 = vtanh.pop %v432
  %435 = vrot.lane.b32.xlu0 %v433, 64
  %v436 = vpop.permute.xlu0 %435
  %v438 = vmul.f32 %v420, %v436
  %440 = vrot.lane.b32.xlu0 %v361, 32
  %v441 = vpop.permute.xlu0 %440
  %443 = vst.msk [vmem:[%s5] sm:$0xff] %vm293, %v441
  %445 = vrot.lane.b32.xlu0 %v438, 64
  %v446 = vpop.permute.xlu0 %445
  %s448 = scalar_lea.vmem %s5, 120
  %vm449 = vcmask 523520
  %450 = vst.msk [vmem:[%s448] sm:$0xff] %vm449, %v446
  %v451 = vld [vmem:[#allocation2 + $0x10] sm:$0xff]
  %v452 = vld [vmem:[#allocation2 + $0xe8] sm:$0xff]
  %v453 = vpack.c.bf16 %v361, %v361
  %455 = vrot.lane.b32.xlu0 %v453, 32
  %v456 = vpop.permute.xlu0 %455
  %v458 = vsel %vm293, %v456, 0
  %460 = vmatprep.subr.bf16.mxu0 0
  %461 = vmatpush1.bf16.msra.mxu0 %v289
  %462 = vmatprep.subr.bf16.mxu0 0
  %463 = vmatpush1.bf16.msra.mxu0 %v290
  %464 = vmatprep.subr.bf16.mxu0 0
  %465 = vmatpush1.bf16.msra.mxu0 0
  %466 = vmatprep.subr.bf16.mxu0 0
  %467 = vmatpush1.bf16.msra.mxu0 0
  %468 = vmatprep.subr.bf16.mxu0 0
  %469 = vmatpush1.bf16.msra.mxu0 0
  %470 = vmatprep.subr.bf16.mxu0 0
  %471 = vmatpush1.bf16.msra.mxu0 0
  %472 = vmatprep.subr.bf16.mxu0 0
  %473 = vmatpush1.bf16.msra.mxu0 0
  %474 = vmatprep.subr.bf16.mxu0 0
  %475 = vmatpush1.bf16.msra.mxu0 0
  %476 = vmatprep.subr.bf16.mxu0 0
  %477 = vmatpush1.bf16.msra.mxu0 0
  %478 = vmatprep.subr.bf16.mxu0 0
  %479 = vmatpush1.bf16.msra.mxu0 0
  %480 = vmatprep.subr.bf16.mxu0 0
  %481 = vmatpush1.bf16.msra.mxu0 0
  %482 = vmatprep.subr.bf16.mxu0 0
  %483 = vmatpush1.bf16.msra.mxu0 0
  %484 = vmatprep.subr.bf16.mxu0 0
  %485 = vmatpush1.bf16.msra.mxu0 0
  %486 = vmatprep.subr.bf16.mxu0 0
  %487 = vmatpush1.bf16.msra.mxu0 0
  %488 = vmatprep.subr.bf16.mxu0 0
  %489 = vmatpush1.bf16.msra.mxu0 0
  %490 = vmatprep.subr.bf16.mxu0 0
  %491 = vmatpush1.bf16.msra.mxu0 0
  %492 = vmatprep.mubr.bf16.mxu0 0
  %493 = vmatmul.mubr.bf16.gmra.mrb[0].mxu0 %v458
  %v494 = vpop.f32.mrb[0].mxu0
  %v495 = vadd.f32 0.0, %v494
  %v496 = vpop.f32.mrb[0].mxu0
  %v497 = vpop.f32.mrb[0].mxu0
  %v498 = vpop.f32.mrb[0].mxu0
  %499 = vdwg.mxu0
  %v500 = vadd.f32 %v451, %v495
  %v501 = vxor.u32 %v500, 2147483648
  %v502 = vmul.f32 %v501, 1.442695
  %v503 = vpow.pop %v502
  %v504 = vadd.f32 %v503, 1.0
  %v505 = vrcp.pop %v504
  %v506 = vmul.f32 1.0, %v505
  %v507 = vtanh.pop %v500
  %v508 = vmul.f32 %v506, %v355
  %510 = vrot.lane.b32.xlu0 %v507, 64
  %v511 = vpop.permute.xlu0 %510
  %v513 = vmul.f32 %v506, %v511
  %515 = vrot.lane.b32.xlu0 %v513, 32
  %v516 = vpop.permute.xlu0 %515
  %v518 = vadd.f32 %v508, %v516
  %v519 = vtanh.pop %v518
  %521 = vrot.lane.b32.xlu0 %v519, 64
  %v522 = vpop.permute.xlu0 %521
  %v524 = vmul.f32 %v506, %v522
  %v525 = vpack.c.bf16 %v438, %v438
  %527 = vrot.lane.b32.xlu0 %v525, 32
  %v528 = vpop.permute.xlu0 %527
  %v530 = vsel %vm293, %v528, 0
  %532 = vmatprep.subr.bf16.mxu0 0
  %533 = vmatpush1.bf16.msra.mxu0 %v370
  %534 = vmatprep.subr.bf16.mxu0 0
  %535 = vmatpush1.bf16.msra.mxu0 %v371
  %536 = vmatprep.subr.bf16.mxu0 0
  %537 = vmatpush1.bf16.msra.mxu0 0
  %538 = vmatprep.subr.bf16.mxu0 0
  %539 = vmatpush1.bf16.msra.mxu0 0
  %540 = vmatprep.subr.bf16.mxu0 0
  %541 = vmatpush1.bf16.msra.mxu0 0
  %542 = vmatprep.subr.bf16.mxu0 0
  %543 = vmatpush1.bf16.msra.mxu0 0
  %544 = vmatprep.subr.bf16.mxu0 0
  %545 = vmatpush1.bf16.msra.mxu0 0
  %546 = vmatprep.subr.bf16.mxu0 0
  %547 = vmatpush1.bf16.msra.mxu0 0
  %548 = vmatprep.subr.bf16.mxu0 0
  %549 = vmatpush1.bf16.msra.mxu0 0
  %550 = vmatprep.subr.bf16.mxu0 0
  %551 = vmatpush1.bf16.msra.mxu0 0
  %552 = vmatprep.subr.bf16.mxu0 0
  %553 = vmatpush1.bf16.msra.mxu0 0
  %554 = vmatprep.subr.bf16.mxu0 0
  %555 = vmatpush1.bf16.msra.mxu0 0
  %556 = vmatprep.subr.bf16.mxu0 0
  %557 = vmatpush1.bf16.msra.mxu0 0
  %558 = vmatprep.subr.bf16.mxu0 0
  %559 = vmatpush1.bf16.msra.mxu0 0
  %560 = vmatprep.subr.bf16.mxu0 0
  %561 = vmatpush1.bf16.msra.mxu0 0
  %562 = vmatprep.subr.bf16.mxu0 0
  %563 = vmatpush1.bf16.msra.mxu0 0
  %564 = vmatprep.mubr.bf16.mxu0 0
  %565 = vmatmul.mubr.bf16.gmra.mrb[0].mxu0 %v530
  %v566 = vpop.f32.mrb[0].mxu0
  %v567 = vadd.f32 0.0, %v566
  %v568 = vpop.f32.mrb[0].mxu0
  %v569 = vpop.f32.mrb[0].mxu0
  %v570 = vpop.f32.mrb[0].mxu0
  %571 = vdwg.mxu0
  %v572 = vadd.f32 %v452, %v567
  %v573 = vxor.u32 %v572, 2147483648
  %v574 = vmul.f32 %v573, 1.442695
  %v575 = vpow.pop %v574
  %v576 = vadd.f32 %v575, 1.0
  %v577 = vrcp.pop %v576
  %v578 = vmul.f32 1.0, %v577
  %v579 = vtanh.pop %v572
  %v580 = vmul.f32 %v578, %v432
  %582 = vrot.lane.b32.xlu0 %v579, 64
  %v583 = vpop.permute.xlu0 %582
  %v585 = vmul.f32 %v578, %v583
  %587 = vrot.lane.b32.xlu0 %v585, 32
  %v588 = vpop.permute.xlu0 %587
  %v590 = vadd.f32 %v580, %v588
  %v591 = vtanh.pop %v590
  %593 = vrot.lane.b32.xlu0 %v591, 64
  %v594 = vpop.permute.xlu0 %593
  %v596 = vmul.f32 %v578, %v594
  %598 = vrot.lane.b32.xlu0 %v524, 32
  %v599 = vpop.permute.xlu0 %598
  %s601 = scalar_lea.vmem %s5, 8
  %602 = vst.msk [vmem:[%s601] sm:$0xff] %vm293, %v599
  %604 = vrot.lane.b32.xlu0 %v596, 64
  %v605 = vpop.permute.xlu0 %604
  %s607 = scalar_lea.vmem %s5, 112
  %608 = vst.msk [vmem:[%s607] sm:$0xff] %vm449, %v605
  %v609 = vld [vmem:[#allocation2 + $0x20] sm:$0xff]
  %v610 = vld [vmem:[#allocation2 + $0xd8] sm:$0xff]
  %v611 = vpack.c.bf16 %v524, %v524
  %613 = vrot.lane.b32.xlu0 %v611, 32
  %v614 = vpop.permute.xlu0 %613
  %v616 = vsel %vm293, %v614, 0
  %618 = vmatprep.subr.bf16.mxu0 0
  %619 = vmatpush1.bf16.msra.mxu0 %v289
  %620 = vmatprep.subr.bf16.mxu0 0
  %621 = vmatpush1.bf16.msra.mxu0 %v290
  %622 = vmatprep.subr.bf16.mxu0 0
  %623 = vmatpush1.bf16.msra.mxu0 0
  %624 = vmatprep.subr.bf16.mxu0 0
  %625 = vmatpush1.bf16.msra.mxu0 0
  %626 = vmatprep.subr.bf16.mxu0 0
  %627 = vmatpush1.bf16.msra.mxu0 0
  %628 = vmatprep.subr.bf16.mxu0 0
  %629 = vmatpush1.bf16.msra.mxu0 0
  %630 = vmatprep.subr.bf16.mxu0 0
  %631 = vmatpush1.bf16.msra.mxu0 0
  %632 = vmatprep.subr.bf16.mxu0 0
  %633 = vmatpush1.bf16.msra.mxu0 0
  %634 = vmatprep.subr.bf16.mxu0 0
  %635 = vmatpush1.bf16.msra.mxu0 0
  %636 = vmatprep.subr.bf16.mxu0 0
  %637 = vmatpush1.bf16.msra.mxu0 0
  %638 = vmatprep.subr.bf16.mxu0 0
  %639 = vmatpush1.bf16.msra.mxu0 0
  %640 = vmatprep.subr.bf16.mxu0 0
  %641 = vmatpush1.bf16.msra.mxu0 0
  %642 = vmatprep.subr.bf16.mxu0 0
  %643 = vmatpush1.bf16.msra.mxu0 0
  %644 = vmatprep.subr.bf16.mxu0 0
  %645 = vmatpush1.bf16.msra.mxu0 0
  %646 = vmatprep.subr.bf16.mxu0 0
  %647 = vmatpush1.bf16.msra.mxu0 0
  %648 = vmatprep.subr.bf16.mxu0 0
  %649 = vmatpush1.bf16.msra.mxu0 0
  %650 = vmatprep.mubr.bf16.mxu0 0
  %651 = vmatmul.mubr.bf16.gmra.mrb[0].mxu0 %v616
  %v652 = vpop.f32.mrb[0].mxu0
  %v653 = vadd.f32 0.0, %v652
  %v654 = vpop.f32.mrb[0].mxu0
  %v655 = vpop.f32.mrb[0].mxu0
  %v656 = vpop.f32.mrb[0].mxu0
  %657 = vdwg.mxu0
  %v658 = vadd.f32 %v609, %v653
  %v659 = vxor.u32 %v658, 2147483648
  %v660 = vmul.f32 %v659, 1.442695
  %v661 = vpow.pop %v660
  %v662 = vadd.f32 %v661, 1.0
  %v663 = vrcp.pop %v662
  %v664 = vmul.f32 1.0, %v663
  %v665 = vtanh.pop %v658
  %v666 = vmul.f32 %v664, %v518
  %668 = vrot.lane.b32.xlu0 %v665, 64
  %v669 = vpop.permute.xlu0 %668
  %v671 = vmul.f32 %v664, %v669
  %673 = vrot.lane.b32.xlu0 %v671, 32
  %v674 = vpop.permute.xlu0 %673
  %v676 = vadd.f32 %v666, %v674
  %v677 = vtanh.pop %v676
  %679 = vrot.lane.b32.xlu0 %v677, 64
  %v680 = vpop.permute.xlu0 %679
  %v682 = vmul.f32 %v664, %v680
  %v683 = vpack.c.bf16 %v596, %v596
  %685 = vrot.lane.b32.xlu0 %v683, 32
  %v686 = vpop.permute.xlu0 %685
  %v688 = vsel %vm293, %v686, 0
  %690 = vmatprep.subr.bf16.mxu0 0
  %691 = vmatpush1.bf16.msra.mxu0 %v370
  %692 = vmatprep.subr.bf16.mxu0 0
  %693 = vmatpush1.bf16.msra.mxu0 %v371
  %694 = vmatprep.subr.bf16.mxu0 0
  %695 = vmatpush1.bf16.msra.mxu0 0
  %696 = vmatprep.subr.bf16.mxu0 0
  %697 = vmatpush1.bf16.msra.mxu0 0
  %698 = vmatprep.subr.bf16.mxu0 0
  %699 = vmatpush1.bf16.msra.mxu0 0
  %700 = vmatprep.subr.bf16.mxu0 0
  %701 = vmatpush1.bf16.msra.mxu0 0
  %702 = vmatprep.subr.bf16.mxu0 0
  %703 = vmatpush1.bf16.msra.mxu0 0
  %704 = vmatprep.subr.bf16.mxu0 0
  %705 = vmatpush1.bf16.msra.mxu0 0
  %706 = vmatprep.subr.bf16.mxu0 0
  %707 = vmatpush1.bf16.msra.mxu0 0
  %708 = vmatprep.subr.bf16.mxu0 0
  %709 = vmatpush1.bf16.msra.mxu0 0
  %710 = vmatprep.subr.bf16.mxu0 0
  %711 = vmatpush1.bf16.msra.mxu0 0
  %712 = vmatprep.subr.bf16.mxu0 0
  %713 = vmatpush1.bf16.msra.mxu0 0
  %714 = vmatprep.subr.bf16.mxu0 0
  %715 = vmatpush1.bf16.msra.mxu0 0
  %716 = vmatprep.subr.bf16.mxu0 0
  %717 = vmatpush1.bf16.msra.mxu0 0
  %718 = vmatprep.subr.bf16.mxu0 0
  %719 = vmatpush1.bf16.msra.mxu0 0
  %720 = vmatprep.subr.bf16.mxu0 0
  %721 = vmatpush1.bf16.msra.mxu0 0
  %722 = vmatprep.mubr.bf16.mxu0 0
  %723 = vmatmul.mubr.bf16.gmra.mrb[0].mxu0 %v688
  %v724 = vpop.f32.mrb[0].mxu0
  %v725 = vadd.f32 0.0, %v724
  %v726 = vpop.f32.mrb[0].mxu0
  %v727 = vpop.f32.mrb[0].mxu0
  %v728 = vpop.f32.mrb[0].mxu0
  %729 = vdwg.mxu0
  %v730 = vadd.f32 %v610, %v725
  %v731 = vxor.u32 %v730, 2147483648
  %v732 = vmul.f32 %v731, 1.442695
  %v733 = vpow.pop %v732
  %v734 = vadd.f32 %v733, 1.0
  %v735 = vrcp.pop %v734
  %v736 = vmul.f32 1.0, %v735
  %v737 = vtanh.pop %v730
  %v738 = vmul.f32 %v736, %v590
  %740 = vrot.lane.b32.xlu0 %v737, 64
  %v741 = vpop.permute.xlu0 %740
  %v743 = vmul.f32 %v736, %v741
  %745 = vrot.lane.b32.xlu0 %v743, 32
  %v746 = vpop.permute.xlu0 %745
  %v748 = vadd.f32 %v738, %v746
  %v749 = vtanh.pop %v748
  %751 = vrot.lane.b32.xlu0 %v749, 64
  %v752 = vpop.permute.xlu0 %751
  %v754 = vmul.f32 %v736, %v752
  %756 = vrot.lane.b32.xlu0 %v682, 32
  %v757 = vpop.permute.xlu0 %756
  %s759 = scalar_lea.vmem %s5, 16
  %760 = vst.msk [vmem:[%s759] sm:$0xff] %vm293, %v757
  %762 = vrot.lane.b32.xlu0 %v754, 64
  %v763 = vpop.permute.xlu0 %762
  %s765 = scalar_lea.vmem %s5, 104
  %766 = vst.msk [vmem:[%s765] sm:$0xff] %vm449, %v763
  %v767 = vld [vmem:[#allocation2 + $0x30] sm:$0xff]
  %v768 = vld [vmem:[#allocation2 + $0xc8] sm:$0xff]
  %v769 = vpack.c.bf16 %v682, %v682
  %771 = vrot.lane.b32.xlu0 %v769, 32
  %v772 = vpop.permute.xlu0 %771
  %v774 = vsel %vm293, %v772, 0
  %776 = vmatprep.subr.bf16.mxu0 0
  %777 = vmatpush1.bf16.msra.mxu0 %v289
  %778 = vmatprep.subr.bf16.mxu0 0
  %779 = vmatpush1.bf16.msra.mxu0 %v290
  %780 = vmatprep.subr.bf16.mxu0 0
  %781 = vmatpush1.bf16.msra.mxu0 0
  %782 = vmatprep.subr.bf16.mxu0 0
  %783 = vmatpush1.bf16.msra.mxu0 0
  %784 = vmatprep.subr.bf16.mxu0 0
  %785 = vmatpush1.bf16.msra.mxu0 0
  %786 = vmatprep.subr.bf16.mxu0 0
  %787 = vmatpush1.bf16.msra.mxu0 0
  %788 = vmatprep.subr.bf16.mxu0 0
  %789 = vmatpush1.bf16.msra.mxu0 0
  %790 = vmatprep.subr.bf16.mxu0 0
  %791 = vmatpush1.bf16.msra.mxu0 0
  %792 = vmatprep.subr.bf16.mxu0 0
  %793 = vmatpush1.bf16.msra.mxu0 0
  %794 = vmatprep.subr.bf16.mxu0 0
  %795 = vmatpush1.bf16.msra.mxu0 0
  %796 = vmatprep.subr.bf16.mxu0 0
  %797 = vmatpush1.bf16.msra.mxu0 0
  %798 = vmatprep.subr.bf16.mxu0 0
  %799 = vmatpush1.bf16.msra.mxu0 0
  %800 = vmatprep.subr.bf16.mxu0 0
  %801 = vmatpush1.bf16.msra.mxu0 0
  %802 = vmatprep.subr.bf16.mxu0 0
  %803 = vmatpush1.bf16.msra.mxu0 0
  %804 = vmatprep.subr.bf16.mxu0 0
  %805 = vmatpush1.bf16.msra.mxu0 0
  %806 = vmatprep.subr.bf16.mxu0 0
  %807 = vmatpush1.bf16.msra.mxu0 0
  %808 = vmatprep.mubr.bf16.mxu0 0
  %809 = vmatmul.mubr.bf16.gmra.mrb[0].mxu0 %v774
  %v810 = vpop.f32.mrb[0].mxu0
  %v811 = vadd.f32 0.0, %v810
  %v812 = vpop.f32.mrb[0].mxu0
  %v813 = vpop.f32.mrb[0].mxu0
  %v814 = vpop.f32.mrb[0].mxu0
  %815 = vdwg.mxu0
  %v816 = vadd.f32 %v767, %v811
  %v817 = vxor.u32 %v816, 2147483648
  %v818 = vmul.f32 %v817, 1.442695
  %v819 = vpow.pop %v818
  %v820 = vadd.f32 %v819, 1.0
  %v821 = vrcp.pop %v820
  %v822 = vmul.f32 1.0, %v821
  %v823 = vtanh.pop %v816
  %v824 = vmul.f32 %v822, %v676
  %826 = vrot.lane.b32.xlu0 %v823, 64
  %v827 = vpop.permute.xlu0 %826
  %v829 = vmul.f32 %v822, %v827
  %831 = vrot.lane.b32.xlu0 %v829, 32
  %v832 = vpop.permute.xlu0 %831
  %v834 = vadd.f32 %v824, %v832
  %v835 = vtanh.pop %v834
  %837 = vrot.lane.b32.xlu0 %v835, 64
  %v838 = vpop.permute.xlu0 %837
  %v840 = vmul.f32 %v822, %v838
  %v841 = vpack.c.bf16 %v754, %v754
  %843 = vrot.lane.b32.xlu0 %v841, 32
  %v844 = vpop.permute.xlu0 %843
  %v846 = vsel %vm293, %v844, 0
  %848 = vmatprep.subr.bf16.mxu0 0
  %849 = vmatpush1.bf16.msra.mxu0 %v370
  %850 = vmatprep.subr.bf16.mxu0 0
  %851 = vmatpush1.bf16.msra.mxu0 %v371
  %852 = vmatprep.subr.bf16.mxu0 0
  %853 = vmatpush1.bf16.msra.mxu0 0
  %854 = vmatprep.subr.bf16.mxu0 0
  %855 = vmatpush1.bf16.msra.mxu0 0
  %856 = vmatprep.subr.bf16.mxu0 0
  %857 = vmatpush1.bf16.msra.mxu0 0
  %858 = vmatprep.subr.bf16.mxu0 0
  %859 = vmatpush1.bf16.msra.mxu0 0
  %860 = vmatprep.subr.bf16.mxu0 0
  %861 = vmatpush1.bf16.msra.mxu0 0
  %862 = vmatprep.subr.bf16.mxu0 0
  %863 = vmatpush1.bf16.msra.mxu0 0
  %864 = vmatprep.subr.bf16.mxu0 0
  %865 = vmatpush1.bf16.msra.mxu0 0
  %866 = vmatprep.subr.bf16.mxu0 0
  %867 = vmatpush1.bf16.msra.mxu0 0
  %868 = vmatprep.subr.bf16.mxu0 0
  %869 = vmatpush1.bf16.msra.mxu0 0
  %870 = vmatprep.subr.bf16.mxu0 0
  %871 = vmatpush1.bf16.msra.mxu0 0
  %872 = vmatprep.subr.bf16.mxu0 0
  %873 = vmatpush1.bf16.msra.mxu0 0
  %874 = vmatprep.subr.bf16.mxu0 0
  %875 = vmatpush1.bf16.msra.mxu0 0
  %876 = vmatprep.subr.bf16.mxu0 0
  %877 = vmatpush1.bf16.msra.mxu0 0
  %878 = vmatprep.subr.bf16.mxu0 0
  %879 = vmatpush1.bf16.msra.mxu0 0
  %880 = vmatprep.mubr.bf16.mxu0 0
  %881 = vmatmul.mubr.bf16.gmra.mrb[0].mxu0 %v846
  %v882 = vpop.f32.mrb[0].mxu0
  %v883 = vadd.f32 0.0, %v882
  %v884 = vpop.f32.mrb[0].mxu0
  %v885 = vpop.f32.mrb[0].mxu0
  %v886 = vpop.f32.mrb[0].mxu0
  %887 = vdwg.mxu0
  %v888 = vadd.f32 %v768, %v883
  %v889 = vxor.u32 %v888, 2147483648
  %v890 = vmul.f32 %v889, 1.442695
  %v891 = vpow.pop %v890
  %v892 = vadd.f32 %v891, 1.0
  %v893 = vrcp.pop %v892
  %v894 = vmul.f32 1.0, %v893
  %v895 = vtanh.pop %v888
  %v896 = vmul.f32 %v894, %v748
  %898 = vrot.lane.b32.xlu0 %v895, 64
  %v899 = vpop.permute.xlu0 %898
  %v901 = vmul.f32 %v894, %v899
  %903 = vrot.lane.b32.xlu0 %v901, 32
  %v904 = vpop.permute.xlu0 %903
  %v906 = vadd.f32 %v896, %v904
  %v907 = vtanh.pop %v906
  %909 = vrot.lane.b32.xlu0 %v907, 64
  %v910 = vpop.permute.xlu0 %909
  %v912 = vmul.f32 %v894, %v910
  %914 = vrot.lane.b32.xlu0 %v840, 32
  %v915 = vpop.permute.xlu0 %914
  %s917 = scalar_lea.vmem %s5, 24
  %918 = vst.msk [vmem:[%s917] sm:$0xff] %vm293, %v915
  %920 = vrot.lane.b32.xlu0 %v912, 64
  %v921 = vpop.permute.xlu0 %920
  %s923 = scalar_lea.vmem %s5, 96
  %924 = vst.msk [vmem:[%s923] sm:$0xff] %vm449, %v921
  %v925 = vld [vmem:[#allocation2 + $0x40] sm:$0xff]
  %v926 = vld [vmem:[#allocation2 + $0xb8] sm:$0xff]
  %v927 = vpack.c.bf16 %v840, %v840
  %929 = vrot.lane.b32.xlu0 %v927, 32
  %v930 = vpop.permute.xlu0 %929
  %v932 = vsel %vm293, %v930, 0
  %934 = vmatprep.subr.bf16.mxu0 0
  %935 = vmatpush1.bf16.msra.mxu0 %v289
  %936 = vmatprep.subr.bf16.mxu0 0
  %937 = vmatpush1.bf16.msra.mxu0 %v290
  %938 = vmatprep.subr.bf16.mxu0 0
  %939 = vmatpush1.bf16.msra.mxu0 0
  %940 = vmatprep.subr.bf16.mxu0 0
  %941 = vmatpush1.bf16.msra.mxu0 0
  %942 = vmatprep.subr.bf16.mxu0 0
  %943 = vmatpush1.bf16.msra.mxu0 0
  %944 = vmatprep.subr.bf16.mxu0 0
  %945 = vmatpush1.bf16.msra.mxu0 0
  %946 = vmatprep.subr.bf16.mxu0 0
  %947 = vmatpush1.bf16.msra.mxu0 0
  %948 = vmatprep.subr.bf16.mxu0 0
  %949 = vmatpush1.bf16.msra.mxu0 0
  %950 = vmatprep.subr.bf16.mxu0 0
  %951 = vmatpush1.bf16.msra.mxu0 0
  %952 = vmatprep.subr.bf16.mxu0 0
  %953 = vmatpush1.bf16.msra.mxu0 0
  %954 = vmatprep.subr.bf16.mxu0 0
  %955 = vmatpush1.bf16.msra.mxu0 0
  %956 = vmatprep.subr.bf16.mxu0 0
  %957 = vmatpush1.bf16.msra.mxu0 0
  %958 = vmatprep.subr.bf16.mxu0 0
  %959 = vmatpush1.bf16.msra.mxu0 0
  %960 = vmatprep.subr.bf16.mxu0 0
  %961 = vmatpush1.bf16.msra.mxu0 0
  %962 = vmatprep.subr.bf16.mxu0 0
  %963 = vmatpush1.bf16.msra.mxu0 0
  %964 = vmatprep.subr.bf16.mxu0 0
  %965 = vmatpush1.bf16.msra.mxu0 0
  %966 = vmatprep.mubr.bf16.mxu0 0
  %967 = vmatmul.mubr.bf16.gmra.mrb[0].mxu0 %v932
  %v968 = vpop.f32.mrb[0].mxu0
  %v969 = vadd.f32 0.0, %v968
  %v970 = vpop.f32.mrb[0].mxu0
  %v971 = vpop.f32.mrb[0].mxu0
  %v972 = vpop.f32.mrb[0].mxu0
  %973 = vdwg.mxu0
  %v974 = vadd.f32 %v925, %v969
  %v975 = vxor.u32 %v974, 2147483648
  %v976 = vmul.f32 %v975, 1.442695
  %v977 = vpow.pop %v976
  %v978 = vadd.f32 %v977, 1.0
  %v979 = vrcp.pop %v978
  %v980 = vmul.f32 1.0, %v979
  %v981 = vtanh.pop %v974
  %v982 = vmul.f32 %v980, %v834
  %984 = vrot.lane.b32.xlu0 %v981, 64
  %v985 = vpop.permute.xlu0 %984
  %v987 = vmul.f32 %v980, %v985
  %989 = vrot.lane.b32.xlu0 %v987, 32
  %v990 = vpop.permute.xlu0 %989
  %v992 = vadd.f32 %v982, %v990
  %v993 = vtanh.pop %v992
  %995 = vrot.lane.b32.xlu0 %v993, 64
  %v996 = vpop.permute.xlu0 %995
  %v998 = vmul.f32 %v980, %v996
  %v999 = vpack.c.bf16 %v912, %v912
  %1001 = vrot.lane.b32.xlu0 %v999, 32
  %v1002 = vpop.permute.xlu0 %1001
  %v1004 = vsel %vm293, %v1002, 0
  %1006 = vmatprep.subr.bf16.mxu0 0
  %1007 = vmatpush1.bf16.msra.mxu0 %v370
  %1008 = vmatprep.subr.bf16.mxu0 0
  %1009 = vmatpush1.bf16.msra.mxu0 %v371
  %1010 = vmatprep.subr.bf16.mxu0 0
  %1011 = vmatpush1.bf16.msra.mxu0 0
  %1012 = vmatprep.subr.bf16.mxu0 0
  %1013 = vmatpush1.bf16.msra.mxu0 0
  %1014 = vmatprep.subr.bf16.mxu0 0
  %1015 = vmatpush1.bf16.msra.mxu0 0
  %1016 = vmatprep.subr.bf16.mxu0 0
  %1017 = vmatpush1.bf16.msra.mxu0 0
  %1018 = vmatprep.subr.bf16.mxu0 0
  %1019 = vmatpush1.bf16.msra.mxu0 0
  %1020 = vmatprep.subr.bf16.mxu0 0
  %1021 = vmatpush1.bf16.msra.mxu0 0
  %1022 = vmatprep.subr.bf16.mxu0 0
  %1023 = vmatpush1.bf16.msra.mxu0 0
  %1024 = vmatprep.subr.bf16.mxu0 0
  %1025 = vmatpush1.bf16.msra.mxu0 0
  %1026 = vmatprep.subr.bf16.mxu0 0
  %1027 = vmatpush1.bf16.msra.mxu0 0
  %1028 = vmatprep.subr.bf16.mxu0 0
  %1029 = vmatpush1.bf16.msra.mxu0 0
  %1030 = vmatprep.subr.bf16.mxu0 0
  %1031 = vmatpush1.bf16.msra.mxu0 0
  %1032 = vmatprep.subr.bf16.mxu0 0
  %1033 = vmatpush1.bf16.msra.mxu0 0
  %1034 = vmatprep.subr.bf16.mxu0 0
  %1035 = vmatpush1.bf16.msra.mxu0 0
  %1036 = vmatprep.subr.bf16.mxu0 0
  %1037 = vmatpush1.bf16.msra.mxu0 0
  %1038 = vmatprep.mubr.bf16.mxu0 0
  %1039 = vmatmul.mubr.bf16.gmra.mrb[0].mxu0 %v1004
  %v1040 = vpop.f32.mrb[0].mxu0
  %v1041 = vadd.f32 0.0, %v1040
  %v1042 = vpop.f32.mrb[0].mxu0
  %v1043 = vpop.f32.mrb[0].mxu0
  %v1044 = vpop.f32.mrb[0].mxu0
  %1045 = vdwg.mxu0
  %v1046 = vadd.f32 %v926, %v1041
  %v1047 = vxor.u32 %v1046, 2147483648
  %v1048 = vmul.f32 %v1047, 1.442695
  %v1049 = vpow.pop %v1048
  %v1050 = vadd.f32 %v1049, 1.0
  %v1051 = vrcp.pop %v1050
  %v1052 = vmul.f32 1.0, %v1051
  %v1053 = vtanh.pop %v1046
  %v1054 = vmul.f32 %v1052, %v906
  %1056 = vrot.lane.b32.xlu0 %v1053, 64
  %v1057 = vpop.permute.xlu0 %1056
  %v1059 = vmul.f32 %v1052, %v1057
  %1061 = vrot.lane.b32.xlu0 %v1059, 32
  %v1062 = vpop.permute.xlu0 %1061
  %v1064 = vadd.f32 %v1054, %v1062
  %v1065 = vtanh.pop %v1064
  %1067 = vrot.lane.b32.xlu0 %v1065, 64
  %v1068 = vpop.permute.xlu0 %1067
  %v1070 = vmul.f32 %v1052, %v1068
  %1072 = vrot.lane.b32.xlu0 %v998, 32
  %v1073 = vpop.permute.xlu0 %1072
  %s1075 = scalar_lea.vmem %s5, 32
  %1076 = vst.msk [vmem:[%s1075] sm:$0xff] %vm293, %v1073
  %1078 = vrot.lane.b32.xlu0 %v1070, 64
  %v1079 = vpop.permute.xlu0 %1078
  %s1081 = scalar_lea.vmem %s5, 88
  %1082 = vst.msk [vmem:[%s1081] sm:$0xff] %vm449, %v1079
  %v1083 = vld [vmem:[#allocation2 + $0x50] sm:$0xff]
  %v1084 = vld [vmem:[#allocation2 + $0xa8] sm:$0xff]
  %v1085 = vpack.c.bf16 %v998, %v998
  %1087 = vrot.lane.b32.xlu0 %v1085, 32
  %v1088 = vpop.permute.xlu0 %1087
  %v1090 = vsel %vm293, %v1088, 0
  %1092 = vmatprep.subr.bf16.mxu0 0
  %1093 = vmatpush1.bf16.msra.mxu0 %v289
  %1094 = vmatprep.subr.bf16.mxu0 0
  %1095 = vmatpush1.bf16.msra.mxu0 %v290
  %1096 = vmatprep.subr.bf16.mxu0 0
  %1097 = vmatpush1.bf16.msra.mxu0 0
  %1098 = vmatprep.subr.bf16.mxu0 0
  %1099 = vmatpush1.bf16.msra.mxu0 0
  %1100 = vmatprep.subr.bf16.mxu0 0
  %1101 = vmatpush1.bf16.msra.mxu0 0
  %1102 = vmatprep.subr.bf16.mxu0 0
  %1103 = vmatpush1.bf16.msra.mxu0 0
  %1104 = vmatprep.subr.bf16.mxu0 0
  %1105 = vmatpush1.bf16.msra.mxu0 0
  %1106 = vmatprep.subr.bf16.mxu0 0
  %1107 = vmatpush1.bf16.msra.mxu0 0
  %1108 = vmatprep.subr.bf16.mxu0 0
  %1109 = vmatpush1.bf16.msra.mxu0 0
  %1110 = vmatprep.subr.bf16.mxu0 0
  %1111 = vmatpush1.bf16.msra.mxu0 0
  %1112 = vmatprep.subr.bf16.mxu0 0
  %1113 = vmatpush1.bf16.msra.mxu0 0
  %1114 = vmatprep.subr.bf16.mxu0 0
  %1115 = vmatpush1.bf16.msra.mxu0 0
  %1116 = vmatprep.subr.bf16.mxu0 0
  %1117 = vmatpush1.bf16.msra.mxu0 0
  %1118 = vmatprep.subr.bf16.mxu0 0
  %1119 = vmatpush1.bf16.msra.mxu0 0
  %1120 = vmatprep.subr.bf16.mxu0 0
  %1121 = vmatpush1.bf16.msra.mxu0 0
  %1122 = vmatprep.subr.bf16.mxu0 0
  %1123 = vmatpush1.bf16.msra.mxu0 0
  %1124 = vmatprep.mubr.bf16.mxu0 0
  %1125 = vmatmul.mubr.bf16.gmra.mrb[0].mxu0 %v1090
  %v1126 = vpop.f32.mrb[0].mxu0
  %v1127 = vadd.f32 0.0, %v1126
  %v1128 = vpop.f32.mrb[0].mxu0
  %v1129 = vpop.f32.mrb[0].mxu0
  %v1130 = vpop.f32.mrb[0].mxu0
  %1131 = vdwg.mxu0
  %v1132 = vadd.f32 %v1083, %v1127
  %v1133 = vxor.u32 %v1132, 2147483648
  %v1134 = vmul.f32 %v1133, 1.442695
  %v1135 = vpow.pop %v1134
  %v1136 = vadd.f32 %v1135, 1.0
  %v1137 = vrcp.pop %v1136
  %v1138 = vmul.f32 1.0, %v1137
  %v1139 = vtanh.pop %v1132
  %v1140 = vmul.f32 %v1138, %v992
  %1142 = vrot.lane.b32.xlu0 %v1139, 64
  %v1143 = vpop.permute.xlu0 %1142
  %v1145 = vmul.f32 %v1138, %v1143
  %1147 = vrot.lane.b32.xlu0 %v1145, 32
  %v1148 = vpop.permute.xlu0 %1147
  %v1150 = vadd.f32 %v1140, %v1148
  %v1151 = vtanh.pop %v1150
  %1153 = vrot.lane.b32.xlu0 %v1151, 64
  %v1154 = vpop.permute.xlu0 %1153
  %v1156 = vmul.f32 %v1138, %v1154
  %v1157 = vpack.c.bf16 %v1070, %v1070
  %1159 = vrot.lane.b32.xlu0 %v1157, 32
  %v1160 = vpop.permute.xlu0 %1159
  %v1162 = vsel %vm293, %v1160, 0
  %1164 = vmatprep.subr.bf16.mxu0 0
  %1165 = vmatpush1.bf16.msra.mxu0 %v370
  %1166 = vmatprep.subr.bf16.mxu0 0
  %1167 = vmatpush1.bf16.msra.mxu0 %v371
  %1168 = vmatprep.subr.bf16.mxu0 0
  %1169 = vmatpush1.bf16.msra.mxu0 0
  %1170 = vmatprep.subr.bf16.mxu0 0
  %1171 = vmatpush1.bf16.msra.mxu0 0
  %1172 = vmatprep.subr.bf16.mxu0 0
  %1173 = vmatpush1.bf16.msra.mxu0 0
  %1174 = vmatprep.subr.bf16.mxu0 0
  %1175 = vmatpush1.bf16.msra.mxu0 0
  %1176 = vmatprep.subr.bf16.mxu0 0
  %1177 = vmatpush1.bf16.msra.mxu0 0
  %1178 = vmatprep.subr.bf16.mxu0 0
  %1179 = vmatpush1.bf16.msra.mxu0 0
  %1180 = vmatprep.subr.bf16.mxu0 0
  %1181 = vmatpush1.bf16.msra.mxu0 0
  %1182 = vmatprep.subr.bf16.mxu0 0
  %1183 = vmatpush1.bf16.msra.mxu0 0
  %1184 = vmatprep.subr.bf16.mxu0 0
  %1185 = vmatpush1.bf16.msra.mxu0 0
  %1186 = vmatprep.subr.bf16.mxu0 0
  %1187 = vmatpush1.bf16.msra.mxu0 0
  %1188 = vmatprep.subr.bf16.mxu0 0
  %1189 = vmatpush1.bf16.msra.mxu0 0
  %1190 = vmatprep.subr.bf16.mxu0 0
  %1191 = vmatpush1.bf16.msra.mxu0 0
  %1192 = vmatprep.subr.bf16.mxu0 0
  %1193 = vmatpush1.bf16.msra.mxu0 0
  %1194 = vmatprep.subr.bf16.mxu0 0
  %1195 = vmatpush1.bf16.msra.mxu0 0
  %1196 = vmatprep.mubr.bf16.mxu0 0
  %1197 = vmatmul.mubr.bf16.gmra.mrb[0].mxu0 %v1162
  %v1198 = vpop.f32.mrb[0].mxu0
  %v1199 = vadd.f32 0.0, %v1198
  %v1200 = vpop.f32.mrb[0].mxu0
  %v1201 = vpop.f32.mrb[0].mxu0
  %v1202 = vpop.f32.mrb[0].mxu0
  %1203 = vdwg.mxu0
  %v1204 = vadd.f32 %v1084, %v1199
  %v1205 = vxor.u32 %v1204, 2147483648
  %v1206 = vmul.f32 %v1205, 1.442695
  %v1207 = vpow.pop %v1206
  %v1208 = vadd.f32 %v1207, 1.0
  %v1209 = vrcp.pop %v1208
  %v1210 = vmul.f32 1.0, %v1209
  %v1211 = vtanh.pop %v1204
  %v1212 = vmul.f32 %v1210, %v1064
  %1214 = vrot.lane.b32.xlu0 %v1211, 64
  %v1215 = vpop.permute.xlu0 %1214
  %v1217 = vmul.f32 %v1210, %v1215
  %1219 = vrot.lane.b32.xlu0 %v1217, 32
  %v1220 = vpop.permute.xlu0 %1219
  %v1222 = vadd.f32 %v1212, %v1220
  %v1223 = vtanh.pop %v1222
  %1225 = vrot.lane.b32.xlu0 %v1223, 64
  %v1226 = vpop.permute.xlu0 %1225
  %v1228 = vmul.f32 %v1210, %v1226
  %1230 = vrot.lane.b32.xlu0 %v1156, 32
  %v1231 = vpop.permute.xlu0 %1230
  %s1233 = scalar_lea.vmem %s5, 40
  %1234 = vst.msk [vmem:[%s1233] sm:$0xff] %vm293, %v1231
  %1236 = vrot.lane.b32.xlu0 %v1228, 64
  %v1237 = vpop.permute.xlu0 %1236
  %s1239 = scalar_lea.vmem %s5, 80
  %1240 = vst.msk [vmem:[%s1239] sm:$0xff] %vm449, %v1237
  %v1241 = vld [vmem:[#allocation2 + $0x60] sm:$0xff]
  %v1242 = vld [vmem:[#allocation2 + $0x98] sm:$0xff]
  %v1243 = vpack.c.bf16 %v1156, %v1156
  %1245 = vrot.lane.b32.xlu0 %v1243, 32
  %v1246 = vpop.permute.xlu0 %1245
  %v1248 = vsel %vm293, %v1246, 0
  %1250 = vmatprep.subr.bf16.mxu0 0
  %1251 = vmatpush1.bf16.msra.mxu0 %v289
  %1252 = vmatprep.subr.bf16.mxu0 0
  %1253 = vmatpush1.bf16.msra.mxu0 %v290
  %1254 = vmatprep.subr.bf16.mxu0 0
  %1255 = vmatpush1.bf16.msra.mxu0 0
  %1256 = vmatprep.subr.bf16.mxu0 0
  %1257 = vmatpush1.bf16.msra.mxu0 0
  %1258 = vmatprep.subr.bf16.mxu0 0
  %1259 = vmatpush1.bf16.msra.mxu0 0
  %1260 = vmatprep.subr.bf16.mxu0 0
  %1261 = vmatpush1.bf16.msra.mxu0 0
  %1262 = vmatprep.subr.bf16.mxu0 0
  %1263 = vmatpush1.bf16.msra.mxu0 0
  %1264 = vmatprep.subr.bf16.mxu0 0
  %1265 = vmatpush1.bf16.msra.mxu0 0
  %1266 = vmatprep.subr.bf16.mxu0 0
  %1267 = vmatpush1.bf16.msra.mxu0 0
  %1268 = vmatprep.subr.bf16.mxu0 0
  %1269 = vmatpush1.bf16.msra.mxu0 0
  %1270 = vmatprep.subr.bf16.mxu0 0
  %1271 = vmatpush1.bf16.msra.mxu0 0
  %1272 = vmatprep.subr.bf16.mxu0 0
  %1273 = vmatpush1.bf16.msra.mxu0 0
  %1274 = vmatprep.subr.bf16.mxu0 0
  %1275 = vmatpush1.bf16.msra.mxu0 0
  %1276 = vmatprep.subr.bf16.mxu0 0
  %1277 = vmatpush1.bf16.msra.mxu0 0
  %1278 = vmatprep.subr.bf16.mxu0 0
  %1279 = vmatpush1.bf16.msra.mxu0 0
  %1280 = vmatprep.subr.bf16.mxu0 0
  %1281 = vmatpush1.bf16.msra.mxu0 0
  %1282 = vmatprep.mubr.bf16.mxu0 0
  %1283 = vmatmul.mubr.bf16.gmra.mrb[0].mxu0 %v1248
  %v1284 = vpop.f32.mrb[0].mxu0
  %v1285 = vadd.f32 0.0, %v1284
  %v1286 = vpop.f32.mrb[0].mxu0
  %v1287 = vpop.f32.mrb[0].mxu0
  %v1288 = vpop.f32.mrb[0].mxu0
  %1289 = vdwg.mxu0
  %v1290 = vadd.f32 %v1241, %v1285
  %v1291 = vxor.u32 %v1290, 2147483648
  %v1292 = vmul.f32 %v1291, 1.442695
  %v1293 = vpow.pop %v1292
  %v1294 = vadd.f32 %v1293, 1.0
  %v1295 = vrcp.pop %v1294
  %v1296 = vmul.f32 1.0, %v1295
  %v1297 = vtanh.pop %v1290
  %v1298 = vmul.f32 %v1296, %v1150
  %1300 = vrot.lane.b32.xlu0 %v1297, 64
  %v1301 = vpop.permute.xlu0 %1300
  %v1303 = vmul.f32 %v1296, %v1301
  %1305 = vrot.lane.b32.xlu0 %v1303, 32
  %v1306 = vpop.permute.xlu0 %1305
  %v1308 = vadd.f32 %v1298, %v1306
  %v1309 = vtanh.pop %v1308
  %1311 = vrot.lane.b32.xlu0 %v1309, 64
  %v1312 = vpop.permute.xlu0 %1311
  %v1314 = vmul.f32 %v1296, %v1312
  %v1315 = vpack.c.bf16 %v1228, %v1228
  %1317 = vrot.lane.b32.xlu0 %v1315, 32
  %v1318 = vpop.permute.xlu0 %1317
  %v1320 = vsel %vm293, %v1318, 0
  %1322 = vmatprep.subr.bf16.mxu0 0
  %1323 = vmatpush1.bf16.msra.mxu0 %v370
  %1324 = vmatprep.subr.bf16.mxu0 0
  %1325 = vmatpush1.bf16.msra.mxu0 %v371
  %1326 = vmatprep.subr.bf16.mxu0 0
  %1327 = vmatpush1.bf16.msra.mxu0 0
  %1328 = vmatprep.subr.bf16.mxu0 0
  %1329 = vmatpush1.bf16.msra.mxu0 0
  %1330 = vmatprep.subr.bf16.mxu0 0
  %1331 = vmatpush1.bf16.msra.mxu0 0
  %1332 = vmatprep.subr.bf16.mxu0 0
  %1333 = vmatpush1.bf16.msra.mxu0 0
  %1334 = vmatprep.subr.bf16.mxu0 0
  %1335 = vmatpush1.bf16.msra.mxu0 0
  %1336 = vmatprep.subr.bf16.mxu0 0
  %1337 = vmatpush1.bf16.msra.mxu0 0
  %1338 = vmatprep.subr.bf16.mxu0 0
  %1339 = vmatpush1.bf16.msra.mxu0 0
  %1340 = vmatprep.subr.bf16.mxu0 0
  %1341 = vmatpush1.bf16.msra.mxu0 0
  %1342 = vmatprep.subr.bf16.mxu0 0
  %1343 = vmatpush1.bf16.msra.mxu0 0
  %1344 = vmatprep.subr.bf16.mxu0 0
  %1345 = vmatpush1.bf16.msra.mxu0 0
  %1346 = vmatprep.subr.bf16.mxu0 0
  %1347 = vmatpush1.bf16.msra.mxu0 0
  %1348 = vmatprep.subr.bf16.mxu0 0
  %1349 = vmatpush1.bf16.msra.mxu0 0
  %1350 = vmatprep.subr.bf16.mxu0 0
  %1351 = vmatpush1.bf16.msra.mxu0 0
  %1352 = vmatprep.subr.bf16.mxu0 0
  %1353 = vmatpush1.bf16.msra.mxu0 0
  %1354 = vmatprep.mubr.bf16.mxu0 0
  %1355 = vmatmul.mubr.bf16.gmra.mrb[0].mxu0 %v1320
  %v1356 = vpop.f32.mrb[0].mxu0
  %v1357 = vadd.f32 0.0, %v1356
  %v1358 = vpop.f32.mrb[0].mxu0
  %v1359 = vpop.f32.mrb[0].mxu0
  %v1360 = vpop.f32.mrb[0].mxu0
  %1361 = vdwg.mxu0
  %v1362 = vadd.f32 %v1242, %v1357
  %v1363 = vxor.u32 %v1362, 2147483648
  %v1364 = vmul.f32 %v1363, 1.442695
  %v1365 = vpow.pop %v1364
  %v1366 = vadd.f32 %v1365, 1.0
  %v1367 = vrcp.pop %v1366
  %v1368 = vmul.f32 1.0, %v1367
  %v1369 = vtanh.pop %v1362
  %v1370 = vmul.f32 %v1368, %v1222
  %1372 = vrot.lane.b32.xlu0 %v1369, 64
  %v1373 = vpop.permute.xlu0 %1372
  %v1375 = vmul.f32 %v1368, %v1373
  %1377 = vrot.lane.b32.xlu0 %v1375, 32
  %v1378 = vpop.permute.xlu0 %1377
  %v1380 = vadd.f32 %v1370, %v1378
  %v1381 = vtanh.pop %v1380
  %1383 = vrot.lane.b32.xlu0 %v1381, 64
  %v1384 = vpop.permute.xlu0 %1383
  %v1386 = vmul.f32 %v1368, %v1384
  %1388 = vrot.lane.b32.xlu0 %v1314, 32
  %v1389 = vpop.permute.xlu0 %1388
  %s1391 = scalar_lea.vmem %s5, 48
  %1392 = vst.msk [vmem:[%s1391] sm:$0xff] %vm293, %v1389
  %1394 = vrot.lane.b32.xlu0 %v1386, 64
  %v1395 = vpop.permute.xlu0 %1394
  %s1397 = scalar_lea.vmem %s5, 72
  %1398 = vst.msk [vmem:[%s1397] sm:$0xff] %vm449, %v1395
  %v1399 = vld [vmem:[#allocation2 + $0x70] sm:$0xff]
  %v1400 = vld [vmem:[#allocation2 + $0x88] sm:$0xff]
  %v1401 = vpack.c.bf16 %v1314, %v1314
  %1403 = vrot.lane.b32.xlu0 %v1401, 32
  %v1404 = vpop.permute.xlu0 %1403
  %v1406 = vsel %vm293, %v1404, 0
  %1408 = vmatprep.subr.bf16.mxu0 0
  %1409 = vmatpush1.bf16.msra.mxu0 %v289
  %1410 = vmatprep.subr.bf16.mxu0 0
  %1411 = vmatpush1.bf16.msra.mxu0 %v290
  %1412 = vmatprep.subr.bf16.mxu0 0
  %1413 = vmatpush1.bf16.msra.mxu0 0
  %1414 = vmatprep.subr.bf16.mxu0 0
  %1415 = vmatpush1.bf16.msra.mxu0 0
  %1416 = vmatprep.subr.bf16.mxu0 0
  %1417 = vmatpush1.bf16.msra.mxu0 0
  %1418 = vmatprep.subr.bf16.mxu0 0
  %1419 = vmatpush1.bf16.msra.mxu0 0
  %1420 = vmatprep.subr.bf16.mxu0 0
  %1421 = vmatpush1.bf16.msra.mxu0 0
  %1422 = vmatprep.subr.bf16.mxu0 0
  %1423 = vmatpush1.bf16.msra.mxu0 0
  %1424 = vmatprep.subr.bf16.mxu0 0
  %1425 = vmatpush1.bf16.msra.mxu0 0
  %1426 = vmatprep.subr.bf16.mxu0 0
  %1427 = vmatpush1.bf16.msra.mxu0 0
  %1428 = vmatprep.subr.bf16.mxu0 0
  %1429 = vmatpush1.bf16.msra.mxu0 0
  %1430 = vmatprep.subr.bf16.mxu0 0
  %1431 = vmatpush1.bf16.msra.mxu0 0
  %1432 = vmatprep.subr.bf16.mxu0 0
  %1433 = vmatpush1.bf16.msra.mxu0 0
  %1434 = vmatprep.subr.bf16.mxu0 0
  %1435 = vmatpush1.bf16.msra.mxu0 0
  %1436 = vmatprep.subr.bf16.mxu0 0
  %1437 = vmatpush1.bf16.msra.mxu0 0
  %1438 = vmatprep.subr.bf16.mxu0 0
  %1439 = vmatpush1.bf16.msra.mxu0 0
  %1440 = vmatprep.mubr.bf16.mxu0 0
  %1441 = vmatmul.mubr.bf16.gmra.mrb[0].mxu0 %v1406
  %v1442 = vpop.f32.mrb[0].mxu0
  %v1443 = vadd.f32 0.0, %v1442
  %v1444 = vpop.f32.mrb[0].mxu0
  %v1445 = vpop.f32.mrb[0].mxu0
  %v1446 = vpop.f32.mrb[0].mxu0
  %1447 = vdwg.mxu0
  %v1448 = vadd.f32 %v1399, %v1443
  %v1449 = vxor.u32 %v1448, 2147483648
  %v1450 = vmul.f32 %v1449, 1.442695
  %v1451 = vpow.pop %v1450
  %v1452 = vadd.f32 %v1451, 1.0
  %v1453 = vrcp.pop %v1452
  %v1454 = vmul.f32 1.0, %v1453
  %v1455 = vtanh.pop %v1448
  %v1456 = vmul.f32 %v1454, %v1308
  %1458 = vrot.lane.b32.xlu0 %v1455, 64
  %v1459 = vpop.permute.xlu0 %1458
  %v1461 = vmul.f32 %v1454, %v1459
  %1463 = vrot.lane.b32.xlu0 %v1461, 32
  %v1464 = vpop.permute.xlu0 %1463
  %v1466 = vadd.f32 %v1456, %v1464
  %v1467 = vtanh.pop %v1466
  %1469 = vrot.lane.b32.xlu0 %v1467, 64
  %v1470 = vpop.permute.xlu0 %1469
  %v1472 = vmul.f32 %v1454, %v1470
  %v1473 = vpack.c.bf16 %v1386, %v1386
  %1475 = vrot.lane.b32.xlu0 %v1473, 32
  %v1476 = vpop.permute.xlu0 %1475
  %v1478 = vsel %vm293, %v1476, 0
  %1480 = vmatprep.subr.bf16.mxu0 0
  %1481 = vmatpush1.bf16.msra.mxu0 %v370
  %1482 = vmatprep.subr.bf16.mxu0 0
  %1483 = vmatpush1.bf16.msra.mxu0 %v371
  %1484 = vmatprep.subr.bf16.mxu0 0
  %1485 = vmatpush1.bf16.msra.mxu0 0
  %1486 = vmatprep.subr.bf16.mxu0 0
  %1487 = vmatpush1.bf16.msra.mxu0 0
  %1488 = vmatprep.subr.bf16.mxu0 0
  %1489 = vmatpush1.bf16.msra.mxu0 0
  %1490 = vmatprep.subr.bf16.mxu0 0
  %1491 = vmatpush1.bf16.msra.mxu0 0
  %1492 = vmatprep.subr.bf16.mxu0 0
  %1493 = vmatpush1.bf16.msra.mxu0 0
  %1494 = vmatprep.subr.bf16.mxu0 0
  %1495 = vmatpush1.bf16.msra.mxu0 0
  %1496 = vmatprep.subr.bf16.mxu0 0
  %1497 = vmatpush1.bf16.msra.mxu0 0
  %1498 = vmatprep.subr.bf16.mxu0 0
  %1499 = vmatpush1.bf16.msra.mxu0 0
  %1500 = vmatprep.subr.bf16.mxu0 0
  %1501 = vmatpush1.bf16.msra.mxu0 0
  %1502 = vmatprep.subr.bf16.mxu0 0
  %1503 = vmatpush1.bf16.msra.mxu0 0
  %1504 = vmatprep.subr.bf16.mxu0 0
  %1505 = vmatpush1.bf16.msra.mxu0 0
  %1506 = vmatprep.subr.bf16.mxu0 0
  %1507 = vmatpush1.bf16.msra.mxu0 0
  %1508 = vmatprep.subr.bf16.mxu0 0
  %1509 = vmatpush1.bf16.msra.mxu0 0
  %1510 = vmatprep.subr.bf16.mxu0 0
  %1511 = vmatpush1.bf16.msra.mxu0 0
  %1512 = vmatprep.mubr.bf16.mxu0 0
  %1513 = vmatmul.mubr.bf16.gmra.mrb[0].mxu0 %v1478
  %v1514 = vpop.f32.mrb[0].mxu0
  %v1515 = vadd.f32 0.0, %v1514
  %v1516 = vpop.f32.mrb[0].mxu0
  %v1517 = vpop.f32.mrb[0].mxu0
  %v1518 = vpop.f32.mrb[0].mxu0
  %1519 = vdwg.mxu0
  %v1520 = vadd.f32 %v1400, %v1515
  %v1521 = vxor.u32 %v1520, 2147483648
  %v1522 = vmul.f32 %v1521, 1.442695
  %v1523 = vpow.pop %v1522
  %v1524 = vadd.f32 %v1523, 1.0
  %v1525 = vrcp.pop %v1524
  %v1526 = vmul.f32 1.0, %v1525
  %v1527 = vtanh.pop %v1520
  %v1528 = vmul.f32 %v1526, %v1380
  %1530 = vrot.lane.b32.xlu0 %v1527, 64
  %v1531 = vpop.permute.xlu0 %1530
  %v1533 = vmul.f32 %v1526, %v1531
  %1535 = vrot.lane.b32.xlu0 %v1533, 32
  %v1536 = vpop.permute.xlu0 %1535
  %v1538 = vadd.f32 %v1528, %v1536
  %v1539 = vtanh.pop %v1538
  %1541 = vrot.lane.b32.xlu0 %v1539, 64
  %v1542 = vpop.permute.xlu0 %1541
  %v1544 = vmul.f32 %v1526, %v1542
  %1546 = vrot.lane.b32.xlu0 %v1472, 32
  %v1547 = vpop.permute.xlu0 %1546
  %s1549 = scalar_lea.vmem %s5, 56
  %1550 = vst.msk [vmem:[%s1549] sm:$0xff] %vm293, %v1547
  %1552 = vrot.lane.b32.xlu0 %v1544, 64
  %v1553 = vpop.permute.xlu0 %1552
  %s1555 = scalar_lea.vmem %s5, 64
  %1556 = vst.msk [vmem:[%s1555] sm:$0xff] %vm449, %v1553
  %v1557 = vld [vmem:[#allocation2 + $0x80] sm:$0xff]
  %v1558 = vld [vmem:[#allocation2 + $0x78] sm:$0xff]
  %v1559 = vpack.c.bf16 %v1472, %v1472
  %1561 = vrot.lane.b32.xlu0 %v1559, 32
  %v1562 = vpop.permute.xlu0 %1561
  %v1564 = vsel %vm293, %v1562, 0
  %1566 = vmatprep.subr.bf16.mxu0 0
  %1567 = vmatpush1.bf16.msra.mxu0 %v289
  %1568 = vmatprep.subr.bf16.mxu0 0
  %1569 = vmatpush1.bf16.msra.mxu0 %v290
  %1570 = vmatprep.subr.bf16.mxu0 0
  %1571 = vmatpush1.bf16.msra.mxu0 0
  %1572 = vmatprep.subr.bf16.mxu0 0
  %1573 = vmatpush1.bf16.msra.mxu0 0
  %1574 = vmatprep.subr.bf16.mxu0 0
  %1575 = vmatpush1.bf16.msra.mxu0 0
  %1576 = vmatprep.subr.bf16.mxu0 0
  %1577 = vmatpush1.bf16.msra.mxu0 0
  %1578 = vmatprep.subr.bf16.mxu0 0
  %1579 = vmatpush1.bf16.msra.mxu0 0
  %1580 = vmatprep.subr.bf16.mxu0 0
  %1581 = vmatpush1.bf16.msra.mxu0 0
  %1582 = vmatprep.subr.bf16.mxu0 0
  %1583 = vmatpush1.bf16.msra.mxu0 0
  %1584 = vmatprep.subr.bf16.mxu0 0
  %1585 = vmatpush1.bf16.msra.mxu0 0
  %1586 = vmatprep.subr.bf16.mxu0 0
  %1587 = vmatpush1.bf16.msra.mxu0 0
  %1588 = vmatprep.subr.bf16.mxu0 0
  %1589 = vmatpush1.bf16.msra.mxu0 0
  %1590 = vmatprep.subr.bf16.mxu0 0
  %1591 = vmatpush1.bf16.msra.mxu0 0
  %1592 = vmatprep.subr.bf16.mxu0 0
  %1593 = vmatpush1.bf16.msra.mxu0 0
  %1594 = vmatprep.subr.bf16.mxu0 0
  %1595 = vmatpush1.bf16.msra.mxu0 0
  %1596 = vmatprep.subr.bf16.mxu0 0
  %1597 = vmatpush1.bf16.msra.mxu0 0
  %1598 = vmatprep.mubr.bf16.mxu0 0
  %1599 = vmatmul.mubr.bf16.gmra.mrb[0].mxu0 %v1564
  %v1600 = vpop.f32.mrb[0].mxu0
  %v1601 = vadd.f32 0.0, %v1600
  %v1602 = vpop.f32.mrb[0].mxu0
  %v1603 = vpop.f32.mrb[0].mxu0
  %v1604 = vpop.f32.mrb[0].mxu0
  %1605 = vdwg.mxu0
  %v1606 = vadd.f32 %v1557, %v1601
  %v1607 = vxor.u32 %v1606, 2147483648
  %v1608 = vmul.f32 %v1607, 1.442695
  %v1609 = vpow.pop %v1608
  %v1610 = vadd.f32 %v1609, 1.0
  %v1611 = vrcp.pop %v1610
  %v1612 = vmul.f32 1.0, %v1611
  %v1613 = vtanh.pop %v1606
  %v1614 = vmul.f32 %v1612, %v1466
  %1616 = vrot.lane.b32.xlu0 %v1613, 64
  %v1617 = vpop.permute.xlu0 %1616
  %v1619 = vmul.f32 %v1612, %v1617
  %1621 = vrot.lane.b32.xlu0 %v1619, 32
  %v1622 = vpop.permute.xlu0 %1621
  %v1624 = vadd.f32 %v1614, %v1622
  %v1625 = vtanh.pop %v1624
  %1627 = vrot.lane.b32.xlu0 %v1625, 64
  %v1628 = vpop.permute.xlu0 %1627
  %v1630 = vmul.f32 %v1612, %v1628
  %v1631 = vpack.c.bf16 %v1544, %v1544
  %1633 = vrot.lane.b32.xlu0 %v1631, 32
  %v1634 = vpop.permute.xlu0 %1633
  %v1636 = vsel %vm293, %v1634, 0
  %1638 = vmatprep.subr.bf16.mxu0 0
  %1639 = vmatpush1.bf16.msra.mxu0 %v370
  %1640 = vmatprep.subr.bf16.mxu0 0
  %1641 = vmatpush1.bf16.msra.mxu0 %v371
  %1642 = vmatprep.subr.bf16.mxu0 0
  %1643 = vmatpush1.bf16.msra.mxu0 0
  %1644 = vmatprep.subr.bf16.mxu0 0
  %1645 = vmatpush1.bf16.msra.mxu0 0
  %1646 = vmatprep.subr.bf16.mxu0 0
  %1647 = vmatpush1.bf16.msra.mxu0 0
  %1648 = vmatprep.subr.bf16.mxu0 0
  %1649 = vmatpush1.bf16.msra.mxu0 0
  %1650 = vmatprep.subr.bf16.mxu0 0
  %1651 = vmatpush1.bf16.msra.mxu0 0
  %1652 = vmatprep.subr.bf16.mxu0 0
  %1653 = vmatpush1.bf16.msra.mxu0 0
  %1654 = vmatprep.subr.bf16.mxu0 0
  %1655 = vmatpush1.bf16.msra.mxu0 0
  %1656 = vmatprep.subr.bf16.mxu0 0
  %1657 = vmatpush1.bf16.msra.mxu0 0
  %1658 = vmatprep.subr.bf16.mxu0 0
  %1659 = vmatpush1.bf16.msra.mxu0 0
  %1660 = vmatprep.subr.bf16.mxu0 0
  %1661 = vmatpush1.bf16.msra.mxu0 0
  %1662 = vmatprep.subr.bf16.mxu0 0
  %1663 = vmatpush1.bf16.msra.mxu0 0
  %1664 = vmatprep.subr.bf16.mxu0 0
  %1665 = vmatpush1.bf16.msra.mxu0 0
  %1666 = vmatprep.subr.bf16.mxu0 0
  %1667 = vmatpush1.bf16.msra.mxu0 0
  %1668 = vmatprep.subr.bf16.mxu0 0
  %1669 = vmatpush1.bf16.msra.mxu0 0
  %1670 = vmatprep.mubr.bf16.mxu0 0
  %1671 = vmatmul.mubr.bf16.gmra.mrb[0].mxu0 %v1636
  %v1672 = vpop.f32.mrb[0].mxu0
  %v1673 = vadd.f32 0.0, %v1672
  %v1674 = vpop.f32.mrb[0].mxu0
  %v1675 = vpop.f32.mrb[0].mxu0
  %v1676 = vpop.f32.mrb[0].mxu0
  %1677 = vdwg.mxu0
  %v1678 = vadd.f32 %v1558, %v1673
  %v1679 = vxor.u32 %v1678, 2147483648
  %v1680 = vmul.f32 %v1679, 1.442695
  %v1681 = vpow.pop %v1680
  %v1682 = vadd.f32 %v1681, 1.0
  %v1683 = vrcp.pop %v1682
  %v1684 = vmul.f32 1.0, %v1683
  %v1685 = vtanh.pop %v1678
  %v1686 = vmul.f32 %v1684, %v1538
  %1688 = vrot.lane.b32.xlu0 %v1685, 64
  %v1689 = vpop.permute.xlu0 %1688
  %v1691 = vmul.f32 %v1684, %v1689
  %1693 = vrot.lane.b32.xlu0 %v1691, 32
  %v1694 = vpop.permute.xlu0 %1693
  %v1696 = vadd.f32 %v1686, %v1694
  %v1697 = vtanh.pop %v1696
  %1699 = vrot.lane.b32.xlu0 %v1697, 64
  %v1700 = vpop.permute.xlu0 %1699
  %v1702 = vmul.f32 %v1684, %v1700
  %1704 = vrot.lane.b32.xlu0 %v1630, 32
  %v1705 = vpop.permute.xlu0 %1704
  %1707 = vst.msk [vmem:[%s1555] sm:$0xff] %vm293, %v1705
  %1709 = vrot.lane.b32.xlu0 %v1702, 64
  %v1710 = vpop.permute.xlu0 %1709
  %1712 = vst.msk [vmem:[%s1549] sm:$0xff] %vm449, %v1710
  %v1713 = vld [vmem:[#allocation2 + $0x90] sm:$0xff]
  %v1714 = vld [vmem:[#allocation2 + $0x68] sm:$0xff]
  %v1715 = vpack.c.bf16 %v1630, %v1630
  %1717 = vrot.lane.b32.xlu0 %v1715, 32
  %v1718 = vpop.permute.xlu0 %1717
  %v1720 = vsel %vm293, %v1718, 0
  %1722 = vmatprep.subr.bf16.mxu0 0
  %1723 = vmatpush1.bf16.msra.mxu0 %v289
  %1724 = vmatprep.subr.bf16.mxu0 0
  %1725 = vmatpush1.bf16.msra.mxu0 %v290
  %1726 = vmatprep.subr.bf16.mxu0 0
  %1727 = vmatpush1.bf16.msra.mxu0 0
  %1728 = vmatprep.subr.bf16.mxu0 0
  %1729 = vmatpush1.bf16.msra.mxu0 0
  %1730 = vmatprep.subr.bf16.mxu0 0
  %1731 = vmatpush1.bf16.msra.mxu0 0
  %1732 = vmatprep.subr.bf16.mxu0 0
  %1733 = vmatpush1.bf16.msra.mxu0 0
  %1734 = vmatprep.subr.bf16.mxu0 0
  %1735 = vmatpush1.bf16.msra.mxu0 0
  %1736 = vmatprep.subr.bf16.mxu0 0
  %1737 = vmatpush1.bf16.msra.mxu0 0
  %1738 = vmatprep.subr.bf16.mxu0 0
  %1739 = vmatpush1.bf16.msra.mxu0 0
  %1740 = vmatprep.subr.bf16.mxu0 0
  %1741 = vmatpush1.bf16.msra.mxu0 0
  %1742 = vmatprep.subr.bf16.mxu0 0
  %1743 = vmatpush1.bf16.msra.mxu0 0
  %1744 = vmatprep.subr.bf16.mxu0 0
  %1745 = vmatpush1.bf16.msra.mxu0 0
  %1746 = vmatprep.subr.bf16.mxu0 0
  %1747 = vmatpush1.bf16.msra.mxu0 0
  %1748 = vmatprep.subr.bf16.mxu0 0
  %1749 = vmatpush1.bf16.msra.mxu0 0
  %1750 = vmatprep.subr.bf16.mxu0 0
  %1751 = vmatpush1.bf16.msra.mxu0 0
  %1752 = vmatprep.subr.bf16.mxu0 0
  %1753 = vmatpush1.bf16.msra.mxu0 0
  %1754 = vmatprep.mubr.bf16.mxu0 0
  %1755 = vmatmul.mubr.bf16.gmra.mrb[0].mxu0 %v1720
  %v1756 = vpop.f32.mrb[0].mxu0
  %v1757 = vadd.f32 0.0, %v1756
  %v1758 = vpop.f32.mrb[0].mxu0
  %v1759 = vpop.f32.mrb[0].mxu0
  %v1760 = vpop.f32.mrb[0].mxu0
  %1761 = vdwg.mxu0
  %v1762 = vadd.f32 %v1713, %v1757
  %v1763 = vxor.u32 %v1762, 2147483648
  %v1764 = vmul.f32 %v1763, 1.442695
  %v1765 = vpow.pop %v1764
  %v1766 = vadd.f32 %v1765, 1.0
  %v1767 = vrcp.pop %v1766
  %v1768 = vmul.f32 1.0, %v1767
  %v1769 = vtanh.pop %v1762
  %v1770 = vmul.f32 %v1768, %v1624
  %1772 = vrot.lane.b32.xlu0 %v1769, 64
  %v1773 = vpop.permute.xlu0 %1772
  %v1775 = vmul.f32 %v1768, %v1773
  %1777 = vrot.lane.b32.xlu0 %v1775, 32
  %v1778 = vpop.permute.xlu0 %1777
  %v1780 = vadd.f32 %v1770, %v1778
  %v1781 = vtanh.pop %v1780
  %1783 = vrot.lane.b32.xlu0 %v1781, 64
  %v1784 = vpop.permute.xlu0 %1783
  %v1786 = vmul.f32 %v1768, %v1784
  %v1787 = vpack.c.bf16 %v1702, %v1702
  %1789 = vrot.lane.b32.xlu0 %v1787, 32
  %v1790 = vpop.permute.xlu0 %1789
  %v1792 = vsel %vm293, %v1790, 0
  %1794 = vmatprep.subr.bf16.mxu0 0
  %1795 = vmatpush1.bf16.msra.mxu0 %v370
  %1796 = vmatprep.subr.bf16.mxu0 0
  %1797 = vmatpush1.bf16.msra.mxu0 %v371
  %1798 = vmatprep.subr.bf16.mxu0 0
  %1799 = vmatpush1.bf16.msra.mxu0 0
  %1800 = vmatprep.subr.bf16.mxu0 0
  %1801 = vmatpush1.bf16.msra.mxu0 0
  %1802 = vmatprep.subr.bf16.mxu0 0
  %1803 = vmatpush1.bf16.msra.mxu0 0
  %1804 = vmatprep.subr.bf16.mxu0 0
  %1805 = vmatpush1.bf16.msra.mxu0 0
  %1806 = vmatprep.subr.bf16.mxu0 0
  %1807 = vmatpush1.bf16.msra.mxu0 0
  %1808 = vmatprep.subr.bf16.mxu0 0
  %1809 = vmatpush1.bf16.msra.mxu0 0
  %1810 = vmatprep.subr.bf16.mxu0 0
  %1811 = vmatpush1.bf16.msra.mxu0 0
  %1812 = vmatprep.subr.bf16.mxu0 0
  %1813 = vmatpush1.bf16.msra.mxu0 0
  %1814 = vmatprep.subr.bf16.mxu0 0
  %1815 = vmatpush1.bf16.msra.mxu0 0
  %1816 = vmatprep.subr.bf16.mxu0 0
  %1817 = vmatpush1.bf16.msra.mxu0 0
  %1818 = vmatprep.subr.bf16.mxu0 0
  %1819 = vmatpush1.bf16.msra.mxu0 0
  %1820 = vmatprep.subr.bf16.mxu0 0
  %1821 = vmatpush1.bf16.msra.mxu0 0
  %1822 = vmatprep.subr.bf16.mxu0 0
  %1823 = vmatpush1.bf16.msra.mxu0 0
  %1824 = vmatprep.subr.bf16.mxu0 0
  %1825 = vmatpush1.bf16.msra.mxu0 0
  %1826 = vmatprep.mubr.bf16.mxu0 0
  %1827 = vmatmul.mubr.bf16.gmra.mrb[0].mxu0 %v1792
  %v1828 = vpop.f32.mrb[0].mxu0
  %v1829 = vadd.f32 0.0, %v1828
  %v1830 = vpop.f32.mrb[0].mxu0
  %v1831 = vpop.f32.mrb[0].mxu0
  %v1832 = vpop.f32.mrb[0].mxu0
  %1833 = vdwg.mxu0
  %v1834 = vadd.f32 %v1714, %v1829
  %v1835 = vxor.u32 %v1834, 2147483648
  %v1836 = vmul.f32 %v1835, 1.442695
  %v1837 = vpow.pop %v1836
  %v1838 = vadd.f32 %v1837, 1.0
  %v1839 = vrcp.pop %v1838
  %v1840 = vmul.f32 1.0, %v1839
  %v1841 = vtanh.pop %v1834
  %v1842 = vmul.f32 %v1840, %v1696
  %1844 = vrot.lane.b32.xlu0 %v1841, 64
  %v1845 = vpop.permute.xlu0 %1844
  %v1847 = vmul.f32 %v1840, %v1845
  %1849 = vrot.lane.b32.xlu0 %v1847, 32
  %v1850 = vpop.permute.xlu0 %1849
  %v1852 = vadd.f32 %v1842, %v1850
  %v1853 = vtanh.pop %v1852
  %1855 = vrot.lane.b32.xlu0 %v1853, 64
  %v1856 = vpop.permute.xlu0 %1855
  %v1858 = vmul.f32 %v1840, %v1856
  %1860 = vrot.lane.b32.xlu0 %v1786, 32
  %v1861 = vpop.permute.xlu0 %1860
  %1863 = vst.msk [vmem:[%s1397] sm:$0xff] %vm293, %v1861
  %1865 = vrot.lane.b32.xlu0 %v1858, 64
  %v1866 = vpop.permute.xlu0 %1865
  %1868 = vst.msk [vmem:[%s1391] sm:$0xff] %vm449, %v1866
  %v1869 = vld [vmem:[#allocation2 + $0xa0] sm:$0xff]
  %v1870 = vld [vmem:[#allocation2 + $0x58] sm:$0xff]
  %v1871 = vpack.c.bf16 %v1786, %v1786
  %1873 = vrot.lane.b32.xlu0 %v1871, 32
  %v1874 = vpop.permute.xlu0 %1873
  %v1876 = vsel %vm293, %v1874, 0
  %1878 = vmatprep.subr.bf16.mxu0 0
  %1879 = vmatpush1.bf16.msra.mxu0 %v289
  %1880 = vmatprep.subr.bf16.mxu0 0
  %1881 = vmatpush1.bf16.msra.mxu0 %v290
  %1882 = vmatprep.subr.bf16.mxu0 0
  %1883 = vmatpush1.bf16.msra.mxu0 0
  %1884 = vmatprep.subr.bf16.mxu0 0
  %1885 = vmatpush1.bf16.msra.mxu0 0
  %1886 = vmatprep.subr.bf16.mxu0 0
  %1887 = vmatpush1.bf16.msra.mxu0 0
  %1888 = vmatprep.subr.bf16.mxu0 0
  %1889 = vmatpush1.bf16.msra.mxu0 0
  %1890 = vmatprep.subr.bf16.mxu0 0
  %1891 = vmatpush1.bf16.msra.mxu0 0
  %1892 = vmatprep.subr.bf16.mxu0 0
  %1893 = vmatpush1.bf16.msra.mxu0 0
  %1894 = vmatprep.subr.bf16.mxu0 0
  %1895 = vmatpush1.bf16.msra.mxu0 0
  %1896 = vmatprep.subr.bf16.mxu0 0
  %1897 = vmatpush1.bf16.msra.mxu0 0
  %1898 = vmatprep.subr.bf16.mxu0 0
  %1899 = vmatpush1.bf16.msra.mxu0 0
  %1900 = vmatprep.subr.bf16.mxu0 0
  %1901 = vmatpush1.bf16.msra.mxu0 0
  %1902 = vmatprep.subr.bf16.mxu0 0
  %1903 = vmatpush1.bf16.msra.mxu0 0
  %1904 = vmatprep.subr.bf16.mxu0 0
  %1905 = vmatpush1.bf16.msra.mxu0 0
  %1906 = vmatprep.subr.bf16.mxu0 0
  %1907 = vmatpush1.bf16.msra.mxu0 0
  %1908 = vmatprep.subr.bf16.mxu0 0
  %1909 = vmatpush1.bf16.msra.mxu0 0
  %1910 = vmatprep.mubr.bf16.mxu0 0
  %1911 = vmatmul.mubr.bf16.gmra.mrb[0].mxu0 %v1876
  %v1912 = vpop.f32.mrb[0].mxu0
  %v1913 = vadd.f32 0.0, %v1912
  %v1914 = vpop.f32.mrb[0].mxu0
  %v1915 = vpop.f32.mrb[0].mxu0
  %v1916 = vpop.f32.mrb[0].mxu0
  %1917 = vdwg.mxu0
  %v1918 = vadd.f32 %v1869, %v1913
  %v1919 = vxor.u32 %v1918, 2147483648
  %v1920 = vmul.f32 %v1919, 1.442695
  %v1921 = vpow.pop %v1920
  %v1922 = vadd.f32 %v1921, 1.0
  %v1923 = vrcp.pop %v1922
  %v1924 = vmul.f32 1.0, %v1923
  %v1925 = vtanh.pop %v1918
  %v1926 = vmul.f32 %v1924, %v1780
  %1928 = vrot.lane.b32.xlu0 %v1925, 64
  %v1929 = vpop.permute.xlu0 %1928
  %v1931 = vmul.f32 %v1924, %v1929
  %1933 = vrot.lane.b32.xlu0 %v1931, 32
  %v1934 = vpop.permute.xlu0 %1933
  %v1936 = vadd.f32 %v1926, %v1934
  %v1937 = vtanh.pop %v1936
  %1939 = vrot.lane.b32.xlu0 %v1937, 64
  %v1940 = vpop.permute.xlu0 %1939
  %v1942 = vmul.f32 %v1924, %v1940
  %v1943 = vpack.c.bf16 %v1858, %v1858
  %1945 = vrot.lane.b32.xlu0 %v1943, 32
  %v1946 = vpop.permute.xlu0 %1945
  %v1948 = vsel %vm293, %v1946, 0
  %1950 = vmatprep.subr.bf16.mxu0 0
  %1951 = vmatpush1.bf16.msra.mxu0 %v370
  %1952 = vmatprep.subr.bf16.mxu0 0
  %1953 = vmatpush1.bf16.msra.mxu0 %v371
  %1954 = vmatprep.subr.bf16.mxu0 0
  %1955 = vmatpush1.bf16.msra.mxu0 0
  %1956 = vmatprep.subr.bf16.mxu0 0
  %1957 = vmatpush1.bf16.msra.mxu0 0
  %1958 = vmatprep.subr.bf16.mxu0 0
  %1959 = vmatpush1.bf16.msra.mxu0 0
  %1960 = vmatprep.subr.bf16.mxu0 0
  %1961 = vmatpush1.bf16.msra.mxu0 0
  %1962 = vmatprep.subr.bf16.mxu0 0
  %1963 = vmatpush1.bf16.msra.mxu0 0
  %1964 = vmatprep.subr.bf16.mxu0 0
  %1965 = vmatpush1.bf16.msra.mxu0 0
  %1966 = vmatprep.subr.bf16.mxu0 0
  %1967 = vmatpush1.bf16.msra.mxu0 0
  %1968 = vmatprep.subr.bf16.mxu0 0
  %1969 = vmatpush1.bf16.msra.mxu0 0
  %1970 = vmatprep.subr.bf16.mxu0 0
  %1971 = vmatpush1.bf16.msra.mxu0 0
  %1972 = vmatprep.subr.bf16.mxu0 0
  %1973 = vmatpush1.bf16.msra.mxu0 0
  %1974 = vmatprep.subr.bf16.mxu0 0
  %1975 = vmatpush1.bf16.msra.mxu0 0
  %1976 = vmatprep.subr.bf16.mxu0 0
  %1977 = vmatpush1.bf16.msra.mxu0 0
  %1978 = vmatprep.subr.bf16.mxu0 0
  %1979 = vmatpush1.bf16.msra.mxu0 0
  %1980 = vmatprep.subr.bf16.mxu0 0
  %1981 = vmatpush1.bf16.msra.mxu0 0
  %1982 = vmatprep.mubr.bf16.mxu0 0
  %1983 = vmatmul.mubr.bf16.gmra.mrb[0].mxu0 %v1948
  %v1984 = vpop.f32.mrb[0].mxu0
  %v1985 = vadd.f32 0.0, %v1984
  %v1986 = vpop.f32.mrb[0].mxu0
  %v1987 = vpop.f32.mrb[0].mxu0
  %v1988 = vpop.f32.mrb[0].mxu0
  %1989 = vdwg.mxu0
  %v1990 = vadd.f32 %v1870, %v1985
  %v1991 = vxor.u32 %v1990, 2147483648
  %v1992 = vmul.f32 %v1991, 1.442695
  %v1993 = vpow.pop %v1992
  %v1994 = vadd.f32 %v1993, 1.0
  %v1995 = vrcp.pop %v1994
  %v1996 = vmul.f32 1.0, %v1995
  %v1997 = vtanh.pop %v1990
  %v1998 = vmul.f32 %v1996, %v1852
  %2000 = vrot.lane.b32.xlu0 %v1997, 64
  %v2001 = vpop.permute.xlu0 %2000
  %v2003 = vmul.f32 %v1996, %v2001
  %2005 = vrot.lane.b32.xlu0 %v2003, 32
  %v2006 = vpop.permute.xlu0 %2005
  %v2008 = vadd.f32 %v1998, %v2006
  %v2009 = vtanh.pop %v2008
  %2011 = vrot.lane.b32.xlu0 %v2009, 64
  %v2012 = vpop.permute.xlu0 %2011
  %v2014 = vmul.f32 %v1996, %v2012
  %2016 = vrot.lane.b32.xlu0 %v1942, 32
  %v2017 = vpop.permute.xlu0 %2016
  %2019 = vst.msk [vmem:[%s1239] sm:$0xff] %vm293, %v2017
  %2021 = vrot.lane.b32.xlu0 %v2014, 64
  %v2022 = vpop.permute.xlu0 %2021
  %2024 = vst.msk [vmem:[%s1233] sm:$0xff] %vm449, %v2022
  %v2025 = vld [vmem:[#allocation2 + $0xb0] sm:$0xff]
  %v2026 = vld [vmem:[#allocation2 + $0x48] sm:$0xff]
  %v2027 = vpack.c.bf16 %v1942, %v1942
  %2029 = vrot.lane.b32.xlu0 %v2027, 32
  %v2030 = vpop.permute.xlu0 %2029
  %v2032 = vsel %vm293, %v2030, 0
  %2034 = vmatprep.subr.bf16.mxu0 0
  %2035 = vmatpush1.bf16.msra.mxu0 %v289
  %2036 = vmatprep.subr.bf16.mxu0 0
  %2037 = vmatpush1.bf16.msra.mxu0 %v290
  %2038 = vmatprep.subr.bf16.mxu0 0
  %2039 = vmatpush1.bf16.msra.mxu0 0
  %2040 = vmatprep.subr.bf16.mxu0 0
  %2041 = vmatpush1.bf16.msra.mxu0 0
  %2042 = vmatprep.subr.bf16.mxu0 0
  %2043 = vmatpush1.bf16.msra.mxu0 0
  %2044 = vmatprep.subr.bf16.mxu0 0
  %2045 = vmatpush1.bf16.msra.mxu0 0
  %2046 = vmatprep.subr.bf16.mxu0 0
  %2047 = vmatpush1.bf16.msra.mxu0 0
  %2048 = vmatprep.subr.bf16.mxu0 0
  %2049 = vmatpush1.bf16.msra.mxu0 0
  %2050 = vmatprep.subr.bf16.mxu0 0
  %2051 = vmatpush1.bf16.msra.mxu0 0
  %2052 = vmatprep.subr.bf16.mxu0 0
  %2053 = vmatpush1.bf16.msra.mxu0 0
  %2054 = vmatprep.subr.bf16.mxu0 0
  %2055 = vmatpush1.bf16.msra.mxu0 0
  %2056 = vmatprep.subr.bf16.mxu0 0
  %2057 = vmatpush1.bf16.msra.mxu0 0
  %2058 = vmatprep.subr.bf16.mxu0 0
  %2059 = vmatpush1.bf16.msra.mxu0 0
  %2060 = vmatprep.subr.bf16.mxu0 0
  %2061 = vmatpush1.bf16.msra.mxu0 0
  %2062 = vmatprep.subr.bf16.mxu0 0
  %2063 = vmatpush1.bf16.msra.mxu0 0
  %2064 = vmatprep.subr.bf16.mxu0 0
  %2065 = vmatpush1.bf16.msra.mxu0 0
  %2066 = vmatprep.mubr.bf16.mxu0 0
  %2067 = vmatmul.mubr.bf16.gmra.mrb[0].mxu0 %v2032
  %v2068 = vpop.f32.mrb[0].mxu0
  %v2069 = vadd.f32 0.0, %v2068
  %v2070 = vpop.f32.mrb[0].mxu0
  %v2071 = vpop.f32.mrb[0].mxu0
  %v2072 = vpop.f32.mrb[0].mxu0
  %2073 = vdwg.mxu0
  %v2074 = vadd.f32 %v2025, %v2069
  %v2075 = vxor.u32 %v2074, 2147483648
  %v2076 = vmul.f32 %v2075, 1.442695
  %v2077 = vpow.pop %v2076
  %v2078 = vadd.f32 %v2077, 1.0
  %v2079 = vrcp.pop %v2078
  %v2080 = vmul.f32 1.0, %v2079
  %v2081 = vtanh.pop %v2074
  %v2082 = vmul.f32 %v2080, %v1936
  %2084 = vrot.lane.b32.xlu0 %v2081, 64
  %v2085 = vpop.permute.xlu0 %2084
  %v2087 = vmul.f32 %v2080, %v2085
  %2089 = vrot.lane.b32.xlu0 %v2087, 32
  %v2090 = vpop.permute.xlu0 %2089
  %v2092 = vadd.f32 %v2082, %v2090
  %v2093 = vtanh.pop %v2092
  %2095 = vrot.lane.b32.xlu0 %v2093, 64
  %v2096 = vpop.permute.xlu0 %2095
  %v2098 = vmul.f32 %v2080, %v2096
  %v2099 = vpack.c.bf16 %v2014, %v2014
  %2101 = vrot.lane.b32.xlu0 %v2099, 32
  %v2102 = vpop.permute.xlu0 %2101
  %v2104 = vsel %vm293, %v2102, 0
  %2106 = vmatprep.subr.bf16.mxu0 0
  %2107 = vmatpush1.bf16.msra.mxu0 %v370
  %2108 = vmatprep.subr.bf16.mxu0 0
  %2109 = vmatpush1.bf16.msra.mxu0 %v371
  %2110 = vmatprep.subr.bf16.mxu0 0
  %2111 = vmatpush1.bf16.msra.mxu0 0
  %2112 = vmatprep.subr.bf16.mxu0 0
  %2113 = vmatpush1.bf16.msra.mxu0 0
  %2114 = vmatprep.subr.bf16.mxu0 0
  %2115 = vmatpush1.bf16.msra.mxu0 0
  %2116 = vmatprep.subr.bf16.mxu0 0
  %2117 = vmatpush1.bf16.msra.mxu0 0
  %2118 = vmatprep.subr.bf16.mxu0 0
  %2119 = vmatpush1.bf16.msra.mxu0 0
  %2120 = vmatprep.subr.bf16.mxu0 0
  %2121 = vmatpush1.bf16.msra.mxu0 0
  %2122 = vmatprep.subr.bf16.mxu0 0
  %2123 = vmatpush1.bf16.msra.mxu0 0
  %2124 = vmatprep.subr.bf16.mxu0 0
  %2125 = vmatpush1.bf16.msra.mxu0 0
  %2126 = vmatprep.subr.bf16.mxu0 0
  %2127 = vmatpush1.bf16.msra.mxu0 0
  %2128 = vmatprep.subr.bf16.mxu0 0
  %2129 = vmatpush1.bf16.msra.mxu0 0
  %2130 = vmatprep.subr.bf16.mxu0 0
  %2131 = vmatpush1.bf16.msra.mxu0 0
  %2132 = vmatprep.subr.bf16.mxu0 0
  %2133 = vmatpush1.bf16.msra.mxu0 0
  %2134 = vmatprep.subr.bf16.mxu0 0
  %2135 = vmatpush1.bf16.msra.mxu0 0
  %2136 = vmatprep.subr.bf16.mxu0 0
  %2137 = vmatpush1.bf16.msra.mxu0 0
  %2138 = vmatprep.mubr.bf16.mxu0 0
  %2139 = vmatmul.mubr.bf16.gmra.mrb[0].mxu0 %v2104
  %v2140 = vpop.f32.mrb[0].mxu0
  %v2141 = vadd.f32 0.0, %v2140
  %v2142 = vpop.f32.mrb[0].mxu0
  %v2143 = vpop.f32.mrb[0].mxu0
  %v2144 = vpop.f32.mrb[0].mxu0
  %2145 = vdwg.mxu0
  %v2146 = vadd.f32 %v2026, %v2141
  %v2147 = vxor.u32 %v2146, 2147483648
  %v2148 = vmul.f32 %v2147, 1.442695
  %v2149 = vpow.pop %v2148
  %v2150 = vadd.f32 %v2149, 1.0
  %v2151 = vrcp.pop %v2150
  %v2152 = vmul.f32 1.0, %v2151
  %v2153 = vtanh.pop %v2146
  %v2154 = vmul.f32 %v2152, %v2008
  %2156 = vrot.lane.b32.xlu0 %v2153, 64
  %v2157 = vpop.permute.xlu0 %2156
  %v2159 = vmul.f32 %v2152, %v2157
  %2161 = vrot.lane.b32.xlu0 %v2159, 32
  %v2162 = vpop.permute.xlu0 %2161
  %v2164 = vadd.f32 %v2154, %v2162
  %v2165 = vtanh.pop %v2164
  %2167 = vrot.lane.b32.xlu0 %v2165, 64
  %v2168 = vpop.permute.xlu0 %2167
  %v2170 = vmul.f32 %v2152, %v2168
  %2172 = vrot.lane.b32.xlu0 %v2098, 32
  %v2173 = vpop.permute.xlu0 %2172
  %2175 = vst.msk [vmem:[%s1081] sm:$0xff] %vm293, %v2173
  %2177 = vrot.lane.b32.xlu0 %v2170, 64
  %v2178 = vpop.permute.xlu0 %2177
  %2180 = vst.msk [vmem:[%s1075] sm:$0xff] %vm449, %v2178
  %v2181 = vld [vmem:[#allocation2 + $0xc0] sm:$0xff]
  %v2182 = vld [vmem:[#allocation2 + $0x38] sm:$0xff]
  %v2183 = vpack.c.bf16 %v2098, %v2098
  %2185 = vrot.lane.b32.xlu0 %v2183, 32
  %v2186 = vpop.permute.xlu0 %2185
  %v2188 = vsel %vm293, %v2186, 0
  %2190 = vmatprep.subr.bf16.mxu0 0
  %2191 = vmatpush1.bf16.msra.mxu0 %v289
  %2192 = vmatprep.subr.bf16.mxu0 0
  %2193 = vmatpush1.bf16.msra.mxu0 %v290
  %2194 = vmatprep.subr.bf16.mxu0 0
  %2195 = vmatpush1.bf16.msra.mxu0 0
  %2196 = vmatprep.subr.bf16.mxu0 0
  %2197 = vmatpush1.bf16.msra.mxu0 0
  %2198 = vmatprep.subr.bf16.mxu0 0
  %2199 = vmatpush1.bf16.msra.mxu0 0
  %2200 = vmatprep.subr.bf16.mxu0 0
  %2201 = vmatpush1.bf16.msra.mxu0 0
  %2202 = vmatprep.subr.bf16.mxu0 0
  %2203 = vmatpush1.bf16.msra.mxu0 0
  %2204 = vmatprep.subr.bf16.mxu0 0
  %2205 = vmatpush1.bf16.msra.mxu0 0
  %2206 = vmatprep.subr.bf16.mxu0 0
  %2207 = vmatpush1.bf16.msra.mxu0 0
  %2208 = vmatprep.subr.bf16.mxu0 0
  %2209 = vmatpush1.bf16.msra.mxu0 0
  %2210 = vmatprep.subr.bf16.mxu0 0
  %2211 = vmatpush1.bf16.msra.mxu0 0
  %2212 = vmatprep.subr.bf16.mxu0 0
  %2213 = vmatpush1.bf16.msra.mxu0 0
  %2214 = vmatprep.subr.bf16.mxu0 0
  %2215 = vmatpush1.bf16.msra.mxu0 0
  %2216 = vmatprep.subr.bf16.mxu0 0
  %2217 = vmatpush1.bf16.msra.mxu0 0
  %2218 = vmatprep.subr.bf16.mxu0 0
  %2219 = vmatpush1.bf16.msra.mxu0 0
  %2220 = vmatprep.subr.bf16.mxu0 0
  %2221 = vmatpush1.bf16.msra.mxu0 0
  %2222 = vmatprep.mubr.bf16.mxu0 0
  %2223 = vmatmul.mubr.bf16.gmra.mrb[0].mxu0 %v2188
  %v2224 = vpop.f32.mrb[0].mxu0
  %v2225 = vadd.f32 0.0, %v2224
  %v2226 = vpop.f32.mrb[0].mxu0
  %v2227 = vpop.f32.mrb[0].mxu0
  %v2228 = vpop.f32.mrb[0].mxu0
  %2229 = vdwg.mxu0
  %v2230 = vadd.f32 %v2181, %v2225
  %v2231 = vxor.u32 %v2230, 2147483648
  %v2232 = vmul.f32 %v2231, 1.442695
  %v2233 = vpow.pop %v2232
  %v2234 = vadd.f32 %v2233, 1.0
  %v2235 = vrcp.pop %v2234
  %v2236 = vmul.f32 1.0, %v2235
  %v2237 = vtanh.pop %v2230
  %v2238 = vmul.f32 %v2236, %v2092
  %2240 = vrot.lane.b32.xlu0 %v2237, 64
  %v2241 = vpop.permute.xlu0 %2240
  %v2243 = vmul.f32 %v2236, %v2241
  %2245 = vrot.lane.b32.xlu0 %v2243, 32
  %v2246 = vpop.permute.xlu0 %2245
  %v2248 = vadd.f32 %v2238, %v2246
  %v2249 = vtanh.pop %v2248
  %2251 = vrot.lane.b32.xlu0 %v2249, 64
  %v2252 = vpop.permute.xlu0 %2251
  %v2254 = vmul.f32 %v2236, %v2252
  %v2255 = vpack.c.bf16 %v2170, %v2170
  %2257 = vrot.lane.b32.xlu0 %v2255, 32
  %v2258 = vpop.permute.xlu0 %2257
  %v2260 = vsel %vm293, %v2258, 0
  %2262 = vmatprep.subr.bf16.mxu0 0
  %2263 = vmatpush1.bf16.msra.mxu0 %v370
  %2264 = vmatprep.subr.bf16.mxu0 0
  %2265 = vmatpush1.bf16.msra.mxu0 %v371
  %2266 = vmatprep.subr.bf16.mxu0 0
  %2267 = vmatpush1.bf16.msra.mxu0 0
  %2268 = vmatprep.subr.bf16.mxu0 0
  %2269 = vmatpush1.bf16.msra.mxu0 0
  %2270 = vmatprep.subr.bf16.mxu0 0
  %2271 = vmatpush1.bf16.msra.mxu0 0
  %2272 = vmatprep.subr.bf16.mxu0 0
  %2273 = vmatpush1.bf16.msra.mxu0 0
  %2274 = vmatprep.subr.bf16.mxu0 0
  %2275 = vmatpush1.bf16.msra.mxu0 0
  %2276 = vmatprep.subr.bf16.mxu0 0
  %2277 = vmatpush1.bf16.msra.mxu0 0
  %2278 = vmatprep.subr.bf16.mxu0 0
  %2279 = vmatpush1.bf16.msra.mxu0 0
  %2280 = vmatprep.subr.bf16.mxu0 0
  %2281 = vmatpush1.bf16.msra.mxu0 0
  %2282 = vmatprep.subr.bf16.mxu0 0
  %2283 = vmatpush1.bf16.msra.mxu0 0
  %2284 = vmatprep.subr.bf16.mxu0 0
  %2285 = vmatpush1.bf16.msra.mxu0 0
  %2286 = vmatprep.subr.bf16.mxu0 0
  %2287 = vmatpush1.bf16.msra.mxu0 0
  %2288 = vmatprep.subr.bf16.mxu0 0
  %2289 = vmatpush1.bf16.msra.mxu0 0
  %2290 = vmatprep.subr.bf16.mxu0 0
  %2291 = vmatpush1.bf16.msra.mxu0 0
  %2292 = vmatprep.subr.bf16.mxu0 0
  %2293 = vmatpush1.bf16.msra.mxu0 0
  %2294 = vmatprep.mubr.bf16.mxu0 0
  %2295 = vmatmul.mubr.bf16.gmra.mrb[0].mxu0 %v2260
  %v2296 = vpop.f32.mrb[0].mxu0
  %v2297 = vadd.f32 0.0, %v2296
  %v2298 = vpop.f32.mrb[0].mxu0
  %v2299 = vpop.f32.mrb[0].mxu0
  %v2300 = vpop.f32.mrb[0].mxu0
  %2301 = vdwg.mxu0
  %v2302 = vadd.f32 %v2182, %v2297
  %v2303 = vxor.u32 %v2302, 2147483648
  %v2304 = vmul.f32 %v2303, 1.442695
  %v2305 = vpow.pop %v2304
  %v2306 = vadd.f32 %v2305, 1.0
  %v2307 = vrcp.pop %v2306
  %v2308 = vmul.f32 1.0, %v2307
  %v2309 = vtanh.pop %v2302
  %v2310 = vmul.f32 %v2308, %v2164
  %2312 = vrot.lane.b32.xlu0 %v2309, 64
  %v2313 = vpop.permute.xlu0 %2312
  %v2315 = vmul.f32 %v2308, %v2313
  %2317 = vrot.lane.b32.xlu0 %v2315, 32
  %v2318 = vpop.permute.xlu0 %2317
  %v2320 = vadd.f32 %v2310, %v2318
  %v2321 = vtanh.pop %v2320
  %2323 = vrot.lane.b32.xlu0 %v2321, 64
  %v2324 = vpop.permute.xlu0 %2323
  %v2326 = vmul.f32 %v2308, %v2324
  %2328 = vrot.lane.b32.xlu0 %v2254, 32
  %v2329 = vpop.permute.xlu0 %2328
  %2331 = vst.msk [vmem:[%s923] sm:$0xff] %vm293, %v2329
  %2333 = vrot.lane.b32.xlu0 %v2326, 64
  %v2334 = vpop.permute.xlu0 %2333
  %2336 = vst.msk [vmem:[%s917] sm:$0xff] %vm449, %v2334
  %v2337 = vld [vmem:[#allocation2 + $0xd0] sm:$0xff]
  %v2338 = vld [vmem:[#allocation2 + $0x28] sm:$0xff]
  %v2339 = vpack.c.bf16 %v2254, %v2254
  %2341 = vrot.lane.b32.xlu0 %v2339, 32
  %v2342 = vpop.permute.xlu0 %2341
  %v2344 = vsel %vm293, %v2342, 0
  %2346 = vmatprep.subr.bf16.mxu0 0
  %2347 = vmatpush1.bf16.msra.mxu0 %v289
  %2348 = vmatprep.subr.bf16.mxu0 0
  %2349 = vmatpush1.bf16.msra.mxu0 %v290
  %2350 = vmatprep.subr.bf16.mxu0 0
  %2351 = vmatpush1.bf16.msra.mxu0 0
  %2352 = vmatprep.subr.bf16.mxu0 0
  %2353 = vmatpush1.bf16.msra.mxu0 0
  %2354 = vmatprep.subr.bf16.mxu0 0
  %2355 = vmatpush1.bf16.msra.mxu0 0
  %2356 = vmatprep.subr.bf16.mxu0 0
  %2357 = vmatpush1.bf16.msra.mxu0 0
  %2358 = vmatprep.subr.bf16.mxu0 0
  %2359 = vmatpush1.bf16.msra.mxu0 0
  %2360 = vmatprep.subr.bf16.mxu0 0
  %2361 = vmatpush1.bf16.msra.mxu0 0
  %2362 = vmatprep.subr.bf16.mxu0 0
  %2363 = vmatpush1.bf16.msra.mxu0 0
  %2364 = vmatprep.subr.bf16.mxu0 0
  %2365 = vmatpush1.bf16.msra.mxu0 0
  %2366 = vmatprep.subr.bf16.mxu0 0
  %2367 = vmatpush1.bf16.msra.mxu0 0
  %2368 = vmatprep.subr.bf16.mxu0 0
  %2369 = vmatpush1.bf16.msra.mxu0 0
  %2370 = vmatprep.subr.bf16.mxu0 0
  %2371 = vmatpush1.bf16.msra.mxu0 0
  %2372 = vmatprep.subr.bf16.mxu0 0
  %2373 = vmatpush1.bf16.msra.mxu0 0
  %2374 = vmatprep.subr.bf16.mxu0 0
  %2375 = vmatpush1.bf16.msra.mxu0 0
  %2376 = vmatprep.subr.bf16.mxu0 0
  %2377 = vmatpush1.bf16.msra.mxu0 0
  %2378 = vmatprep.mubr.bf16.mxu0 0
  %2379 = vmatmul.mubr.bf16.gmra.mrb[0].mxu0 %v2344
  %v2380 = vpop.f32.mrb[0].mxu0
  %v2381 = vadd.f32 0.0, %v2380
  %v2382 = vpop.f32.mrb[0].mxu0
  %v2383 = vpop.f32.mrb[0].mxu0
  %v2384 = vpop.f32.mrb[0].mxu0
  %2385 = vdwg.mxu0
  %v2386 = vadd.f32 %v2337, %v2381
  %v2387 = vxor.u32 %v2386, 2147483648
  %v2388 = vmul.f32 %v2387, 1.442695
  %v2389 = vpow.pop %v2388
  %v2390 = vadd.f32 %v2389, 1.0
  %v2391 = vrcp.pop %v2390
  %v2392 = vmul.f32 1.0, %v2391
  %v2393 = vtanh.pop %v2386
  %v2394 = vmul.f32 %v2392, %v2248
  %2396 = vrot.lane.b32.xlu0 %v2393, 64
  %v2397 = vpop.permute.xlu0 %2396
  %v2399 = vmul.f32 %v2392, %v2397
  %2401 = vrot.lane.b32.xlu0 %v2399, 32
  %v2402 = vpop.permute.xlu0 %2401
  %v2404 = vadd.f32 %v2394, %v2402
  %v2405 = vtanh.pop %v2404
  %2407 = vrot.lane.b32.xlu0 %v2405, 64
  %v2408 = vpop.permute.xlu0 %2407
  %v2410 = vmul.f32 %v2392, %v2408
  %v2411 = vpack.c.bf16 %v2326, %v2326
  %2413 = vrot.lane.b32.xlu0 %v2411, 32
  %v2414 = vpop.permute.xlu0 %2413
  %v2416 = vsel %vm293, %v2414, 0
  %2418 = vmatprep.subr.bf16.mxu0 0
  %2419 = vmatpush1.bf16.msra.mxu0 %v370
  %2420 = vmatprep.subr.bf16.mxu0 0
  %2421 = vmatpush1.bf16.msra.mxu0 %v371
  %2422 = vmatprep.subr.bf16.mxu0 0
  %2423 = vmatpush1.bf16.msra.mxu0 0
  %2424 = vmatprep.subr.bf16.mxu0 0
  %2425 = vmatpush1.bf16.msra.mxu0 0
  %2426 = vmatprep.subr.bf16.mxu0 0
  %2427 = vmatpush1.bf16.msra.mxu0 0
  %2428 = vmatprep.subr.bf16.mxu0 0
  %2429 = vmatpush1.bf16.msra.mxu0 0
  %2430 = vmatprep.subr.bf16.mxu0 0
  %2431 = vmatpush1.bf16.msra.mxu0 0
  %2432 = vmatprep.subr.bf16.mxu0 0
  %2433 = vmatpush1.bf16.msra.mxu0 0
  %2434 = vmatprep.subr.bf16.mxu0 0
  %2435 = vmatpush1.bf16.msra.mxu0 0
  %2436 = vmatprep.subr.bf16.mxu0 0
  %2437 = vmatpush1.bf16.msra.mxu0 0
  %2438 = vmatprep.subr.bf16.mxu0 0
  %2439 = vmatpush1.bf16.msra.mxu0 0
  %2440 = vmatprep.subr.bf16.mxu0 0
  %2441 = vmatpush1.bf16.msra.mxu0 0
  %2442 = vmatprep.subr.bf16.mxu0 0
  %2443 = vmatpush1.bf16.msra.mxu0 0
  %2444 = vmatprep.subr.bf16.mxu0 0
  %2445 = vmatpush1.bf16.msra.mxu0 0
  %2446 = vmatprep.subr.bf16.mxu0 0
  %2447 = vmatpush1.bf16.msra.mxu0 0
  %2448 = vmatprep.subr.bf16.mxu0 0
  %2449 = vmatpush1.bf16.msra.mxu0 0
  %2450 = vmatprep.mubr.bf16.mxu0 0
  %2451 = vmatmul.mubr.bf16.gmra.mrb[0].mxu0 %v2416
  %v2452 = vpop.f32.mrb[0].mxu0
  %v2453 = vadd.f32 0.0, %v2452
  %v2454 = vpop.f32.mrb[0].mxu0
  %v2455 = vpop.f32.mrb[0].mxu0
  %v2456 = vpop.f32.mrb[0].mxu0
  %2457 = vdwg.mxu0
  %v2458 = vadd.f32 %v2338, %v2453
  %v2459 = vxor.u32 %v2458, 2147483648
  %v2460 = vmul.f32 %v2459, 1.442695
  %v2461 = vpow.pop %v2460
  %v2462 = vadd.f32 %v2461, 1.0
  %v2463 = vrcp.pop %v2462
  %v2464 = vmul.f32 1.0, %v2463
  %v2465 = vtanh.pop %v2458
  %v2466 = vmul.f32 %v2464, %v2320
  %2468 = vrot.lane.b32.xlu0 %v2465, 64
  %v2469 = vpop.permute.xlu0 %2468
  %v2471 = vmul.f32 %v2464, %v2469
  %2473 = vrot.lane.b32.xlu0 %v2471, 32
  %v2474 = vpop.permute.xlu0 %2473
  %v2476 = vadd.f32 %v2466, %v2474
  %v2477 = vtanh.pop %v2476
  %2479 = vrot.lane.b32.xlu0 %v2477, 64
  %v2480 = vpop.permute.xlu0 %2479
  %v2482 = vmul.f32 %v2464, %v2480
  %2484 = vrot.lane.b32.xlu0 %v2410, 32
  %v2485 = vpop.permute.xlu0 %2484
  %2487 = vst.msk [vmem:[%s765] sm:$0xff] %vm293, %v2485
  %2489 = vrot.lane.b32.xlu0 %v2482, 64
  %v2490 = vpop.permute.xlu0 %2489
  %2492 = vst.msk [vmem:[%s759] sm:$0xff] %vm449, %v2490
  %v2493 = vld [vmem:[#allocation2 + $0xe0] sm:$0xff]
  %v2494 = vld [vmem:[#allocation2 + $0x18] sm:$0xff]
  %v2495 = vpack.c.bf16 %v2410, %v2410
  %2497 = vrot.lane.b32.xlu0 %v2495, 32
  %v2498 = vpop.permute.xlu0 %2497
  %v2500 = vsel %vm293, %v2498, 0
  %2502 = vmatprep.subr.bf16.mxu0 0
  %2503 = vmatpush1.bf16.msra.mxu0 %v289
  %2504 = vmatprep.subr.bf16.mxu0 0
  %2505 = vmatpush1.bf16.msra.mxu0 %v290
  %2506 = vmatprep.subr.bf16.mxu0 0
  %2507 = vmatpush1.bf16.msra.mxu0 0
  %2508 = vmatprep.subr.bf16.mxu0 0
  %2509 = vmatpush1.bf16.msra.mxu0 0
  %2510 = vmatprep.subr.bf16.mxu0 0
  %2511 = vmatpush1.bf16.msra.mxu0 0
  %2512 = vmatprep.subr.bf16.mxu0 0
  %2513 = vmatpush1.bf16.msra.mxu0 0
  %2514 = vmatprep.subr.bf16.mxu0 0
  %2515 = vmatpush1.bf16.msra.mxu0 0
  %2516 = vmatprep.subr.bf16.mxu0 0
  %2517 = vmatpush1.bf16.msra.mxu0 0
  %2518 = vmatprep.subr.bf16.mxu0 0
  %2519 = vmatpush1.bf16.msra.mxu0 0
  %2520 = vmatprep.subr.bf16.mxu0 0
  %2521 = vmatpush1.bf16.msra.mxu0 0
  %2522 = vmatprep.subr.bf16.mxu0 0
  %2523 = vmatpush1.bf16.msra.mxu0 0
  %2524 = vmatprep.subr.bf16.mxu0 0
  %2525 = vmatpush1.bf16.msra.mxu0 0
  %2526 = vmatprep.subr.bf16.mxu0 0
  %2527 = vmatpush1.bf16.msra.mxu0 0
  %2528 = vmatprep.subr.bf16.mxu0 0
  %2529 = vmatpush1.bf16.msra.mxu0 0
  %2530 = vmatprep.subr.bf16.mxu0 0
  %2531 = vmatpush1.bf16.msra.mxu0 0
  %2532 = vmatprep.subr.bf16.mxu0 0
  %2533 = vmatpush1.bf16.msra.mxu0 0
  %2534 = vmatprep.mubr.bf16.mxu0 0
  %2535 = vmatmul.mubr.bf16.gmra.mrb[0].mxu0 %v2500
  %v2536 = vpop.f32.mrb[0].mxu0
  %v2537 = vadd.f32 0.0, %v2536
  %v2538 = vpop.f32.mrb[0].mxu0
  %v2539 = vpop.f32.mrb[0].mxu0
  %v2540 = vpop.f32.mrb[0].mxu0
  %2541 = vdwg.mxu0
  %v2542 = vadd.f32 %v2493, %v2537
  %v2543 = vxor.u32 %v2542, 2147483648
  %v2544 = vmul.f32 %v2543, 1.442695
  %v2545 = vpow.pop %v2544
  %v2546 = vadd.f32 %v2545, 1.0
  %v2547 = vrcp.pop %v2546
  %v2548 = vmul.f32 1.0, %v2547
  %v2549 = vtanh.pop %v2542
  %v2550 = vmul.f32 %v2548, %v2404
  %2552 = vrot.lane.b32.xlu0 %v2549, 64
  %v2553 = vpop.permute.xlu0 %2552
  %v2555 = vmul.f32 %v2548, %v2553
  %2557 = vrot.lane.b32.xlu0 %v2555, 32
  %v2558 = vpop.permute.xlu0 %2557
  %v2560 = vadd.f32 %v2550, %v2558
  %v2561 = vtanh.pop %v2560
  %2563 = vrot.lane.b32.xlu0 %v2561, 64
  %v2564 = vpop.permute.xlu0 %2563
  %v2566 = vmul.f32 %v2548, %v2564
  %v2567 = vpack.c.bf16 %v2482, %v2482
  %2569 = vrot.lane.b32.xlu0 %v2567, 32
  %v2570 = vpop.permute.xlu0 %2569
  %v2572 = vsel %vm293, %v2570, 0
  %2574 = vmatprep.subr.bf16.mxu0 0
  %2575 = vmatpush1.bf16.msra.mxu0 %v370
  %2576 = vmatprep.subr.bf16.mxu0 0
  %2577 = vmatpush1.bf16.msra.mxu0 %v371
  %2578 = vmatprep.subr.bf16.mxu0 0
  %2579 = vmatpush1.bf16.msra.mxu0 0
  %2580 = vmatprep.subr.bf16.mxu0 0
  %2581 = vmatpush1.bf16.msra.mxu0 0
  %2582 = vmatprep.subr.bf16.mxu0 0
  %2583 = vmatpush1.bf16.msra.mxu0 0
  %2584 = vmatprep.subr.bf16.mxu0 0
  %2585 = vmatpush1.bf16.msra.mxu0 0
  %2586 = vmatprep.subr.bf16.mxu0 0
  %2587 = vmatpush1.bf16.msra.mxu0 0
  %2588 = vmatprep.subr.bf16.mxu0 0
  %2589 = vmatpush1.bf16.msra.mxu0 0
  %2590 = vmatprep.subr.bf16.mxu0 0
  %2591 = vmatpush1.bf16.msra.mxu0 0
  %2592 = vmatprep.subr.bf16.mxu0 0
  %2593 = vmatpush1.bf16.msra.mxu0 0
  %2594 = vmatprep.subr.bf16.mxu0 0
  %2595 = vmatpush1.bf16.msra.mxu0 0
  %2596 = vmatprep.subr.bf16.mxu0 0
  %2597 = vmatpush1.bf16.msra.mxu0 0
  %2598 = vmatprep.subr.bf16.mxu0 0
  %2599 = vmatpush1.bf16.msra.mxu0 0
  %2600 = vmatprep.subr.bf16.mxu0 0
  %2601 = vmatpush1.bf16.msra.mxu0 0
  %2602 = vmatprep.subr.bf16.mxu0 0
  %2603 = vmatpush1.bf16.msra.mxu0 0
  %2604 = vmatprep.subr.bf16.mxu0 0
  %2605 = vmatpush1.bf16.msra.mxu0 0
  %2606 = vmatprep.mubr.bf16.mxu0 0
  %2607 = vmatmul.mubr.bf16.gmra.mrb[0].mxu0 %v2572
  %v2608 = vpop.f32.mrb[0].mxu0
  %v2609 = vadd.f32 0.0, %v2608
  %v2610 = vpop.f32.mrb[0].mxu0
  %v2611 = vpop.f32.mrb[0].mxu0
  %v2612 = vpop.f32.mrb[0].mxu0
  %2613 = vdwg.mxu0
  %v2614 = vadd.f32 %v2494, %v2609
  %v2615 = vxor.u32 %v2614, 2147483648
  %v2616 = vmul.f32 %v2615, 1.442695
  %v2617 = vpow.pop %v2616
  %v2618 = vadd.f32 %v2617, 1.0
  %v2619 = vrcp.pop %v2618
  %v2620 = vmul.f32 1.0, %v2619
  %v2621 = vtanh.pop %v2614
  %v2622 = vmul.f32 %v2620, %v2476
  %2624 = vrot.lane.b32.xlu0 %v2621, 64
  %v2625 = vpop.permute.xlu0 %2624
  %v2627 = vmul.f32 %v2620, %v2625
  %2629 = vrot.lane.b32.xlu0 %v2627, 32
  %v2630 = vpop.permute.xlu0 %2629
  %v2632 = vadd.f32 %v2622, %v2630
  %v2633 = vtanh.pop %v2632
  %2635 = vrot.lane.b32.xlu0 %v2633, 64
  %v2636 = vpop.permute.xlu0 %2635
  %v2638 = vmul.f32 %v2620, %v2636
  %2640 = vrot.lane.b32.xlu0 %v2566, 32
  %v2641 = vpop.permute.xlu0 %2640
  %2643 = vst.msk [vmem:[%s607] sm:$0xff] %vm293, %v2641
  %2645 = vrot.lane.b32.xlu0 %v2638, 64
  %v2646 = vpop.permute.xlu0 %2645
  %2648 = vst.msk [vmem:[%s601] sm:$0xff] %vm449, %v2646
  %v2649 = vld [vmem:[#allocation2 + $0xf0] sm:$0xff]
  %v2650 = vld [vmem:[#allocation2 + $0x8] sm:$0xff]
  %v2651 = vpack.c.bf16 %v2566, %v2566
  %2653 = vrot.lane.b32.xlu0 %v2651, 32
  %v2654 = vpop.permute.xlu0 %2653
  %v2656 = vsel %vm293, %v2654, 0
  %2658 = vmatprep.subr.bf16.mxu0 0
  %2659 = vmatpush1.bf16.msra.mxu0 %v289
  %2660 = vmatprep.subr.bf16.mxu0 0
  %2661 = vmatpush1.bf16.msra.mxu0 %v290
  %2662 = vmatprep.subr.bf16.mxu0 0
  %2663 = vmatpush1.bf16.msra.mxu0 0
  %2664 = vmatprep.subr.bf16.mxu0 0
  %2665 = vmatpush1.bf16.msra.mxu0 0
  %2666 = vmatprep.subr.bf16.mxu0 0
  %2667 = vmatpush1.bf16.msra.mxu0 0
  %2668 = vmatprep.subr.bf16.mxu0 0
  %2669 = vmatpush1.bf16.msra.mxu0 0
  %2670 = vmatprep.subr.bf16.mxu0 0
  %2671 = vmatpush1.bf16.msra.mxu0 0
  %2672 = vmatprep.subr.bf16.mxu0 0
  %2673 = vmatpush1.bf16.msra.mxu0 0
  %2674 = vmatprep.subr.bf16.mxu0 0
  %2675 = vmatpush1.bf16.msra.mxu0 0
  %2676 = vmatprep.subr.bf16.mxu0 0
  %2677 = vmatpush1.bf16.msra.mxu0 0
  %2678 = vmatprep.subr.bf16.mxu0 0
  %2679 = vmatpush1.bf16.msra.mxu0 0
  %2680 = vmatprep.subr.bf16.mxu0 0
  %2681 = vmatpush1.bf16.msra.mxu0 0
  %2682 = vmatprep.subr.bf16.mxu0 0
  %2683 = vmatpush1.bf16.msra.mxu0 0
  %2684 = vmatprep.subr.bf16.mxu0 0
  %2685 = vmatpush1.bf16.msra.mxu0 0
  %2686 = vmatprep.subr.bf16.mxu0 0
  %2687 = vmatpush1.bf16.msra.mxu0 0
  %2688 = vmatprep.subr.bf16.mxu0 0
  %2689 = vmatpush1.bf16.msra.mxu0 0
  %2690 = vmatprep.mubr.bf16.mxu0 0
  %2691 = vmatmul.mubr.bf16.gmra.mrb[0].mxu0 %v2656
  %v2692 = vpop.f32.mrb[0].mxu0
  %v2693 = vadd.f32 0.0, %v2692
  %v2694 = vpop.f32.mrb[0].mxu0
  %v2695 = vpop.f32.mrb[0].mxu0
  %v2696 = vpop.f32.mrb[0].mxu0
  %2697 = vdwg.mxu0
  %v2698 = vadd.f32 %v2649, %v2693
  %v2699 = vxor.u32 %v2698, 2147483648
  %v2700 = vmul.f32 %v2699, 1.442695
  %v2701 = vpow.pop %v2700
  %v2702 = vadd.f32 %v2701, 1.0
  %v2703 = vrcp.pop %v2702
  %v2704 = vmul.f32 1.0, %v2703
  %v2705 = vtanh.pop %v2698
  %v2706 = vmul.f32 %v2704, %v2560
  %2708 = vrot.lane.b32.xlu0 %v2705, 64
  %v2709 = vpop.permute.xlu0 %2708
  %v2711 = vmul.f32 %v2704, %v2709
  %2713 = vrot.lane.b32.xlu0 %v2711, 32
  %v2714 = vpop.permute.xlu0 %2713
  %v2716 = vadd.f32 %v2706, %v2714
  %v2717 = vtanh.pop %v2716
  %2719 = vrot.lane.b32.xlu0 %v2717, 64
  %v2720 = vpop.permute.xlu0 %2719
  %v2722 = vmul.f32 %v2704, %v2720
  %v2723 = vpack.c.bf16 %v2638, %v2638
  %2725 = vrot.lane.b32.xlu0 %v2723, 32
  %v2726 = vpop.permute.xlu0 %2725
  %v2728 = vsel %vm293, %v2726, 0
  %2730 = vmatprep.subr.bf16.mxu0 0
  %2731 = vmatpush1.bf16.msra.mxu0 %v370
  %2732 = vmatprep.subr.bf16.mxu0 0
  %2733 = vmatpush1.bf16.msra.mxu0 %v371
  %2734 = vmatprep.subr.bf16.mxu0 0
  %2735 = vmatpush1.bf16.msra.mxu0 0
  %2736 = vmatprep.subr.bf16.mxu0 0
  %2737 = vmatpush1.bf16.msra.mxu0 0
  %2738 = vmatprep.subr.bf16.mxu0 0
  %2739 = vmatpush1.bf16.msra.mxu0 0
  %2740 = vmatprep.subr.bf16.mxu0 0
  %2741 = vmatpush1.bf16.msra.mxu0 0
  %2742 = vmatprep.subr.bf16.mxu0 0
  %2743 = vmatpush1.bf16.msra.mxu0 0
  %2744 = vmatprep.subr.bf16.mxu0 0
  %2745 = vmatpush1.bf16.msra.mxu0 0
  %2746 = vmatprep.subr.bf16.mxu0 0
  %2747 = vmatpush1.bf16.msra.mxu0 0
  %2748 = vmatprep.subr.bf16.mxu0 0
  %2749 = vmatpush1.bf16.msra.mxu0 0
  %2750 = vmatprep.subr.bf16.mxu0 0
  %2751 = vmatpush1.bf16.msra.mxu0 0
  %2752 = vmatprep.subr.bf16.mxu0 0
  %2753 = vmatpush1.bf16.msra.mxu0 0
  %2754 = vmatprep.subr.bf16.mxu0 0
  %2755 = vmatpush1.bf16.msra.mxu0 0
  %2756 = vmatprep.subr.bf16.mxu0 0
  %2757 = vmatpush1.bf16.msra.mxu0 0
  %2758 = vmatprep.subr.bf16.mxu0 0
  %2759 = vmatpush1.bf16.msra.mxu0 0
  %2760 = vmatprep.subr.bf16.mxu0 0
  %2761 = vmatpush1.bf16.msra.mxu0 0
  %2762 = vmatprep.mubr.bf16.mxu0 0
  %2763 = vmatmul.mubr.bf16.gmra.mrb[0].mxu0 %v2728
  %v2764 = vpop.f32.mrb[0].mxu0
  %v2765 = vadd.f32 0.0, %v2764
  %v2766 = vpop.f32.mrb[0].mxu0
  %v2767 = vpop.f32.mrb[0].mxu0
  %v2768 = vpop.f32.mrb[0].mxu0
  %2769 = vdwg.mxu0
  %v2770 = vadd.f32 %v2650, %v2765
  %v2771 = vxor.u32 %v2770, 2147483648
  %v2772 = vmul.f32 %v2771, 1.442695
  %v2773 = vpow.pop %v2772
  %v2774 = vadd.f32 %v2773, 1.0
  %v2775 = vrcp.pop %v2774
  %v2776 = vmul.f32 1.0, %v2775
  %v2777 = vtanh.pop %v2770
  %v2778 = vmul.f32 %v2776, %v2632
  %2780 = vrot.lane.b32.xlu0 %v2777, 64
  %v2781 = vpop.permute.xlu0 %2780
  %v2783 = vmul.f32 %v2776, %v2781
  %2785 = vrot.lane.b32.xlu0 %v2783, 32
  %v2786 = vpop.permute.xlu0 %2785
  %v2788 = vadd.f32 %v2778, %v2786
  %v2789 = vtanh.pop %v2788
  %2791 = vrot.lane.b32.xlu0 %v2789, 64
  %v2792 = vpop.permute.xlu0 %2791
  %v2794 = vmul.f32 %v2776, %v2792
  %2796 = vrot.lane.b32.xlu0 %v2722, 32
  %v2797 = vpop.permute.xlu0 %2796
  %2799 = vst.msk [vmem:[%s448] sm:$0xff] %vm293, %v2797
  %2801 = vrot.lane.b32.xlu0 %v2794, 64
  %v2802 = vpop.permute.xlu0 %2801
  %2804 = vst.msk [vmem:[%s5] sm:$0xff] %vm449, %v2802
  // Predicated region
  $region22: #{blstm_forward.1} parent=0 // pred_check
    _
  $region23: #{blstm_forward.1} parent=0 // pred_check_branch
    %2806 = sbr.rel (0) target = $region25
  $region24: #{blstm_forward.1} parent=0 // pred_region
    _
  $region25: #{blstm_forward.1} parent=0 // pred_fallthru
    _
  // Predicated region
  $region26: #{blstm_forward.1} parent=0 // pred_check
    _
  $region27: #{blstm_forward.1} parent=0 // pred_check_branch
    %2808 = sbr.rel (0) target = $region29
  $region28: #{blstm_forward.1} parent=0 // pred_region
    _
  $region29: #{blstm_forward.1} parent=0 // pred_fallthru
    _

</llo_original>
